<compile_context>
chip_gen: v7x
topology: tpu7x:2x2x1
jax: 0.10.0
libtpu: 0.0.40
codegen_flags: <defaults>
</compile_context>

<pallas_src>
import jax
import jax.numpy as jnp
from jax.experimental import pallas as pl
from jax.experimental.pallas import tpu as pltpu

KH = KW = 5
PAD = 2
BN_EPS = 1e-3  # matches BatchNorm2d(eps=0.001) in the PyTorch module


def _dwconv_bn_kernel(x_ref, w_ref, gamma_ref, beta_ref, o_ref, conv_ref):
    # x_ref:     (N, H+4, W+4, Cb)  spatially padded NHWC input, one channel block
    # w_ref:     (25, Cb)           depthwise taps (kh-major, kw-minor)
    # gamma_ref, beta_ref: (1, Cb)  BN affine params
    # o_ref:     (N, H, W, Cb)      final normalized output
    # conv_ref:  (N, H, W, Cb) f32  scratch holding the raw conv output
    N, Hp, Wp, Cb = x_ref.shape
    H = Hp - 2 * PAD
    W = Wp - 2 * PAD

    xp = x_ref[...].astype(jnp.float32)

    # Hoist the five kw (sublane-axis) shifted views once per channel block.
    # Re-slicing them along the H (major) axis inside the row loop is free.
    xs = [xp[:, :, kw:kw + W, :] for kw in range(KW)]

    # Preload the 25 tap weight lane-vectors once (JAX does not CSE
    # broadcast_in_dim, so keep these out of the row loop).
    w = w_ref[...].astype(jnp.float32)                       # (25, Cb)
    wt = [w[t:t + 1, :].reshape(1, 1, Cb) for t in range(KH * KW)]

    # Row-tiled 25-tap accumulation with the BN statistics fused into the same
    # pass: each output row is accumulated in vregs, its sum / sum-of-squares
    # contributions are added while still register-resident, and it is stored
    # exactly once into the f32 conv scratch.
    s1 = jnp.zeros((N, W, Cb), jnp.float32)
    s2 = jnp.zeros((N, W, Cb), jnp.float32)
    for h in range(H):
        row = None
        for kw in range(KW):
            xk = xs[kw]
            for kh in range(KH):
                term = xk[:, h + kh, :, :] * wt[kh * KW + kw]
                row = term if row is None else row + term
        conv_ref[:, h, :, :] = row
        s1 = s1 + row
        s2 = s2 + row * row

    # BatchNorm2d training-mode biased batch statistics over (N, H, W) per
    # channel; stats stay per-lane (only a cheap cross-sublane reduce here).
    cnt = jnp.float32(N * H * W)
    s1 = jnp.sum(s1, axis=(0, 1), keepdims=True)             # (1, 1, Cb)
    s2 = jnp.sum(s2, axis=(0, 1), keepdims=True)
    mean = s1 / cnt
    var = jnp.maximum(s2 / cnt - mean * mean, 0.0)
    inv = jax.lax.rsqrt(var + jnp.float32(BN_EPS))

    g = gamma_ref[...].reshape(1, 1, Cb)
    b = beta_ref[...].reshape(1, 1, Cb)
    scale = (g * inv).reshape(1, 1, 1, Cb)
    shift = (b - mean * g * inv).reshape(1, 1, 1, Cb)

    # Second (and only other) pass over the conv output: scale/shift + store.
    o_ref[...] = (conv_ref[...] * scale + shift).astype(o_ref.dtype)


def _round_up(v, m):
    return (v + m - 1) // m * m


def _tpu_cores_and_vmem():
    """Returns (tensorcores per chip, per-block working-set budget, vmem limit)."""
    try:
        kind = jax.devices()[0].device_kind.lower()
    except Exception:
        kind = ""
    is_v7 = ("v7" in kind) or ("tpu7" in kind) or ("tpu 7" in kind)
    if is_v7:
        # v7x: 2 TensorCores/chip, only 64 MiB physical VMEM per core.
        return 2, 14 << 20, 32 << 20
    # v5e / v6e: 1 TensorCore, 128 MiB physical VMEM.
    return 1, 24 << 20, 64 << 20


def _pick_channel_blocking(N, C, H, W, n_cores, vmem_budget):
    """Pick (c_block, c_pad).

    * Pad channels only to a multiple of 128 unless extra padding buys a
      balanced split on a 2-TC chip (1824 -> 1920 = 3x640 on v5e/v6e,
      1824 -> 2048 = 4x512 on v7x).
    * c_block >= 512 where possible (>= 2 KiB contiguous DMA rows).
    * Prefer 2-4 grid steps per TensorCore so DMA of block i+1 overlaps the
      compute of block i without paying excessive per-step overhead.
    """
    Hp, Wp = H + 2 * PAD, W + 2 * PAD

    def per_block_bytes(cb):
        # loaded input value + 5 shifted views + conv scratch + double-buffered
        # input/output blocks + elementwise temporaries (all fp32).
        return 4 * cb * (3 * N * Hp * Wp + 5 * N * Hp * W + 6 * N * H * W)

    c128 = _round_up(C, 128)
    min_cb = min(512, c128)
    best_key, best = None, None
    for extra in range(0, 9):                       # consider up to +1024 padding
        c_pad = c128 + 128 * extra
        k_total = c_pad // 128
        for k in range(1, k_total + 1):
            if k_total % k:
                continue
            cb = 128 * k
            if cb > 128 and per_block_bytes(cb) > vmem_budget:
                continue
            nblk = k_total // k
            spc = -(-nblk // n_cores)               # grid steps on the critical core
            eff = spc * cb * n_cores                # channels on the critical path
            pipe = 0 if 2 <= spc <= 4 else min(abs(spc - 2), abs(spc - 4))
            key = (cb < min_cb, eff, pipe, c_pad, -cb)
            if best_key is None or key < best_key:
                best_key, best = key, (cb, c_pad)
    return best


def _dwconv_bn_nhwc(x_nhwc, w_dw, gamma, beta):
    """x_nhwc: (N, H, W, C); w_dw: (C, 5, 5); gamma/beta: (C,). Returns NHWC."""
    N, H, W, C = x_nhwc.shape
    n_cores, vmem_budget, vmem_limit = _tpu_cores_and_vmem()
    c_block, c_pad = _pick_channel_blocking(N, C, H, W, n_cores, vmem_budget)
    Hp, Wp = H + 2 * PAD, W + 2 * PAD
    dc = c_pad - C

    # One jnp.pad supplies both the conv's spatial zero padding and the channel
    # padding up to the lane-aligned block size (XLA fuses it with upstream
    # layout ops).
    x_pad = jnp.pad(x_nhwc, ((0, 0), (PAD, PAD), (PAD, PAD), (0, dc)))

    # Depthwise taps as a (25, C) table: kh-major, kw-minor.
    w_taps = jnp.transpose(w_dw, (1, 2, 0)).reshape(KH * KW, C)
    if dc:
        w_taps = jnp.pad(w_taps, ((0, 0), (0, dc)))
        gamma = jnp.pad(gamma, (0, dc))
        beta = jnp.pad(beta, (0, dc))
    gamma2 = gamma.reshape(1, c_pad)
    beta2 = beta.reshape(1, c_pad)

    grid = (c_pad // c_block,)
    out = pl.pallas_call(
        _dwconv_bn_kernel,
        out_shape=jax.ShapeDtypeStruct((N, H, W, c_pad), x_nhwc.dtype),
        grid_spec=pltpu.PrefetchScalarGridSpec(
            num_scalar_prefetch=0,
            grid=grid,
            in_specs=[
                pl.BlockSpec((N, Hp, Wp, c_block), lambda c: (0, 0, 0, c)),
                pl.BlockSpec((KH * KW, c_block), lambda c: (0, c)),
                pl.BlockSpec((1, c_block), lambda c: (0, c)),
                pl.BlockSpec((1, c_block), lambda c: (0, c)),
            ],
            out_specs=pl.BlockSpec((N, H, W, c_block), lambda c: (0, 0, 0, c)),
            scratch_shapes=[pltpu.VMEM((N, H, W, c_block), jnp.float32)],
        ),
        compiler_params=pltpu.CompilerParams(
            dimension_semantics=("parallel",),
            vmem_limit_bytes=vmem_limit),
    )(x_pad, w_taps, gamma2, beta2)

    return out[..., :C]


# NHWC entry point: callers that can stay in NHWC avoid the layout plumbing
# (transposes move ~2x the kernel's HBM bytes for the real 1x1824x7x7 shape).
dwconv_bn_nhwc = jax.jit(_dwconv_bn_nhwc)


@jax.jit
def dwconv_bn(x_nchw, w_dw, gamma, beta):
    """x_nchw: (N, C, H, W); w_dw: (C, 5, 5); gamma/beta: (C,). Returns NCHW."""
    x_nhwc = jnp.transpose(x_nchw, (0, 2, 3, 1))
    out = _dwconv_bn_nhwc(x_nhwc, w_dw, gamma, beta)
    return jnp.transpose(out, (0, 3, 1, 2))


def _reference(x_nchw, w_dw, gamma, beta):
    """Pure-JAX reference: depthwise conv + training-mode BatchNorm2d."""
    C = x_nchw.shape[1]
    w = w_dw.reshape(C, 1, KH, KW)
    y = jax.lax.conv_general_dilated(
        x_nchw, w, window_strides=(1, 1), padding=((PAD, PAD), (PAD, PAD)),
        dimension_numbers=("NCHW", "OIHW", "NCHW"), feature_group_count=C)
    mean = jnp.mean(y, axis=(0, 2, 3), keepdims=True)
    var = jnp.mean((y - mean) ** 2, axis=(0, 2, 3), keepdims=True)
    yhat = (y - mean) * jax.lax.rsqrt(var + BN_EPS)
    return yhat * gamma.reshape(1, C, 1, 1) + beta.reshape(1, C, 1, 1)


if __name__ == "__main__":
    # Scaled-down version of the module's (1, 1824, 7, 7): same 7x7 spatial, and
    # a channel count that is NOT a multiple of 128 to exercise the padding path.
    N, C, H, W = 2, 200, 7, 7

    key = jax.random.PRNGKey(0)
    kx, kw = jax.random.split(key, 2)
    x = jax.random.normal(kx, (N, C, H, W), dtype=jnp.float32)
    w_dw = jax.random.normal(kw, (C, KH, KW), dtype=jnp.float32) * 0.1
    gamma = 1.0 + 0.01 * jnp.arange(C, dtype=jnp.float32)
    beta = 0.005 * jnp.arange(C, dtype=jnp.float32)

    out = jax.block_until_ready(dwconv_bn(x, w_dw, gamma, beta))
    ref = jax.block_until_ready(_reference(x, w_dw, gamma, beta))
    if not jnp.allclose(out, ref, atol=1e-4, rtol=1e-4):
        raise AssertionError("Pallas kernel output mismatch vs JAX reference")

    print("KERNEL_OK")
</pallas_src>

<mosaic_0001>
module attributes {stable_mosaic.version = 11 : i64} {
  func.func @_dwconv_bn_kernel(%arg0: i32, %arg1: memref<2x11x11x256xf32, #tpu.memory_space<vmem>>, %arg2: memref<25x256xf32, #tpu.memory_space<vmem>>, %arg3: memref<1x256xf32, #tpu.memory_space<vmem>>, %arg4: memref<1x256xf32, #tpu.memory_space<vmem>>, %arg5: memref<2x7x7x256xf32, #tpu.memory_space<vmem>>, %arg6: memref<2x7x7x256xf32, #tpu.memory_space<vmem>>) attributes {dimension_semantics = [#tpu.dimension_semantics<parallel>], iteration_bounds = array<i64: 1>, scalar_prefetch = 0 : i64, scratch_operands = 1 : i64, tpu.core_type = #tpu.core_type<tc>, window_params = [{transform_indices = @transform_0, window_bounds = array<i64: 2, 11, 11, 256>}, {transform_indices = @transform_1, window_bounds = array<i64: 25, 256>}, {transform_indices = @transform_2, window_bounds = array<i64: 1, 256>}, {transform_indices = @transform_3, window_bounds = array<i64: 1, 256>}, {transform_indices = @transform_4, window_bounds = array<i64: 2, 7, 7, 256>}]} {
    %c0 = arith.constant 0 : index
    %c0_0 = arith.constant 0 : index
    %c0_1 = arith.constant 0 : index
    %c0_2 = arith.constant 0 : index
    %0 = vector.load %arg1[%c0, %c0_0, %c0_1, %c0_2] : memref<2x11x11x256xf32, #tpu.memory_space<vmem>>, vector<2x11x11x256xf32>
    %1 = vector.extract_strided_slice %0 {offsets = [0, 0, 0, 0], sizes = [2, 11, 7, 256], strides = [1, 1, 1, 1]} : vector<2x11x11x256xf32> to vector<2x11x7x256xf32>
    %2 = vector.extract_strided_slice %0 {offsets = [0, 0, 1, 0], sizes = [2, 11, 7, 256], strides = [1, 1, 1, 1]} : vector<2x11x11x256xf32> to vector<2x11x7x256xf32>
    %3 = vector.extract_strided_slice %0 {offsets = [0, 0, 2, 0], sizes = [2, 11, 7, 256], strides = [1, 1, 1, 1]} : vector<2x11x11x256xf32> to vector<2x11x7x256xf32>
    %4 = vector.extract_strided_slice %0 {offsets = [0, 0, 3, 0], sizes = [2, 11, 7, 256], strides = [1, 1, 1, 1]} : vector<2x11x11x256xf32> to vector<2x11x7x256xf32>
    %5 = vector.extract_strided_slice %0 {offsets = [0, 0, 4, 0], sizes = [2, 11, 7, 256], strides = [1, 1, 1, 1]} : vector<2x11x11x256xf32> to vector<2x11x7x256xf32>
    %c0_3 = arith.constant 0 : index
    %c0_4 = arith.constant 0 : index
    %6 = vector.load %arg2[%c0_3, %c0_4] : memref<25x256xf32, #tpu.memory_space<vmem>>, vector<25x256xf32>
    %7 = vector.extract_strided_slice %6 {offsets = [0, 0], sizes = [1, 256], strides = [1, 1]} : vector<25x256xf32> to vector<1x256xf32>
    %8 = vector.shape_cast %7 : vector<1x256xf32> to vector<1x1x256xf32>
    %9 = vector.extract_strided_slice %6 {offsets = [1, 0], sizes = [1, 256], strides = [1, 1]} : vector<25x256xf32> to vector<1x256xf32>
    %10 = vector.shape_cast %9 : vector<1x256xf32> to vector<1x1x256xf32>
    %11 = vector.extract_strided_slice %6 {offsets = [2, 0], sizes = [1, 256], strides = [1, 1]} : vector<25x256xf32> to vector<1x256xf32>
    %12 = vector.shape_cast %11 : vector<1x256xf32> to vector<1x1x256xf32>
    %13 = vector.extract_strided_slice %6 {offsets = [3, 0], sizes = [1, 256], strides = [1, 1]} : vector<25x256xf32> to vector<1x256xf32>
    %14 = vector.shape_cast %13 : vector<1x256xf32> to vector<1x1x256xf32>
    %15 = vector.extract_strided_slice %6 {offsets = [4, 0], sizes = [1, 256], strides = [1, 1]} : vector<25x256xf32> to vector<1x256xf32>
    %16 = vector.shape_cast %15 : vector<1x256xf32> to vector<1x1x256xf32>
    %17 = vector.extract_strided_slice %6 {offsets = [5, 0], sizes = [1, 256], strides = [1, 1]} : vector<25x256xf32> to vector<1x256xf32>
    %18 = vector.shape_cast %17 : vector<1x256xf32> to vector<1x1x256xf32>
    %19 = vector.extract_strided_slice %6 {offsets = [6, 0], sizes = [1, 256], strides = [1, 1]} : vector<25x256xf32> to vector<1x256xf32>
    %20 = vector.shape_cast %19 : vector<1x256xf32> to vector<1x1x256xf32>
    %21 = vector.extract_strided_slice %6 {offsets = [7, 0], sizes = [1, 256], strides = [1, 1]} : vector<25x256xf32> to vector<1x256xf32>
    %22 = vector.shape_cast %21 : vector<1x256xf32> to vector<1x1x256xf32>
    %23 = vector.extract_strided_slice %6 {offsets = [8, 0], sizes = [1, 256], strides = [1, 1]} : vector<25x256xf32> to vector<1x256xf32>
    %24 = vector.shape_cast %23 : vector<1x256xf32> to vector<1x1x256xf32>
    %25 = vector.extract_strided_slice %6 {offsets = [9, 0], sizes = [1, 256], strides = [1, 1]} : vector<25x256xf32> to vector<1x256xf32>
    %26 = vector.shape_cast %25 : vector<1x256xf32> to vector<1x1x256xf32>
    %27 = vector.extract_strided_slice %6 {offsets = [10, 0], sizes = [1, 256], strides = [1, 1]} : vector<25x256xf32> to vector<1x256xf32>
    %28 = vector.shape_cast %27 : vector<1x256xf32> to vector<1x1x256xf32>
    %29 = vector.extract_strided_slice %6 {offsets = [11, 0], sizes = [1, 256], strides = [1, 1]} : vector<25x256xf32> to vector<1x256xf32>
    %30 = vector.shape_cast %29 : vector<1x256xf32> to vector<1x1x256xf32>
    %31 = vector.extract_strided_slice %6 {offsets = [12, 0], sizes = [1, 256], strides = [1, 1]} : vector<25x256xf32> to vector<1x256xf32>
    %32 = vector.shape_cast %31 : vector<1x256xf32> to vector<1x1x256xf32>
    %33 = vector.extract_strided_slice %6 {offsets = [13, 0], sizes = [1, 256], strides = [1, 1]} : vector<25x256xf32> to vector<1x256xf32>
    %34 = vector.shape_cast %33 : vector<1x256xf32> to vector<1x1x256xf32>
    %35 = vector.extract_strided_slice %6 {offsets = [14, 0], sizes = [1, 256], strides = [1, 1]} : vector<25x256xf32> to vector<1x256xf32>
    %36 = vector.shape_cast %35 : vector<1x256xf32> to vector<1x1x256xf32>
    %37 = vector.extract_strided_slice %6 {offsets = [15, 0], sizes = [1, 256], strides = [1, 1]} : vector<25x256xf32> to vector<1x256xf32>
    %38 = vector.shape_cast %37 : vector<1x256xf32> to vector<1x1x256xf32>
    %39 = vector.extract_strided_slice %6 {offsets = [16, 0], sizes = [1, 256], strides = [1, 1]} : vector<25x256xf32> to vector<1x256xf32>
    %40 = vector.shape_cast %39 : vector<1x256xf32> to vector<1x1x256xf32>
    %41 = vector.extract_strided_slice %6 {offsets = [17, 0], sizes = [1, 256], strides = [1, 1]} : vector<25x256xf32> to vector<1x256xf32>
    %42 = vector.shape_cast %41 : vector<1x256xf32> to vector<1x1x256xf32>
    %43 = vector.extract_strided_slice %6 {offsets = [18, 0], sizes = [1, 256], strides = [1, 1]} : vector<25x256xf32> to vector<1x256xf32>
    %44 = vector.shape_cast %43 : vector<1x256xf32> to vector<1x1x256xf32>
    %45 = vector.extract_strided_slice %6 {offsets = [19, 0], sizes = [1, 256], strides = [1, 1]} : vector<25x256xf32> to vector<1x256xf32>
    %46 = vector.shape_cast %45 : vector<1x256xf32> to vector<1x1x256xf32>
    %47 = vector.extract_strided_slice %6 {offsets = [20, 0], sizes = [1, 256], strides = [1, 1]} : vector<25x256xf32> to vector<1x256xf32>
    %48 = vector.shape_cast %47 : vector<1x256xf32> to vector<1x1x256xf32>
    %49 = vector.extract_strided_slice %6 {offsets = [21, 0], sizes = [1, 256], strides = [1, 1]} : vector<25x256xf32> to vector<1x256xf32>
    %50 = vector.shape_cast %49 : vector<1x256xf32> to vector<1x1x256xf32>
    %51 = vector.extract_strided_slice %6 {offsets = [22, 0], sizes = [1, 256], strides = [1, 1]} : vector<25x256xf32> to vector<1x256xf32>
    %52 = vector.shape_cast %51 : vector<1x256xf32> to vector<1x1x256xf32>
    %53 = vector.extract_strided_slice %6 {offsets = [23, 0], sizes = [1, 256], strides = [1, 1]} : vector<25x256xf32> to vector<1x256xf32>
    %54 = vector.shape_cast %53 : vector<1x256xf32> to vector<1x1x256xf32>
    %55 = vector.extract_strided_slice %6 {offsets = [24, 0], sizes = [1, 256], strides = [1, 1]} : vector<25x256xf32> to vector<1x256xf32>
    %56 = vector.shape_cast %55 : vector<1x256xf32> to vector<1x1x256xf32>
    %cst = arith.constant 0.000000e+00 : f32
    %57 = vector.broadcast %cst : f32 to vector<2x7x256xf32>
    %cst_5 = arith.constant 0.000000e+00 : f32
    %58 = vector.broadcast %cst_5 : f32 to vector<2x7x256xf32>
    %59 = vector.extract_strided_slice %1 {offsets = [0, 0, 0, 0], sizes = [2, 1, 7, 256], strides = [1, 1, 1, 1]} : vector<2x11x7x256xf32> to vector<2x1x7x256xf32>
    %60 = vector.shape_cast %59 : vector<2x1x7x256xf32> to vector<2x7x256xf32>
    %61 = vector.broadcast %8 : vector<1x1x256xf32> to vector<2x7x256xf32>
    %62 = arith.mulf %60, %61 : vector<2x7x256xf32>
    %63 = vector.extract_strided_slice %1 {offsets = [0, 1, 0, 0], sizes = [2, 1, 7, 256], strides = [1, 1, 1, 1]} : vector<2x11x7x256xf32> to vector<2x1x7x256xf32>
    %64 = vector.shape_cast %63 : vector<2x1x7x256xf32> to vector<2x7x256xf32>
    %65 = vector.broadcast %18 : vector<1x1x256xf32> to vector<2x7x256xf32>
    %66 = arith.mulf %64, %65 : vector<2x7x256xf32>
    %67 = arith.addf %62, %66 : vector<2x7x256xf32>
    %68 = vector.extract_strided_slice %1 {offsets = [0, 2, 0, 0], sizes = [2, 1, 7, 256], strides = [1, 1, 1, 1]} : vector<2x11x7x256xf32> to vector<2x1x7x256xf32>
    %69 = vector.shape_cast %68 : vector<2x1x7x256xf32> to vector<2x7x256xf32>
    %70 = vector.broadcast %28 : vector<1x1x256xf32> to vector<2x7x256xf32>
    %71 = arith.mulf %69, %70 : vector<2x7x256xf32>
    %72 = arith.addf %67, %71 : vector<2x7x256xf32>
    %73 = vector.extract_strided_slice %1 {offsets = [0, 3, 0, 0], sizes = [2, 1, 7, 256], strides = [1, 1, 1, 1]} : vector<2x11x7x256xf32> to vector<2x1x7x256xf32>
    %74 = vector.shape_cast %73 : vector<2x1x7x256xf32> to vector<2x7x256xf32>
    %75 = vector.broadcast %38 : vector<1x1x256xf32> to vector<2x7x256xf32>
    %76 = arith.mulf %74, %75 : vector<2x7x256xf32>
    %77 = arith.addf %72, %76 : vector<2x7x256xf32>
    %78 = vector.extract_strided_slice %1 {offsets = [0, 4, 0, 0], sizes = [2, 1, 7, 256], strides = [1, 1, 1, 1]} : vector<2x11x7x256xf32> to vector<2x1x7x256xf32>
    %79 = vector.shape_cast %78 : vector<2x1x7x256xf32> to vector<2x7x256xf32>
    %80 = vector.broadcast %48 : vector<1x1x256xf32> to vector<2x7x256xf32>
    %81 = arith.mulf %79, %80 : vector<2x7x256xf32>
    %82 = arith.addf %77, %81 : vector<2x7x256xf32>
    %83 = vector.extract_strided_slice %2 {offsets = [0, 0, 0, 0], sizes = [2, 1, 7, 256], strides = [1, 1, 1, 1]} : vector<2x11x7x256xf32> to vector<2x1x7x256xf32>
    %84 = vector.shape_cast %83 : vector<2x1x7x256xf32> to vector<2x7x256xf32>
    %85 = vector.broadcast %10 : vector<1x1x256xf32> to vector<2x7x256xf32>
    %86 = arith.mulf %84, %85 : vector<2x7x256xf32>
    %87 = arith.addf %82, %86 : vector<2x7x256xf32>
    %88 = vector.extract_strided_slice %2 {offsets = [0, 1, 0, 0], sizes = [2, 1, 7, 256], strides = [1, 1, 1, 1]} : vector<2x11x7x256xf32> to vector<2x1x7x256xf32>
    %89 = vector.shape_cast %88 : vector<2x1x7x256xf32> to vector<2x7x256xf32>
    %90 = vector.broadcast %20 : vector<1x1x256xf32> to vector<2x7x256xf32>
    %91 = arith.mulf %89, %90 : vector<2x7x256xf32>
    %92 = arith.addf %87, %91 : vector<2x7x256xf32>
    %93 = vector.extract_strided_slice %2 {offsets = [0, 2, 0, 0], sizes = [2, 1, 7, 256], strides = [1, 1, 1, 1]} : vector<2x11x7x256xf32> to vector<2x1x7x256xf32>
    %94 = vector.shape_cast %93 : vector<2x1x7x256xf32> to vector<2x7x256xf32>
    %95 = vector.broadcast %30 : vector<1x1x256xf32> to vector<2x7x256xf32>
    %96 = arith.mulf %94, %95 : vector<2x7x256xf32>
    %97 = arith.addf %92, %96 : vector<2x7x256xf32>
    %98 = vector.extract_strided_slice %2 {offsets = [0, 3, 0, 0], sizes = [2, 1, 7, 256], strides = [1, 1, 1, 1]} : vector<2x11x7x256xf32> to vector<2x1x7x256xf32>
    %99 = vector.shape_cast %98 : vector<2x1x7x256xf32> to vector<2x7x256xf32>
    %100 = vector.broadcast %40 : vector<1x1x256xf32> to vector<2x7x256xf32>
    %101 = arith.mulf %99, %100 : vector<2x7x256xf32>
    %102 = arith.addf %97, %101 : vector<2x7x256xf32>
    %103 = vector.extract_strided_slice %2 {offsets = [0, 4, 0, 0], sizes = [2, 1, 7, 256], strides = [1, 1, 1, 1]} : vector<2x11x7x256xf32> to vector<2x1x7x256xf32>
    %104 = vector.shape_cast %103 : vector<2x1x7x256xf32> to vector<2x7x256xf32>
    %105 = vector.broadcast %50 : vector<1x1x256xf32> to vector<2x7x256xf32>
    %106 = arith.mulf %104, %105 : vector<2x7x256xf32>
    %107 = arith.addf %102, %106 : vector<2x7x256xf32>
    %108 = vector.extract_strided_slice %3 {offsets = [0, 0, 0, 0], sizes = [2, 1, 7, 256], strides = [1, 1, 1, 1]} : vector<2x11x7x256xf32> to vector<2x1x7x256xf32>
    %109 = vector.shape_cast %108 : vector<2x1x7x256xf32> to vector<2x7x256xf32>
    %110 = vector.broadcast %12 : vector<1x1x256xf32> to vector<2x7x256xf32>
    %111 = arith.mulf %109, %110 : vector<2x7x256xf32>
    %112 = arith.addf %107, %111 : vector<2x7x256xf32>
    %113 = vector.extract_strided_slice %3 {offsets = [0, 1, 0, 0], sizes = [2, 1, 7, 256], strides = [1, 1, 1, 1]} : vector<2x11x7x256xf32> to vector<2x1x7x256xf32>
    %114 = vector.shape_cast %113 : vector<2x1x7x256xf32> to vector<2x7x256xf32>
    %115 = vector.broadcast %22 : vector<1x1x256xf32> to vector<2x7x256xf32>
    %116 = arith.mulf %114, %115 : vector<2x7x256xf32>
    %117 = arith.addf %112, %116 : vector<2x7x256xf32>
    %118 = vector.extract_strided_slice %3 {offsets = [0, 2, 0, 0], sizes = [2, 1, 7, 256], strides = [1, 1, 1, 1]} : vector<2x11x7x256xf32> to vector<2x1x7x256xf32>
    %119 = vector.shape_cast %118 : vector<2x1x7x256xf32> to vector<2x7x256xf32>
    %120 = vector.broadcast %32 : vector<1x1x256xf32> to vector<2x7x256xf32>
    %121 = arith.mulf %119, %120 : vector<2x7x256xf32>
    %122 = arith.addf %117, %121 : vector<2x7x256xf32>
    %123 = vector.extract_strided_slice %3 {offsets = [0, 3, 0, 0], sizes = [2, 1, 7, 256], strides = [1, 1, 1, 1]} : vector<2x11x7x256xf32> to vector<2x1x7x256xf32>
    %124 = vector.shape_cast %123 : vector<2x1x7x256xf32> to vector<2x7x256xf32>
    %125 = vector.broadcast %42 : vector<1x1x256xf32> to vector<2x7x256xf32>
    %126 = arith.mulf %124, %125 : vector<2x7x256xf32>
    %127 = arith.addf %122, %126 : vector<2x7x256xf32>
    %128 = vector.extract_strided_slice %3 {offsets = [0, 4, 0, 0], sizes = [2, 1, 7, 256], strides = [1, 1, 1, 1]} : vector<2x11x7x256xf32> to vector<2x1x7x256xf32>
    %129 = vector.shape_cast %128 : vector<2x1x7x256xf32> to vector<2x7x256xf32>
    %130 = vector.broadcast %52 : vector<1x1x256xf32> to vector<2x7x256xf32>
    %131 = arith.mulf %129, %130 : vector<2x7x256xf32>
    %132 = arith.addf %127, %131 : vector<2x7x256xf32>
    %133 = vector.extract_strided_slice %4 {offsets = [0, 0, 0, 0], sizes = [2, 1, 7, 256], strides = [1, 1, 1, 1]} : vector<2x11x7x256xf32> to vector<2x1x7x256xf32>
    %134 = vector.shape_cast %133 : vector<2x1x7x256xf32> to vector<2x7x256xf32>
    %135 = vector.broadcast %14 : vector<1x1x256xf32> to vector<2x7x256xf32>
    %136 = arith.mulf %134, %135 : vector<2x7x256xf32>
    %137 = arith.addf %132, %136 : vector<2x7x256xf32>
    %138 = vector.extract_strided_slice %4 {offsets = [0, 1, 0, 0], sizes = [2, 1, 7, 256], strides = [1, 1, 1, 1]} : vector<2x11x7x256xf32> to vector<2x1x7x256xf32>
    %139 = vector.shape_cast %138 : vector<2x1x7x256xf32> to vector<2x7x256xf32>
    %140 = vector.broadcast %24 : vector<1x1x256xf32> to vector<2x7x256xf32>
    %141 = arith.mulf %139, %140 : vector<2x7x256xf32>
    %142 = arith.addf %137, %141 : vector<2x7x256xf32>
    %143 = vector.extract_strided_slice %4 {offsets = [0, 2, 0, 0], sizes = [2, 1, 7, 256], strides = [1, 1, 1, 1]} : vector<2x11x7x256xf32> to vector<2x1x7x256xf32>
    %144 = vector.shape_cast %143 : vector<2x1x7x256xf32> to vector<2x7x256xf32>
    %145 = vector.broadcast %34 : vector<1x1x256xf32> to vector<2x7x256xf32>
    %146 = arith.mulf %144, %145 : vector<2x7x256xf32>
    %147 = arith.addf %142, %146 : vector<2x7x256xf32>
    %148 = vector.extract_strided_slice %4 {offsets = [0, 3, 0, 0], sizes = [2, 1, 7, 256], strides = [1, 1, 1, 1]} : vector<2x11x7x256xf32> to vector<2x1x7x256xf32>
    %149 = vector.shape_cast %148 : vector<2x1x7x256xf32> to vector<2x7x256xf32>
    %150 = vector.broadcast %44 : vector<1x1x256xf32> to vector<2x7x256xf32>
    %151 = arith.mulf %149, %150 : vector<2x7x256xf32>
    %152 = arith.addf %147, %151 : vector<2x7x256xf32>
    %153 = vector.extract_strided_slice %4 {offsets = [0, 4, 0, 0], sizes = [2, 1, 7, 256], strides = [1, 1, 1, 1]} : vector<2x11x7x256xf32> to vector<2x1x7x256xf32>
    %154 = vector.shape_cast %153 : vector<2x1x7x256xf32> to vector<2x7x256xf32>
    %155 = vector.broadcast %54 : vector<1x1x256xf32> to vector<2x7x256xf32>
    %156 = arith.mulf %154, %155 : vector<2x7x256xf32>
    %157 = arith.addf %152, %156 : vector<2x7x256xf32>
    %158 = vector.extract_strided_slice %5 {offsets = [0, 0, 0, 0], sizes = [2, 1, 7, 256], strides = [1, 1, 1, 1]} : vector<2x11x7x256xf32> to vector<2x1x7x256xf32>
    %159 = vector.shape_cast %158 : vector<2x1x7x256xf32> to vector<2x7x256xf32>
    %160 = vector.broadcast %16 : vector<1x1x256xf32> to vector<2x7x256xf32>
    %161 = arith.mulf %159, %160 : vector<2x7x256xf32>
    %162 = arith.addf %157, %161 : vector<2x7x256xf32>
    %163 = vector.extract_strided_slice %5 {offsets = [0, 1, 0, 0], sizes = [2, 1, 7, 256], strides = [1, 1, 1, 1]} : vector<2x11x7x256xf32> to vector<2x1x7x256xf32>
    %164 = vector.shape_cast %163 : vector<2x1x7x256xf32> to vector<2x7x256xf32>
    %165 = vector.broadcast %26 : vector<1x1x256xf32> to vector<2x7x256xf32>
    %166 = arith.mulf %164, %165 : vector<2x7x256xf32>
    %167 = arith.addf %162, %166 : vector<2x7x256xf32>
    %168 = vector.extract_strided_slice %5 {offsets = [0, 2, 0, 0], sizes = [2, 1, 7, 256], strides = [1, 1, 1, 1]} : vector<2x11x7x256xf32> to vector<2x1x7x256xf32>
    %169 = vector.shape_cast %168 : vector<2x1x7x256xf32> to vector<2x7x256xf32>
    %170 = vector.broadcast %36 : vector<1x1x256xf32> to vector<2x7x256xf32>
    %171 = arith.mulf %169, %170 : vector<2x7x256xf32>
    %172 = arith.addf %167, %171 : vector<2x7x256xf32>
    %173 = vector.extract_strided_slice %5 {offsets = [0, 3, 0, 0], sizes = [2, 1, 7, 256], strides = [1, 1, 1, 1]} : vector<2x11x7x256xf32> to vector<2x1x7x256xf32>
    %174 = vector.shape_cast %173 : vector<2x1x7x256xf32> to vector<2x7x256xf32>
    %175 = vector.broadcast %46 : vector<1x1x256xf32> to vector<2x7x256xf32>
    %176 = arith.mulf %174, %175 : vector<2x7x256xf32>
    %177 = arith.addf %172, %176 : vector<2x7x256xf32>
    %178 = vector.extract_strided_slice %5 {offsets = [0, 4, 0, 0], sizes = [2, 1, 7, 256], strides = [1, 1, 1, 1]} : vector<2x11x7x256xf32> to vector<2x1x7x256xf32>
    %179 = vector.shape_cast %178 : vector<2x1x7x256xf32> to vector<2x7x256xf32>
    %180 = vector.broadcast %56 : vector<1x1x256xf32> to vector<2x7x256xf32>
    %181 = arith.mulf %179, %180 : vector<2x7x256xf32>
    %182 = arith.addf %177, %181 : vector<2x7x256xf32>
    %c0_6 = arith.constant 0 : index
    %c0_7 = arith.constant 0 : index
    %c0_8 = arith.constant 0 : index
    %c0_9 = arith.constant 0 : index
    %183 = vector.load %arg6[%c0_6, %c0_7, %c0_8, %c0_9] : memref<2x7x7x256xf32, #tpu.memory_space<vmem>>, vector<2x1x7x256xf32>
    %184 = vector.shape_cast %183 : vector<2x1x7x256xf32> to vector<2x7x256xf32>
    %185 = vector.shape_cast %182 : vector<2x7x256xf32> to vector<2x1x7x256xf32>
    tpu.vector_store %arg6[%c0_6, %c0_7, %c0_8, %c0_9], %185 {strides = array<i32>} : memref<2x7x7x256xf32, #tpu.memory_space<vmem>>, vector<2x1x7x256xf32>,
    %186 = arith.addf %57, %182 : vector<2x7x256xf32>
    %187 = arith.mulf %182, %182 : vector<2x7x256xf32>
    %188 = arith.addf %58, %187 : vector<2x7x256xf32>
    %189 = vector.extract_strided_slice %1 {offsets = [0, 1, 0, 0], sizes = [2, 1, 7, 256], strides = [1, 1, 1, 1]} : vector<2x11x7x256xf32> to vector<2x1x7x256xf32>
    %190 = vector.shape_cast %189 : vector<2x1x7x256xf32> to vector<2x7x256xf32>
    %191 = vector.broadcast %8 : vector<1x1x256xf32> to vector<2x7x256xf32>
    %192 = arith.mulf %190, %191 : vector<2x7x256xf32>
    %193 = vector.extract_strided_slice %1 {offsets = [0, 2, 0, 0], sizes = [2, 1, 7, 256], strides = [1, 1, 1, 1]} : vector<2x11x7x256xf32> to vector<2x1x7x256xf32>
    %194 = vector.shape_cast %193 : vector<2x1x7x256xf32> to vector<2x7x256xf32>
    %195 = vector.broadcast %18 : vector<1x1x256xf32> to vector<2x7x256xf32>
    %196 = arith.mulf %194, %195 : vector<2x7x256xf32>
    %197 = arith.addf %192, %196 : vector<2x7x256xf32>
    %198 = vector.extract_strided_slice %1 {offsets = [0, 3, 0, 0], sizes = [2, 1, 7, 256], strides = [1, 1, 1, 1]} : vector<2x11x7x256xf32> to vector<2x1x7x256xf32>
    %199 = vector.shape_cast %198 : vector<2x1x7x256xf32> to vector<2x7x256xf32>
    %200 = vector.broadcast %28 : vector<1x1x256xf32> to vector<2x7x256xf32>
    %201 = arith.mulf %199, %200 : vector<2x7x256xf32>
    %202 = arith.addf %197, %201 : vector<2x7x256xf32>
    %203 = vector.extract_strided_slice %1 {offsets = [0, 4, 0, 0], sizes = [2, 1, 7, 256], strides = [1, 1, 1, 1]} : vector<2x11x7x256xf32> to vector<2x1x7x256xf32>
    %204 = vector.shape_cast %203 : vector<2x1x7x256xf32> to vector<2x7x256xf32>
    %205 = vector.broadcast %38 : vector<1x1x256xf32> to vector<2x7x256xf32>
    %206 = arith.mulf %204, %205 : vector<2x7x256xf32>
    %207 = arith.addf %202, %206 : vector<2x7x256xf32>
    %208 = vector.extract_strided_slice %1 {offsets = [0, 5, 0, 0], sizes = [2, 1, 7, 256], strides = [1, 1, 1, 1]} : vector<2x11x7x256xf32> to vector<2x1x7x256xf32>
    %209 = vector.shape_cast %208 : vector<2x1x7x256xf32> to vector<2x7x256xf32>
    %210 = vector.broadcast %48 : vector<1x1x256xf32> to vector<2x7x256xf32>
    %211 = arith.mulf %209, %210 : vector<2x7x256xf32>
    %212 = arith.addf %207, %211 : vector<2x7x256xf32>
    %213 = vector.extract_strided_slice %2 {offsets = [0, 1, 0, 0], sizes = [2, 1, 7, 256], strides = [1, 1, 1, 1]} : vector<2x11x7x256xf32> to vector<2x1x7x256xf32>
    %214 = vector.shape_cast %213 : vector<2x1x7x256xf32> to vector<2x7x256xf32>
    %215 = vector.broadcast %10 : vector<1x1x256xf32> to vector<2x7x256xf32>
    %216 = arith.mulf %214, %215 : vector<2x7x256xf32>
    %217 = arith.addf %212, %216 : vector<2x7x256xf32>
    %218 = vector.extract_strided_slice %2 {offsets = [0, 2, 0, 0], sizes = [2, 1, 7, 256], strides = [1, 1, 1, 1]} : vector<2x11x7x256xf32> to vector<2x1x7x256xf32>
    %219 = vector.shape_cast %218 : vector<2x1x7x256xf32> to vector<2x7x256xf32>
    %220 = vector.broadcast %20 : vector<1x1x256xf32> to vector<2x7x256xf32>
    %221 = arith.mulf %219, %220 : vector<2x7x256xf32>
    %222 = arith.addf %217, %221 : vector<2x7x256xf32>
    %223 = vector.extract_strided_slice %2 {offsets = [0, 3, 0, 0], sizes = [2, 1, 7, 256], strides = [1, 1, 1, 1]} : vector<2x11x7x256xf32> to vector<2x1x7x256xf32>
    %224 = vector.shape_cast %223 : vector<2x1x7x256xf32> to vector<2x7x256xf32>
    %225 = vector.broadcast %30 : vector<1x1x256xf32> to vector<2x7x256xf32>
    %226 = arith.mulf %224, %225 : vector<2x7x256xf32>
    %227 = arith.addf %222, %226 : vector<2x7x256xf32>
    %228 = vector.extract_strided_slice %2 {offsets = [0, 4, 0, 0], sizes = [2, 1, 7, 256], strides = [1, 1, 1, 1]} : vector<2x11x7x256xf32> to vector<2x1x7x256xf32>
    %229 = vector.shape_cast %228 : vector<2x1x7x256xf32> to vector<2x7x256xf32>
    %230 = vector.broadcast %40 : vector<1x1x256xf32> to vector<2x7x256xf32>
    %231 = arith.mulf %229, %230 : vector<2x7x256xf32>
    %232 = arith.addf %227, %231 : vector<2x7x256xf32>
    %233 = vector.extract_strided_slice %2 {offsets = [0, 5, 0, 0], sizes = [2, 1, 7, 256], strides = [1, 1, 1, 1]} : vector<2x11x7x256xf32> to vector<2x1x7x256xf32>
    %234 = vector.shape_cast %233 : vector<2x1x7x256xf32> to vector<2x7x256xf32>
    %235 = vector.broadcast %50 : vector<1x1x256xf32> to vector<2x7x256xf32>
    %236 = arith.mulf %234, %235 : vector<2x7x256xf32>
    %237 = arith.addf %232, %236 : vector<2x7x256xf32>
    %238 = vector.extract_strided_slice %3 {offsets = [0, 1, 0, 0], sizes = [2, 1, 7, 256], strides = [1, 1, 1, 1]} : vector<2x11x7x256xf32> to vector<2x1x7x256xf32>
    %239 = vector.shape_cast %238 : vector<2x1x7x256xf32> to vector<2x7x256xf32>
    %240 = vector.broadcast %12 : vector<1x1x256xf32> to vector<2x7x256xf32>
    %241 = arith.mulf %239, %240 : vector<2x7x256xf32>
    %242 = arith.addf %237, %241 : vector<2x7x256xf32>
    %243 = vector.extract_strided_slice %3 {offsets = [0, 2, 0, 0], sizes = [2, 1, 7, 256], strides = [1, 1, 1, 1]} : vector<2x11x7x256xf32> to vector<2x1x7x256xf32>
    %244 = vector.shape_cast %243 : vector<2x1x7x256xf32> to vector<2x7x256xf32>
    %245 = vector.broadcast %22 : vector<1x1x256xf32> to vector<2x7x256xf32>
    %246 = arith.mulf %244, %245 : vector<2x7x256xf32>
    %247 = arith.addf %242, %246 : vector<2x7x256xf32>
    %248 = vector.extract_strided_slice %3 {offsets = [0, 3, 0, 0], sizes = [2, 1, 7, 256], strides = [1, 1, 1, 1]} : vector<2x11x7x256xf32> to vector<2x1x7x256xf32>
    %249 = vector.shape_cast %248 : vector<2x1x7x256xf32> to vector<2x7x256xf32>
    %250 = vector.broadcast %32 : vector<1x1x256xf32> to vector<2x7x256xf32>
    %251 = arith.mulf %249, %250 : vector<2x7x256xf32>
    %252 = arith.addf %247, %251 : vector<2x7x256xf32>
    %253 = vector.extract_strided_slice %3 {offsets = [0, 4, 0, 0], sizes = [2, 1, 7, 256], strides = [1, 1, 1, 1]} : vector<2x11x7x256xf32> to vector<2x1x7x256xf32>
    %254 = vector.shape_cast %253 : vector<2x1x7x256xf32> to vector<2x7x256xf32>
    %255 = vector.broadcast %42 : vector<1x1x256xf32> to vector<2x7x256xf32>
    %256 = arith.mulf %254, %255 : vector<2x7x256xf32>
    %257 = arith.addf %252, %256 : vector<2x7x256xf32>
    %258 = vector.extract_strided_slice %3 {offsets = [0, 5, 0, 0], sizes = [2, 1, 7, 256], strides = [1, 1, 1, 1]} : vector<2x11x7x256xf32> to vector<2x1x7x256xf32>
    %259 = vector.shape_cast %258 : vector<2x1x7x256xf32> to vector<2x7x256xf32>
    %260 = vector.broadcast %52 : vector<1x1x256xf32> to vector<2x7x256xf32>
    %261 = arith.mulf %259, %260 : vector<2x7x256xf32>
    %262 = arith.addf %257, %261 : vector<2x7x256xf32>
    %263 = vector.extract_strided_slice %4 {offsets = [0, 1, 0, 0], sizes = [2, 1, 7, 256], strides = [1, 1, 1, 1]} : vector<2x11x7x256xf32> to vector<2x1x7x256xf32>
    %264 = vector.shape_cast %263 : vector<2x1x7x256xf32> to vector<2x7x256xf32>
    %265 = vector.broadcast %14 : vector<1x1x256xf32> to vector<2x7x256xf32>
    %266 = arith.mulf %264, %265 : vector<2x7x256xf32>
    %267 = arith.addf %262, %266 : vector<2x7x256xf32>
    %268 = vector.extract_strided_slice %4 {offsets = [0, 2, 0, 0], sizes = [2, 1, 7, 256], strides = [1, 1, 1, 1]} : vector<2x11x7x256xf32> to vector<2x1x7x256xf32>
    %269 = vector.shape_cast %268 : vector<2x1x7x256xf32> to vector<2x7x256xf32>
    %270 = vector.broadcast %24 : vector<1x1x256xf32> to vector<2x7x256xf32>
    %271 = arith.mulf %269, %270 : vector<2x7x256xf32>
    %272 = arith.addf %267, %271 : vector<2x7x256xf32>
    %273 = vector.extract_strided_slice %4 {offsets = [0, 3, 0, 0], sizes = [2, 1, 7, 256], strides = [1, 1, 1, 1]} : vector<2x11x7x256xf32> to vector<2x1x7x256xf32>
    %274 = vector.shape_cast %273 : vector<2x1x7x256xf32> to vector<2x7x256xf32>
    %275 = vector.broadcast %34 : vector<1x1x256xf32> to vector<2x7x256xf32>
    %276 = arith.mulf %274, %275 : vector<2x7x256xf32>
    %277 = arith.addf %272, %276 : vector<2x7x256xf32>
    %278 = vector.extract_strided_slice %4 {offsets = [0, 4, 0, 0], sizes = [2, 1, 7, 256], strides = [1, 1, 1, 1]} : vector<2x11x7x256xf32> to vector<2x1x7x256xf32>
    %279 = vector.shape_cast %278 : vector<2x1x7x256xf32> to vector<2x7x256xf32>
    %280 = vector.broadcast %44 : vector<1x1x256xf32> to vector<2x7x256xf32>
    %281 = arith.mulf %279, %280 : vector<2x7x256xf32>
    %282 = arith.addf %277, %281 : vector<2x7x256xf32>
    %283 = vector.extract_strided_slice %4 {offsets = [0, 5, 0, 0], sizes = [2, 1, 7, 256], strides = [1, 1, 1, 1]} : vector<2x11x7x256xf32> to vector<2x1x7x256xf32>
    %284 = vector.shape_cast %283 : vector<2x1x7x256xf32> to vector<2x7x256xf32>
    %285 = vector.broadcast %54 : vector<1x1x256xf32> to vector<2x7x256xf32>
    %286 = arith.mulf %284, %285 : vector<2x7x256xf32>
    %287 = arith.addf %282, %286 : vector<2x7x256xf32>
    %288 = vector.extract_strided_slice %5 {offsets = [0, 1, 0, 0], sizes = [2, 1, 7, 256], strides = [1, 1, 1, 1]} : vector<2x11x7x256xf32> to vector<2x1x7x256xf32>
    %289 = vector.shape_cast %288 : vector<2x1x7x256xf32> to vector<2x7x256xf32>
    %290 = vector.broadcast %16 : vector<1x1x256xf32> to vector<2x7x256xf32>
    %291 = arith.mulf %289, %290 : vector<2x7x256xf32>
    %292 = arith.addf %287, %291 : vector<2x7x256xf32>
    %293 = vector.extract_strided_slice %5 {offsets = [0, 2, 0, 0], sizes = [2, 1, 7, 256], strides = [1, 1, 1, 1]} : vector<2x11x7x256xf32> to vector<2x1x7x256xf32>
    %294 = vector.shape_cast %293 : vector<2x1x7x256xf32> to vector<2x7x256xf32>
    %295 = vector.broadcast %26 : vector<1x1x256xf32> to vector<2x7x256xf32>
    %296 = arith.mulf %294, %295 : vector<2x7x256xf32>
    %297 = arith.addf %292, %296 : vector<2x7x256xf32>
    %298 = vector.extract_strided_slice %5 {offsets = [0, 3, 0, 0], sizes = [2, 1, 7, 256], strides = [1, 1, 1, 1]} : vector<2x11x7x256xf32> to vector<2x1x7x256xf32>
    %299 = vector.shape_cast %298 : vector<2x1x7x256xf32> to vector<2x7x256xf32>
    %300 = vector.broadcast %36 : vector<1x1x256xf32> to vector<2x7x256xf32>
    %301 = arith.mulf %299, %300 : vector<2x7x256xf32>
    %302 = arith.addf %297, %301 : vector<2x7x256xf32>
    %303 = vector.extract_strided_slice %5 {offsets = [0, 4, 0, 0], sizes = [2, 1, 7, 256], strides = [1, 1, 1, 1]} : vector<2x11x7x256xf32> to vector<2x1x7x256xf32>
    %304 = vector.shape_cast %303 : vector<2x1x7x256xf32> to vector<2x7x256xf32>
    %305 = vector.broadcast %46 : vector<1x1x256xf32> to vector<2x7x256xf32>
    %306 = arith.mulf %304, %305 : vector<2x7x256xf32>
    %307 = arith.addf %302, %306 : vector<2x7x256xf32>
    %308 = vector.extract_strided_slice %5 {offsets = [0, 5, 0, 0], sizes = [2, 1, 7, 256], strides = [1, 1, 1, 1]} : vector<2x11x7x256xf32> to vector<2x1x7x256xf32>
    %309 = vector.shape_cast %308 : vector<2x1x7x256xf32> to vector<2x7x256xf32>
    %310 = vector.broadcast %56 : vector<1x1x256xf32> to vector<2x7x256xf32>
    %311 = arith.mulf %309, %310 : vector<2x7x256xf32>
    %312 = arith.addf %307, %311 : vector<2x7x256xf32>
    %c0_10 = arith.constant 0 : index
    %c1 = arith.constant 1 : index
    %c0_11 = arith.constant 0 : index
    %c0_12 = arith.constant 0 : index
    %313 = vector.load %arg6[%c0_10, %c1, %c0_11, %c0_12] : memref<2x7x7x256xf32, #tpu.memory_space<vmem>>, vector<2x1x7x256xf32>
    %314 = vector.shape_cast %313 : vector<2x1x7x256xf32> to vector<2x7x256xf32>
    %315 = vector.shape_cast %312 : vector<2x7x256xf32> to vector<2x1x7x256xf32>
    tpu.vector_store %arg6[%c0_10, %c1, %c0_11, %c0_12], %315 {strides = array<i32>} : memref<2x7x7x256xf32, #tpu.memory_space<vmem>>, vector<2x1x7x256xf32>,
    %316 = arith.addf %186, %312 : vector<2x7x256xf32>
    %317 = arith.mulf %312, %312 : vector<2x7x256xf32>
    %318 = arith.addf %188, %317 : vector<2x7x256xf32>
    %319 = vector.extract_strided_slice %1 {offsets = [0, 2, 0, 0], sizes = [2, 1, 7, 256], strides = [1, 1, 1, 1]} : vector<2x11x7x256xf32> to vector<2x1x7x256xf32>
    %320 = vector.shape_cast %319 : vector<2x1x7x256xf32> to vector<2x7x256xf32>
    %321 = vector.broadcast %8 : vector<1x1x256xf32> to vector<2x7x256xf32>
    %322 = arith.mulf %320, %321 : vector<2x7x256xf32>
    %323 = vector.extract_strided_slice %1 {offsets = [0, 3, 0, 0], sizes = [2, 1, 7, 256], strides = [1, 1, 1, 1]} : vector<2x11x7x256xf32> to vector<2x1x7x256xf32>
    %324 = vector.shape_cast %323 : vector<2x1x7x256xf32> to vector<2x7x256xf32>
    %325 = vector.broadcast %18 : vector<1x1x256xf32> to vector<2x7x256xf32>
    %326 = arith.mulf %324, %325 : vector<2x7x256xf32>
    %327 = arith.addf %322, %326 : vector<2x7x256xf32>
    %328 = vector.extract_strided_slice %1 {offsets = [0, 4, 0, 0], sizes = [2, 1, 7, 256], strides = [1, 1, 1, 1]} : vector<2x11x7x256xf32> to vector<2x1x7x256xf32>
    %329 = vector.shape_cast %328 : vector<2x1x7x256xf32> to vector<2x7x256xf32>
    %330 = vector.broadcast %28 : vector<1x1x256xf32> to vector<2x7x256xf32>
    %331 = arith.mulf %329, %330 : vector<2x7x256xf32>
    %332 = arith.addf %327, %331 : vector<2x7x256xf32>
    %333 = vector.extract_strided_slice %1 {offsets = [0, 5, 0, 0], sizes = [2, 1, 7, 256], strides = [1, 1, 1, 1]} : vector<2x11x7x256xf32> to vector<2x1x7x256xf32>
    %334 = vector.shape_cast %333 : vector<2x1x7x256xf32> to vector<2x7x256xf32>
    %335 = vector.broadcast %38 : vector<1x1x256xf32> to vector<2x7x256xf32>
    %336 = arith.mulf %334, %335 : vector<2x7x256xf32>
    %337 = arith.addf %332, %336 : vector<2x7x256xf32>
    %338 = vector.extract_strided_slice %1 {offsets = [0, 6, 0, 0], sizes = [2, 1, 7, 256], strides = [1, 1, 1, 1]} : vector<2x11x7x256xf32> to vector<2x1x7x256xf32>
    %339 = vector.shape_cast %338 : vector<2x1x7x256xf32> to vector<2x7x256xf32>
    %340 = vector.broadcast %48 : vector<1x1x256xf32> to vector<2x7x256xf32>
    %341 = arith.mulf %339, %340 : vector<2x7x256xf32>
    %342 = arith.addf %337, %341 : vector<2x7x256xf32>
    %343 = vector.extract_strided_slice %2 {offsets = [0, 2, 0, 0], sizes = [2, 1, 7, 256], strides = [1, 1, 1, 1]} : vector<2x11x7x256xf32> to vector<2x1x7x256xf32>
    %344 = vector.shape_cast %343 : vector<2x1x7x256xf32> to vector<2x7x256xf32>
    %345 = vector.broadcast %10 : vector<1x1x256xf32> to vector<2x7x256xf32>
    %346 = arith.mulf %344, %345 : vector<2x7x256xf32>
    %347 = arith.addf %342, %346 : vector<2x7x256xf32>
    %348 = vector.extract_strided_slice %2 {offsets = [0, 3, 0, 0], sizes = [2, 1, 7, 256], strides = [1, 1, 1, 1]} : vector<2x11x7x256xf32> to vector<2x1x7x256xf32>
    %349 = vector.shape_cast %348 : vector<2x1x7x256xf32> to vector<2x7x256xf32>
    %350 = vector.broadcast %20 : vector<1x1x256xf32> to vector<2x7x256xf32>
    %351 = arith.mulf %349, %350 : vector<2x7x256xf32>
    %352 = arith.addf %347, %351 : vector<2x7x256xf32>
    %353 = vector.extract_strided_slice %2 {offsets = [0, 4, 0, 0], sizes = [2, 1, 7, 256], strides = [1, 1, 1, 1]} : vector<2x11x7x256xf32> to vector<2x1x7x256xf32>
    %354 = vector.shape_cast %353 : vector<2x1x7x256xf32> to vector<2x7x256xf32>
    %355 = vector.broadcast %30 : vector<1x1x256xf32> to vector<2x7x256xf32>
    %356 = arith.mulf %354, %355 : vector<2x7x256xf32>
    %357 = arith.addf %352, %356 : vector<2x7x256xf32>
    %358 = vector.extract_strided_slice %2 {offsets = [0, 5, 0, 0], sizes = [2, 1, 7, 256], strides = [1, 1, 1, 1]} : vector<2x11x7x256xf32> to vector<2x1x7x256xf32>
    %359 = vector.shape_cast %358 : vector<2x1x7x256xf32> to vector<2x7x256xf32>
    %360 = vector.broadcast %40 : vector<1x1x256xf32> to vector<2x7x256xf32>
    %361 = arith.mulf %359, %360 : vector<2x7x256xf32>
    %362 = arith.addf %357, %361 : vector<2x7x256xf32>
    %363 = vector.extract_strided_slice %2 {offsets = [0, 6, 0, 0], sizes = [2, 1, 7, 256], strides = [1, 1, 1, 1]} : vector<2x11x7x256xf32> to vector<2x1x7x256xf32>
    %364 = vector.shape_cast %363 : vector<2x1x7x256xf32> to vector<2x7x256xf32>
    %365 = vector.broadcast %50 : vector<1x1x256xf32> to vector<2x7x256xf32>
    %366 = arith.mulf %364, %365 : vector<2x7x256xf32>
    %367 = arith.addf %362, %366 : vector<2x7x256xf32>
    %368 = vector.extract_strided_slice %3 {offsets = [0, 2, 0, 0], sizes = [2, 1, 7, 256], strides = [1, 1, 1, 1]} : vector<2x11x7x256xf32> to vector<2x1x7x256xf32>
    %369 = vector.shape_cast %368 : vector<2x1x7x256xf32> to vector<2x7x256xf32>
    %370 = vector.broadcast %12 : vector<1x1x256xf32> to vector<2x7x256xf32>
    %371 = arith.mulf %369, %370 : vector<2x7x256xf32>
    %372 = arith.addf %367, %371 : vector<2x7x256xf32>
    %373 = vector.extract_strided_slice %3 {offsets = [0, 3, 0, 0], sizes = [2, 1, 7, 256], strides = [1, 1, 1, 1]} : vector<2x11x7x256xf32> to vector<2x1x7x256xf32>
    %374 = vector.shape_cast %373 : vector<2x1x7x256xf32> to vector<2x7x256xf32>
    %375 = vector.broadcast %22 : vector<1x1x256xf32> to vector<2x7x256xf32>
    %376 = arith.mulf %374, %375 : vector<2x7x256xf32>
    %377 = arith.addf %372, %376 : vector<2x7x256xf32>
    %378 = vector.extract_strided_slice %3 {offsets = [0, 4, 0, 0], sizes = [2, 1, 7, 256], strides = [1, 1, 1, 1]} : vector<2x11x7x256xf32> to vector<2x1x7x256xf32>
    %379 = vector.shape_cast %378 : vector<2x1x7x256xf32> to vector<2x7x256xf32>
    %380 = vector.broadcast %32 : vector<1x1x256xf32> to vector<2x7x256xf32>
    %381 = arith.mulf %379, %380 : vector<2x7x256xf32>
    %382 = arith.addf %377, %381 : vector<2x7x256xf32>
    %383 = vector.extract_strided_slice %3 {offsets = [0, 5, 0, 0], sizes = [2, 1, 7, 256], strides = [1, 1, 1, 1]} : vector<2x11x7x256xf32> to vector<2x1x7x256xf32>
    %384 = vector.shape_cast %383 : vector<2x1x7x256xf32> to vector<2x7x256xf32>
    %385 = vector.broadcast %42 : vector<1x1x256xf32> to vector<2x7x256xf32>
    %386 = arith.mulf %384, %385 : vector<2x7x256xf32>
    %387 = arith.addf %382, %386 : vector<2x7x256xf32>
    %388 = vector.extract_strided_slice %3 {offsets = [0, 6, 0, 0], sizes = [2, 1, 7, 256], strides = [1, 1, 1, 1]} : vector<2x11x7x256xf32> to vector<2x1x7x256xf32>
    %389 = vector.shape_cast %388 : vector<2x1x7x256xf32> to vector<2x7x256xf32>
    %390 = vector.broadcast %52 : vector<1x1x256xf32> to vector<2x7x256xf32>
    %391 = arith.mulf %389, %390 : vector<2x7x256xf32>
    %392 = arith.addf %387, %391 : vector<2x7x256xf32>
    %393 = vector.extract_strided_slice %4 {offsets = [0, 2, 0, 0], sizes = [2, 1, 7, 256], strides = [1, 1, 1, 1]} : vector<2x11x7x256xf32> to vector<2x1x7x256xf32>
    %394 = vector.shape_cast %393 : vector<2x1x7x256xf32> to vector<2x7x256xf32>
    %395 = vector.broadcast %14 : vector<1x1x256xf32> to vector<2x7x256xf32>
    %396 = arith.mulf %394, %395 : vector<2x7x256xf32>
    %397 = arith.addf %392, %396 : vector<2x7x256xf32>
    %398 = vector.extract_strided_slice %4 {offsets = [0, 3, 0, 0], sizes = [2, 1, 7, 256], strides = [1, 1, 1, 1]} : vector<2x11x7x256xf32> to vector<2x1x7x256xf32>
    %399 = vector.shape_cast %398 : vector<2x1x7x256xf32> to vector<2x7x256xf32>
    %400 = vector.broadcast %24 : vector<1x1x256xf32> to vector<2x7x256xf32>
    %401 = arith.mulf %399, %400 : vector<2x7x256xf32>
    %402 = arith.addf %397, %401 : vector<2x7x256xf32>
    %403 = vector.extract_strided_slice %4 {offsets = [0, 4, 0, 0], sizes = [2, 1, 7, 256], strides = [1, 1, 1, 1]} : vector<2x11x7x256xf32> to vector<2x1x7x256xf32>
    %404 = vector.shape_cast %403 : vector<2x1x7x256xf32> to vector<2x7x256xf32>
    %405 = vector.broadcast %34 : vector<1x1x256xf32> to vector<2x7x256xf32>
    %406 = arith.mulf %404, %405 : vector<2x7x256xf32>
    %407 = arith.addf %402, %406 : vector<2x7x256xf32>
    %408 = vector.extract_strided_slice %4 {offsets = [0, 5, 0, 0], sizes = [2, 1, 7, 256], strides = [1, 1, 1, 1]} : vector<2x11x7x256xf32> to vector<2x1x7x256xf32>
    %409 = vector.shape_cast %408 : vector<2x1x7x256xf32> to vector<2x7x256xf32>
    %410 = vector.broadcast %44 : vector<1x1x256xf32> to vector<2x7x256xf32>
    %411 = arith.mulf %409, %410 : vector<2x7x256xf32>
    %412 = arith.addf %407, %411 : vector<2x7x256xf32>
    %413 = vector.extract_strided_slice %4 {offsets = [0, 6, 0, 0], sizes = [2, 1, 7, 256], strides = [1, 1, 1, 1]} : vector<2x11x7x256xf32> to vector<2x1x7x256xf32>
    %414 = vector.shape_cast %413 : vector<2x1x7x256xf32> to vector<2x7x256xf32>
    %415 = vector.broadcast %54 : vector<1x1x256xf32> to vector<2x7x256xf32>
    %416 = arith.mulf %414, %415 : vector<2x7x256xf32>
    %417 = arith.addf %412, %416 : vector<2x7x256xf32>
    %418 = vector.extract_strided_slice %5 {offsets = [0, 2, 0, 0], sizes = [2, 1, 7, 256], strides = [1, 1, 1, 1]} : vector<2x11x7x256xf32> to vector<2x1x7x256xf32>
    %419 = vector.shape_cast %418 : vector<2x1x7x256xf32> to vector<2x7x256xf32>
    %420 = vector.broadcast %16 : vector<1x1x256xf32> to vector<2x7x256xf32>
    %421 = arith.mulf %419, %420 : vector<2x7x256xf32>
    %422 = arith.addf %417, %421 : vector<2x7x256xf32>
    %423 = vector.extract_strided_slice %5 {offsets = [0, 3, 0, 0], sizes = [2, 1, 7, 256], strides = [1, 1, 1, 1]} : vector<2x11x7x256xf32> to vector<2x1x7x256xf32>
    %424 = vector.shape_cast %423 : vector<2x1x7x256xf32> to vector<2x7x256xf32>
    %425 = vector.broadcast %26 : vector<1x1x256xf32> to vector<2x7x256xf32>
    %426 = arith.mulf %424, %425 : vector<2x7x256xf32>
    %427 = arith.addf %422, %426 : vector<2x7x256xf32>
    %428 = vector.extract_strided_slice %5 {offsets = [0, 4, 0, 0], sizes = [2, 1, 7, 256], strides = [1, 1, 1, 1]} : vector<2x11x7x256xf32> to vector<2x1x7x256xf32>
    %429 = vector.shape_cast %428 : vector<2x1x7x256xf32> to vector<2x7x256xf32>
    %430 = vector.broadcast %36 : vector<1x1x256xf32> to vector<2x7x256xf32>
    %431 = arith.mulf %429, %430 : vector<2x7x256xf32>
    %432 = arith.addf %427, %431 : vector<2x7x256xf32>
    %433 = vector.extract_strided_slice %5 {offsets = [0, 5, 0, 0], sizes = [2, 1, 7, 256], strides = [1, 1, 1, 1]} : vector<2x11x7x256xf32> to vector<2x1x7x256xf32>
    %434 = vector.shape_cast %433 : vector<2x1x7x256xf32> to vector<2x7x256xf32>
    %435 = vector.broadcast %46 : vector<1x1x256xf32> to vector<2x7x256xf32>
    %436 = arith.mulf %434, %435 : vector<2x7x256xf32>
    %437 = arith.addf %432, %436 : vector<2x7x256xf32>
    %438 = vector.extract_strided_slice %5 {offsets = [0, 6, 0, 0], sizes = [2, 1, 7, 256], strides = [1, 1, 1, 1]} : vector<2x11x7x256xf32> to vector<2x1x7x256xf32>
    %439 = vector.shape_cast %438 : vector<2x1x7x256xf32> to vector<2x7x256xf32>
    %440 = vector.broadcast %56 : vector<1x1x256xf32> to vector<2x7x256xf32>
    %441 = arith.mulf %439, %440 : vector<2x7x256xf32>
    %442 = arith.addf %437, %441 : vector<2x7x256xf32>
    %c0_13 = arith.constant 0 : index
    %c2 = arith.constant 2 : index
    %c0_14 = arith.constant 0 : index
    %c0_15 = arith.constant 0 : index
    %443 = vector.load %arg6[%c0_13, %c2, %c0_14, %c0_15] : memref<2x7x7x256xf32, #tpu.memory_space<vmem>>, vector<2x1x7x256xf32>
    %444 = vector.shape_cast %443 : vector<2x1x7x256xf32> to vector<2x7x256xf32>
    %445 = vector.shape_cast %442 : vector<2x7x256xf32> to vector<2x1x7x256xf32>
    tpu.vector_store %arg6[%c0_13, %c2, %c0_14, %c0_15], %445 {strides = array<i32>} : memref<2x7x7x256xf32, #tpu.memory_space<vmem>>, vector<2x1x7x256xf32>,
    %446 = arith.addf %316, %442 : vector<2x7x256xf32>
    %447 = arith.mulf %442, %442 : vector<2x7x256xf32>
    %448 = arith.addf %318, %447 : vector<2x7x256xf32>
    %449 = vector.extract_strided_slice %1 {offsets = [0, 3, 0, 0], sizes = [2, 1, 7, 256], strides = [1, 1, 1, 1]} : vector<2x11x7x256xf32> to vector<2x1x7x256xf32>
    %450 = vector.shape_cast %449 : vector<2x1x7x256xf32> to vector<2x7x256xf32>
    %451 = vector.broadcast %8 : vector<1x1x256xf32> to vector<2x7x256xf32>
    %452 = arith.mulf %450, %451 : vector<2x7x256xf32>
    %453 = vector.extract_strided_slice %1 {offsets = [0, 4, 0, 0], sizes = [2, 1, 7, 256], strides = [1, 1, 1, 1]} : vector<2x11x7x256xf32> to vector<2x1x7x256xf32>
    %454 = vector.shape_cast %453 : vector<2x1x7x256xf32> to vector<2x7x256xf32>
    %455 = vector.broadcast %18 : vector<1x1x256xf32> to vector<2x7x256xf32>
    %456 = arith.mulf %454, %455 : vector<2x7x256xf32>
    %457 = arith.addf %452, %456 : vector<2x7x256xf32>
    %458 = vector.extract_strided_slice %1 {offsets = [0, 5, 0, 0], sizes = [2, 1, 7, 256], strides = [1, 1, 1, 1]} : vector<2x11x7x256xf32> to vector<2x1x7x256xf32>
    %459 = vector.shape_cast %458 : vector<2x1x7x256xf32> to vector<2x7x256xf32>
    %460 = vector.broadcast %28 : vector<1x1x256xf32> to vector<2x7x256xf32>
    %461 = arith.mulf %459, %460 : vector<2x7x256xf32>
    %462 = arith.addf %457, %461 : vector<2x7x256xf32>
    %463 = vector.extract_strided_slice %1 {offsets = [0, 6, 0, 0], sizes = [2, 1, 7, 256], strides = [1, 1, 1, 1]} : vector<2x11x7x256xf32> to vector<2x1x7x256xf32>
    %464 = vector.shape_cast %463 : vector<2x1x7x256xf32> to vector<2x7x256xf32>
    %465 = vector.broadcast %38 : vector<1x1x256xf32> to vector<2x7x256xf32>
    %466 = arith.mulf %464, %465 : vector<2x7x256xf32>
    %467 = arith.addf %462, %466 : vector<2x7x256xf32>
    %468 = vector.extract_strided_slice %1 {offsets = [0, 7, 0, 0], sizes = [2, 1, 7, 256], strides = [1, 1, 1, 1]} : vector<2x11x7x256xf32> to vector<2x1x7x256xf32>
    %469 = vector.shape_cast %468 : vector<2x1x7x256xf32> to vector<2x7x256xf32>
    %470 = vector.broadcast %48 : vector<1x1x256xf32> to vector<2x7x256xf32>
    %471 = arith.mulf %469, %470 : vector<2x7x256xf32>
    %472 = arith.addf %467, %471 : vector<2x7x256xf32>
    %473 = vector.extract_strided_slice %2 {offsets = [0, 3, 0, 0], sizes = [2, 1, 7, 256], strides = [1, 1, 1, 1]} : vector<2x11x7x256xf32> to vector<2x1x7x256xf32>
    %474 = vector.shape_cast %473 : vector<2x1x7x256xf32> to vector<2x7x256xf32>
    %475 = vector.broadcast %10 : vector<1x1x256xf32> to vector<2x7x256xf32>
    %476 = arith.mulf %474, %475 : vector<2x7x256xf32>
    %477 = arith.addf %472, %476 : vector<2x7x256xf32>
    %478 = vector.extract_strided_slice %2 {offsets = [0, 4, 0, 0], sizes = [2, 1, 7, 256], strides = [1, 1, 1, 1]} : vector<2x11x7x256xf32> to vector<2x1x7x256xf32>
    %479 = vector.shape_cast %478 : vector<2x1x7x256xf32> to vector<2x7x256xf32>
    %480 = vector.broadcast %20 : vector<1x1x256xf32> to vector<2x7x256xf32>
    %481 = arith.mulf %479, %480 : vector<2x7x256xf32>
    %482 = arith.addf %477, %481 : vector<2x7x256xf32>
    %483 = vector.extract_strided_slice %2 {offsets = [0, 5, 0, 0], sizes = [2, 1, 7, 256], strides = [1, 1, 1, 1]} : vector<2x11x7x256xf32> to vector<2x1x7x256xf32>
    %484 = vector.shape_cast %483 : vector<2x1x7x256xf32> to vector<2x7x256xf32>
    %485 = vector.broadcast %30 : vector<1x1x256xf32> to vector<2x7x256xf32>
    %486 = arith.mulf %484, %485 : vector<2x7x256xf32>
    %487 = arith.addf %482, %486 : vector<2x7x256xf32>
    %488 = vector.extract_strided_slice %2 {offsets = [0, 6, 0, 0], sizes = [2, 1, 7, 256], strides = [1, 1, 1, 1]} : vector<2x11x7x256xf32> to vector<2x1x7x256xf32>
    %489 = vector.shape_cast %488 : vector<2x1x7x256xf32> to vector<2x7x256xf32>
    %490 = vector.broadcast %40 : vector<1x1x256xf32> to vector<2x7x256xf32>
    %491 = arith.mulf %489, %490 : vector<2x7x256xf32>
    %492 = arith.addf %487, %491 : vector<2x7x256xf32>
    %493 = vector.extract_strided_slice %2 {offsets = [0, 7, 0, 0], sizes = [2, 1, 7, 256], strides = [1, 1, 1, 1]} : vector<2x11x7x256xf32> to vector<2x1x7x256xf32>
    %494 = vector.shape_cast %493 : vector<2x1x7x256xf32> to vector<2x7x256xf32>
    %495 = vector.broadcast %50 : vector<1x1x256xf32> to vector<2x7x256xf32>
    %496 = arith.mulf %494, %495 : vector<2x7x256xf32>
    %497 = arith.addf %492, %496 : vector<2x7x256xf32>
    %498 = vector.extract_strided_slice %3 {offsets = [0, 3, 0, 0], sizes = [2, 1, 7, 256], strides = [1, 1, 1, 1]} : vector<2x11x7x256xf32> to vector<2x1x7x256xf32>
    %499 = vector.shape_cast %498 : vector<2x1x7x256xf32> to vector<2x7x256xf32>
    %500 = vector.broadcast %12 : vector<1x1x256xf32> to vector<2x7x256xf32>
    %501 = arith.mulf %499, %500 : vector<2x7x256xf32>
    %502 = arith.addf %497, %501 : vector<2x7x256xf32>
    %503 = vector.extract_strided_slice %3 {offsets = [0, 4, 0, 0], sizes = [2, 1, 7, 256], strides = [1, 1, 1, 1]} : vector<2x11x7x256xf32> to vector<2x1x7x256xf32>
    %504 = vector.shape_cast %503 : vector<2x1x7x256xf32> to vector<2x7x256xf32>
    %505 = vector.broadcast %22 : vector<1x1x256xf32> to vector<2x7x256xf32>
    %506 = arith.mulf %504, %505 : vector<2x7x256xf32>
    %507 = arith.addf %502, %506 : vector<2x7x256xf32>
    %508 = vector.extract_strided_slice %3 {offsets = [0, 5, 0, 0], sizes = [2, 1, 7, 256], strides = [1, 1, 1, 1]} : vector<2x11x7x256xf32> to vector<2x1x7x256xf32>
    %509 = vector.shape_cast %508 : vector<2x1x7x256xf32> to vector<2x7x256xf32>
    %510 = vector.broadcast %32 : vector<1x1x256xf32> to vector<2x7x256xf32>
    %511 = arith.mulf %509, %510 : vector<2x7x256xf32>
    %512 = arith.addf %507, %511 : vector<2x7x256xf32>
    %513 = vector.extract_strided_slice %3 {offsets = [0, 6, 0, 0], sizes = [2, 1, 7, 256], strides = [1, 1, 1, 1]} : vector<2x11x7x256xf32> to vector<2x1x7x256xf32>
    %514 = vector.shape_cast %513 : vector<2x1x7x256xf32> to vector<2x7x256xf32>
    %515 = vector.broadcast %42 : vector<1x1x256xf32> to vector<2x7x256xf32>
    %516 = arith.mulf %514, %515 : vector<2x7x256xf32>
    %517 = arith.addf %512, %516 : vector<2x7x256xf32>
    %518 = vector.extract_strided_slice %3 {offsets = [0, 7, 0, 0], sizes = [2, 1, 7, 256], strides = [1, 1, 1, 1]} : vector<2x11x7x256xf32> to vector<2x1x7x256xf32>
    %519 = vector.shape_cast %518 : vector<2x1x7x256xf32> to vector<2x7x256xf32>
    %520 = vector.broadcast %52 : vector<1x1x256xf32> to vector<2x7x256xf32>
    %521 = arith.mulf %519, %520 : vector<2x7x256xf32>
    %522 = arith.addf %517, %521 : vector<2x7x256xf32>
    %523 = vector.extract_strided_slice %4 {offsets = [0, 3, 0, 0], sizes = [2, 1, 7, 256], strides = [1, 1, 1, 1]} : vector<2x11x7x256xf32> to vector<2x1x7x256xf32>
    %524 = vector.shape_cast %523 : vector<2x1x7x256xf32> to vector<2x7x256xf32>
    %525 = vector.broadcast %14 : vector<1x1x256xf32> to vector<2x7x256xf32>
    %526 = arith.mulf %524, %525 : vector<2x7x256xf32>
    %527 = arith.addf %522, %526 : vector<2x7x256xf32>
    %528 = vector.extract_strided_slice %4 {offsets = [0, 4, 0, 0], sizes = [2, 1, 7, 256], strides = [1, 1, 1, 1]} : vector<2x11x7x256xf32> to vector<2x1x7x256xf32>
    %529 = vector.shape_cast %528 : vector<2x1x7x256xf32> to vector<2x7x256xf32>
    %530 = vector.broadcast %24 : vector<1x1x256xf32> to vector<2x7x256xf32>
    %531 = arith.mulf %529, %530 : vector<2x7x256xf32>
    %532 = arith.addf %527, %531 : vector<2x7x256xf32>
    %533 = vector.extract_strided_slice %4 {offsets = [0, 5, 0, 0], sizes = [2, 1, 7, 256], strides = [1, 1, 1, 1]} : vector<2x11x7x256xf32> to vector<2x1x7x256xf32>
    %534 = vector.shape_cast %533 : vector<2x1x7x256xf32> to vector<2x7x256xf32>
    %535 = vector.broadcast %34 : vector<1x1x256xf32> to vector<2x7x256xf32>
    %536 = arith.mulf %534, %535 : vector<2x7x256xf32>
    %537 = arith.addf %532, %536 : vector<2x7x256xf32>
    %538 = vector.extract_strided_slice %4 {offsets = [0, 6, 0, 0], sizes = [2, 1, 7, 256], strides = [1, 1, 1, 1]} : vector<2x11x7x256xf32> to vector<2x1x7x256xf32>
    %539 = vector.shape_cast %538 : vector<2x1x7x256xf32> to vector<2x7x256xf32>
    %540 = vector.broadcast %44 : vector<1x1x256xf32> to vector<2x7x256xf32>
    %541 = arith.mulf %539, %540 : vector<2x7x256xf32>
    %542 = arith.addf %537, %541 : vector<2x7x256xf32>
    %543 = vector.extract_strided_slice %4 {offsets = [0, 7, 0, 0], sizes = [2, 1, 7, 256], strides = [1, 1, 1, 1]} : vector<2x11x7x256xf32> to vector<2x1x7x256xf32>
    %544 = vector.shape_cast %543 : vector<2x1x7x256xf32> to vector<2x7x256xf32>
    %545 = vector.broadcast %54 : vector<1x1x256xf32> to vector<2x7x256xf32>
    %546 = arith.mulf %544, %545 : vector<2x7x256xf32>
    %547 = arith.addf %542, %546 : vector<2x7x256xf32>
    %548 = vector.extract_strided_slice %5 {offsets = [0, 3, 0, 0], sizes = [2, 1, 7, 256], strides = [1, 1, 1, 1]} : vector<2x11x7x256xf32> to vector<2x1x7x256xf32>
    %549 = vector.shape_cast %548 : vector<2x1x7x256xf32> to vector<2x7x256xf32>
    %550 = vector.broadcast %16 : vector<1x1x256xf32> to vector<2x7x256xf32>
    %551 = arith.mulf %549, %550 : vector<2x7x256xf32>
    %552 = arith.addf %547, %551 : vector<2x7x256xf32>
    %553 = vector.extract_strided_slice %5 {offsets = [0, 4, 0, 0], sizes = [2, 1, 7, 256], strides = [1, 1, 1, 1]} : vector<2x11x7x256xf32> to vector<2x1x7x256xf32>
    %554 = vector.shape_cast %553 : vector<2x1x7x256xf32> to vector<2x7x256xf32>
    %555 = vector.broadcast %26 : vector<1x1x256xf32> to vector<2x7x256xf32>
    %556 = arith.mulf %554, %555 : vector<2x7x256xf32>
    %557 = arith.addf %552, %556 : vector<2x7x256xf32>
    %558 = vector.extract_strided_slice %5 {offsets = [0, 5, 0, 0], sizes = [2, 1, 7, 256], strides = [1, 1, 1, 1]} : vector<2x11x7x256xf32> to vector<2x1x7x256xf32>
    %559 = vector.shape_cast %558 : vector<2x1x7x256xf32> to vector<2x7x256xf32>
    %560 = vector.broadcast %36 : vector<1x1x256xf32> to vector<2x7x256xf32>
    %561 = arith.mulf %559, %560 : vector<2x7x256xf32>
    %562 = arith.addf %557, %561 : vector<2x7x256xf32>
    %563 = vector.extract_strided_slice %5 {offsets = [0, 6, 0, 0], sizes = [2, 1, 7, 256], strides = [1, 1, 1, 1]} : vector<2x11x7x256xf32> to vector<2x1x7x256xf32>
    %564 = vector.shape_cast %563 : vector<2x1x7x256xf32> to vector<2x7x256xf32>
    %565 = vector.broadcast %46 : vector<1x1x256xf32> to vector<2x7x256xf32>
    %566 = arith.mulf %564, %565 : vector<2x7x256xf32>
    %567 = arith.addf %562, %566 : vector<2x7x256xf32>
    %568 = vector.extract_strided_slice %5 {offsets = [0, 7, 0, 0], sizes = [2, 1, 7, 256], strides = [1, 1, 1, 1]} : vector<2x11x7x256xf32> to vector<2x1x7x256xf32>
    %569 = vector.shape_cast %568 : vector<2x1x7x256xf32> to vector<2x7x256xf32>
    %570 = vector.broadcast %56 : vector<1x1x256xf32> to vector<2x7x256xf32>
    %571 = arith.mulf %569, %570 : vector<2x7x256xf32>
    %572 = arith.addf %567, %571 : vector<2x7x256xf32>
    %c0_16 = arith.constant 0 : index
    %c3 = arith.constant 3 : index
    %c0_17 = arith.constant 0 : index
    %c0_18 = arith.constant 0 : index
    %573 = vector.load %arg6[%c0_16, %c3, %c0_17, %c0_18] : memref<2x7x7x256xf32, #tpu.memory_space<vmem>>, vector<2x1x7x256xf32>
    %574 = vector.shape_cast %573 : vector<2x1x7x256xf32> to vector<2x7x256xf32>
    %575 = vector.shape_cast %572 : vector<2x7x256xf32> to vector<2x1x7x256xf32>
    tpu.vector_store %arg6[%c0_16, %c3, %c0_17, %c0_18], %575 {strides = array<i32>} : memref<2x7x7x256xf32, #tpu.memory_space<vmem>>, vector<2x1x7x256xf32>,
    %576 = arith.addf %446, %572 : vector<2x7x256xf32>
    %577 = arith.mulf %572, %572 : vector<2x7x256xf32>
    %578 = arith.addf %448, %577 : vector<2x7x256xf32>
    %579 = vector.extract_strided_slice %1 {offsets = [0, 4, 0, 0], sizes = [2, 1, 7, 256], strides = [1, 1, 1, 1]} : vector<2x11x7x256xf32> to vector<2x1x7x256xf32>
    %580 = vector.shape_cast %579 : vector<2x1x7x256xf32> to vector<2x7x256xf32>
    %581 = vector.broadcast %8 : vector<1x1x256xf32> to vector<2x7x256xf32>
    %582 = arith.mulf %580, %581 : vector<2x7x256xf32>
    %583 = vector.extract_strided_slice %1 {offsets = [0, 5, 0, 0], sizes = [2, 1, 7, 256], strides = [1, 1, 1, 1]} : vector<2x11x7x256xf32> to vector<2x1x7x256xf32>
    %584 = vector.shape_cast %583 : vector<2x1x7x256xf32> to vector<2x7x256xf32>
    %585 = vector.broadcast %18 : vector<1x1x256xf32> to vector<2x7x256xf32>
    %586 = arith.mulf %584, %585 : vector<2x7x256xf32>
    %587 = arith.addf %582, %586 : vector<2x7x256xf32>
    %588 = vector.extract_strided_slice %1 {offsets = [0, 6, 0, 0], sizes = [2, 1, 7, 256], strides = [1, 1, 1, 1]} : vector<2x11x7x256xf32> to vector<2x1x7x256xf32>
    %589 = vector.shape_cast %588 : vector<2x1x7x256xf32> to vector<2x7x256xf32>
    %590 = vector.broadcast %28 : vector<1x1x256xf32> to vector<2x7x256xf32>
    %591 = arith.mulf %589, %590 : vector<2x7x256xf32>
    %592 = arith.addf %587, %591 : vector<2x7x256xf32>
    %593 = vector.extract_strided_slice %1 {offsets = [0, 7, 0, 0], sizes = [2, 1, 7, 256], strides = [1, 1, 1, 1]} : vector<2x11x7x256xf32> to vector<2x1x7x256xf32>
    %594 = vector.shape_cast %593 : vector<2x1x7x256xf32> to vector<2x7x256xf32>
    %595 = vector.broadcast %38 : vector<1x1x256xf32> to vector<2x7x256xf32>
    %596 = arith.mulf %594, %595 : vector<2x7x256xf32>
    %597 = arith.addf %592, %596 : vector<2x7x256xf32>
    %598 = vector.extract_strided_slice %1 {offsets = [0, 8, 0, 0], sizes = [2, 1, 7, 256], strides = [1, 1, 1, 1]} : vector<2x11x7x256xf32> to vector<2x1x7x256xf32>
    %599 = vector.shape_cast %598 : vector<2x1x7x256xf32> to vector<2x7x256xf32>
    %600 = vector.broadcast %48 : vector<1x1x256xf32> to vector<2x7x256xf32>
    %601 = arith.mulf %599, %600 : vector<2x7x256xf32>
    %602 = arith.addf %597, %601 : vector<2x7x256xf32>
    %603 = vector.extract_strided_slice %2 {offsets = [0, 4, 0, 0], sizes = [2, 1, 7, 256], strides = [1, 1, 1, 1]} : vector<2x11x7x256xf32> to vector<2x1x7x256xf32>
    %604 = vector.shape_cast %603 : vector<2x1x7x256xf32> to vector<2x7x256xf32>
    %605 = vector.broadcast %10 : vector<1x1x256xf32> to vector<2x7x256xf32>
    %606 = arith.mulf %604, %605 : vector<2x7x256xf32>
    %607 = arith.addf %602, %606 : vector<2x7x256xf32>
    %608 = vector.extract_strided_slice %2 {offsets = [0, 5, 0, 0], sizes = [2, 1, 7, 256], strides = [1, 1, 1, 1]} : vector<2x11x7x256xf32> to vector<2x1x7x256xf32>
    %609 = vector.shape_cast %608 : vector<2x1x7x256xf32> to vector<2x7x256xf32>
    %610 = vector.broadcast %20 : vector<1x1x256xf32> to vector<2x7x256xf32>
    %611 = arith.mulf %609, %610 : vector<2x7x256xf32>
    %612 = arith.addf %607, %611 : vector<2x7x256xf32>
    %613 = vector.extract_strided_slice %2 {offsets = [0, 6, 0, 0], sizes = [2, 1, 7, 256], strides = [1, 1, 1, 1]} : vector<2x11x7x256xf32> to vector<2x1x7x256xf32>
    %614 = vector.shape_cast %613 : vector<2x1x7x256xf32> to vector<2x7x256xf32>
    %615 = vector.broadcast %30 : vector<1x1x256xf32> to vector<2x7x256xf32>
    %616 = arith.mulf %614, %615 : vector<2x7x256xf32>
    %617 = arith.addf %612, %616 : vector<2x7x256xf32>
    %618 = vector.extract_strided_slice %2 {offsets = [0, 7, 0, 0], sizes = [2, 1, 7, 256], strides = [1, 1, 1, 1]} : vector<2x11x7x256xf32> to vector<2x1x7x256xf32>
    %619 = vector.shape_cast %618 : vector<2x1x7x256xf32> to vector<2x7x256xf32>
    %620 = vector.broadcast %40 : vector<1x1x256xf32> to vector<2x7x256xf32>
    %621 = arith.mulf %619, %620 : vector<2x7x256xf32>
    %622 = arith.addf %617, %621 : vector<2x7x256xf32>
    %623 = vector.extract_strided_slice %2 {offsets = [0, 8, 0, 0], sizes = [2, 1, 7, 256], strides = [1, 1, 1, 1]} : vector<2x11x7x256xf32> to vector<2x1x7x256xf32>
    %624 = vector.shape_cast %623 : vector<2x1x7x256xf32> to vector<2x7x256xf32>
    %625 = vector.broadcast %50 : vector<1x1x256xf32> to vector<2x7x256xf32>
    %626 = arith.mulf %624, %625 : vector<2x7x256xf32>
    %627 = arith.addf %622, %626 : vector<2x7x256xf32>
    %628 = vector.extract_strided_slice %3 {offsets = [0, 4, 0, 0], sizes = [2, 1, 7, 256], strides = [1, 1, 1, 1]} : vector<2x11x7x256xf32> to vector<2x1x7x256xf32>
    %629 = vector.shape_cast %628 : vector<2x1x7x256xf32> to vector<2x7x256xf32>
    %630 = vector.broadcast %12 : vector<1x1x256xf32> to vector<2x7x256xf32>
    %631 = arith.mulf %629, %630 : vector<2x7x256xf32>
    %632 = arith.addf %627, %631 : vector<2x7x256xf32>
    %633 = vector.extract_strided_slice %3 {offsets = [0, 5, 0, 0], sizes = [2, 1, 7, 256], strides = [1, 1, 1, 1]} : vector<2x11x7x256xf32> to vector<2x1x7x256xf32>
    %634 = vector.shape_cast %633 : vector<2x1x7x256xf32> to vector<2x7x256xf32>
    %635 = vector.broadcast %22 : vector<1x1x256xf32> to vector<2x7x256xf32>
    %636 = arith.mulf %634, %635 : vector<2x7x256xf32>
    %637 = arith.addf %632, %636 : vector<2x7x256xf32>
    %638 = vector.extract_strided_slice %3 {offsets = [0, 6, 0, 0], sizes = [2, 1, 7, 256], strides = [1, 1, 1, 1]} : vector<2x11x7x256xf32> to vector<2x1x7x256xf32>
    %639 = vector.shape_cast %638 : vector<2x1x7x256xf32> to vector<2x7x256xf32>
    %640 = vector.broadcast %32 : vector<1x1x256xf32> to vector<2x7x256xf32>
    %641 = arith.mulf %639, %640 : vector<2x7x256xf32>
    %642 = arith.addf %637, %641 : vector<2x7x256xf32>
    %643 = vector.extract_strided_slice %3 {offsets = [0, 7, 0, 0], sizes = [2, 1, 7, 256], strides = [1, 1, 1, 1]} : vector<2x11x7x256xf32> to vector<2x1x7x256xf32>
    %644 = vector.shape_cast %643 : vector<2x1x7x256xf32> to vector<2x7x256xf32>
    %645 = vector.broadcast %42 : vector<1x1x256xf32> to vector<2x7x256xf32>
    %646 = arith.mulf %644, %645 : vector<2x7x256xf32>
    %647 = arith.addf %642, %646 : vector<2x7x256xf32>
    %648 = vector.extract_strided_slice %3 {offsets = [0, 8, 0, 0], sizes = [2, 1, 7, 256], strides = [1, 1, 1, 1]} : vector<2x11x7x256xf32> to vector<2x1x7x256xf32>
    %649 = vector.shape_cast %648 : vector<2x1x7x256xf32> to vector<2x7x256xf32>
    %650 = vector.broadcast %52 : vector<1x1x256xf32> to vector<2x7x256xf32>
    %651 = arith.mulf %649, %650 : vector<2x7x256xf32>
    %652 = arith.addf %647, %651 : vector<2x7x256xf32>
    %653 = vector.extract_strided_slice %4 {offsets = [0, 4, 0, 0], sizes = [2, 1, 7, 256], strides = [1, 1, 1, 1]} : vector<2x11x7x256xf32> to vector<2x1x7x256xf32>
    %654 = vector.shape_cast %653 : vector<2x1x7x256xf32> to vector<2x7x256xf32>
    %655 = vector.broadcast %14 : vector<1x1x256xf32> to vector<2x7x256xf32>
    %656 = arith.mulf %654, %655 : vector<2x7x256xf32>
    %657 = arith.addf %652, %656 : vector<2x7x256xf32>
    %658 = vector.extract_strided_slice %4 {offsets = [0, 5, 0, 0], sizes = [2, 1, 7, 256], strides = [1, 1, 1, 1]} : vector<2x11x7x256xf32> to vector<2x1x7x256xf32>
    %659 = vector.shape_cast %658 : vector<2x1x7x256xf32> to vector<2x7x256xf32>
    %660 = vector.broadcast %24 : vector<1x1x256xf32> to vector<2x7x256xf32>
    %661 = arith.mulf %659, %660 : vector<2x7x256xf32>
    %662 = arith.addf %657, %661 : vector<2x7x256xf32>
    %663 = vector.extract_strided_slice %4 {offsets = [0, 6, 0, 0], sizes = [2, 1, 7, 256], strides = [1, 1, 1, 1]} : vector<2x11x7x256xf32> to vector<2x1x7x256xf32>
    %664 = vector.shape_cast %663 : vector<2x1x7x256xf32> to vector<2x7x256xf32>
    %665 = vector.broadcast %34 : vector<1x1x256xf32> to vector<2x7x256xf32>
    %666 = arith.mulf %664, %665 : vector<2x7x256xf32>
    %667 = arith.addf %662, %666 : vector<2x7x256xf32>
    %668 = vector.extract_strided_slice %4 {offsets = [0, 7, 0, 0], sizes = [2, 1, 7, 256], strides = [1, 1, 1, 1]} : vector<2x11x7x256xf32> to vector<2x1x7x256xf32>
    %669 = vector.shape_cast %668 : vector<2x1x7x256xf32> to vector<2x7x256xf32>
    %670 = vector.broadcast %44 : vector<1x1x256xf32> to vector<2x7x256xf32>
    %671 = arith.mulf %669, %670 : vector<2x7x256xf32>
    %672 = arith.addf %667, %671 : vector<2x7x256xf32>
    %673 = vector.extract_strided_slice %4 {offsets = [0, 8, 0, 0], sizes = [2, 1, 7, 256], strides = [1, 1, 1, 1]} : vector<2x11x7x256xf32> to vector<2x1x7x256xf32>
    %674 = vector.shape_cast %673 : vector<2x1x7x256xf32> to vector<2x7x256xf32>
    %675 = vector.broadcast %54 : vector<1x1x256xf32> to vector<2x7x256xf32>
    %676 = arith.mulf %674, %675 : vector<2x7x256xf32>
    %677 = arith.addf %672, %676 : vector<2x7x256xf32>
    %678 = vector.extract_strided_slice %5 {offsets = [0, 4, 0, 0], sizes = [2, 1, 7, 256], strides = [1, 1, 1, 1]} : vector<2x11x7x256xf32> to vector<2x1x7x256xf32>
    %679 = vector.shape_cast %678 : vector<2x1x7x256xf32> to vector<2x7x256xf32>
    %680 = vector.broadcast %16 : vector<1x1x256xf32> to vector<2x7x256xf32>
    %681 = arith.mulf %679, %680 : vector<2x7x256xf32>
    %682 = arith.addf %677, %681 : vector<2x7x256xf32>
    %683 = vector.extract_strided_slice %5 {offsets = [0, 5, 0, 0], sizes = [2, 1, 7, 256], strides = [1, 1, 1, 1]} : vector<2x11x7x256xf32> to vector<2x1x7x256xf32>
    %684 = vector.shape_cast %683 : vector<2x1x7x256xf32> to vector<2x7x256xf32>
    %685 = vector.broadcast %26 : vector<1x1x256xf32> to vector<2x7x256xf32>
    %686 = arith.mulf %684, %685 : vector<2x7x256xf32>
    %687 = arith.addf %682, %686 : vector<2x7x256xf32>
    %688 = vector.extract_strided_slice %5 {offsets = [0, 6, 0, 0], sizes = [2, 1, 7, 256], strides = [1, 1, 1, 1]} : vector<2x11x7x256xf32> to vector<2x1x7x256xf32>
    %689 = vector.shape_cast %688 : vector<2x1x7x256xf32> to vector<2x7x256xf32>
    %690 = vector.broadcast %36 : vector<1x1x256xf32> to vector<2x7x256xf32>
    %691 = arith.mulf %689, %690 : vector<2x7x256xf32>
    %692 = arith.addf %687, %691 : vector<2x7x256xf32>
    %693 = vector.extract_strided_slice %5 {offsets = [0, 7, 0, 0], sizes = [2, 1, 7, 256], strides = [1, 1, 1, 1]} : vector<2x11x7x256xf32> to vector<2x1x7x256xf32>
    %694 = vector.shape_cast %693 : vector<2x1x7x256xf32> to vector<2x7x256xf32>
    %695 = vector.broadcast %46 : vector<1x1x256xf32> to vector<2x7x256xf32>
    %696 = arith.mulf %694, %695 : vector<2x7x256xf32>
    %697 = arith.addf %692, %696 : vector<2x7x256xf32>
    %698 = vector.extract_strided_slice %5 {offsets = [0, 8, 0, 0], sizes = [2, 1, 7, 256], strides = [1, 1, 1, 1]} : vector<2x11x7x256xf32> to vector<2x1x7x256xf32>
    %699 = vector.shape_cast %698 : vector<2x1x7x256xf32> to vector<2x7x256xf32>
    %700 = vector.broadcast %56 : vector<1x1x256xf32> to vector<2x7x256xf32>
    %701 = arith.mulf %699, %700 : vector<2x7x256xf32>
    %702 = arith.addf %697, %701 : vector<2x7x256xf32>
    %c0_19 = arith.constant 0 : index
    %c4 = arith.constant 4 : index
    %c0_20 = arith.constant 0 : index
    %c0_21 = arith.constant 0 : index
    %703 = vector.load %arg6[%c0_19, %c4, %c0_20, %c0_21] : memref<2x7x7x256xf32, #tpu.memory_space<vmem>>, vector<2x1x7x256xf32>
    %704 = vector.shape_cast %703 : vector<2x1x7x256xf32> to vector<2x7x256xf32>
    %705 = vector.shape_cast %702 : vector<2x7x256xf32> to vector<2x1x7x256xf32>
    tpu.vector_store %arg6[%c0_19, %c4, %c0_20, %c0_21], %705 {strides = array<i32>} : memref<2x7x7x256xf32, #tpu.memory_space<vmem>>, vector<2x1x7x256xf32>,
    %706 = arith.addf %576, %702 : vector<2x7x256xf32>
    %707 = arith.mulf %702, %702 : vector<2x7x256xf32>
    %708 = arith.addf %578, %707 : vector<2x7x256xf32>
    %709 = vector.extract_strided_slice %1 {offsets = [0, 5, 0, 0], sizes = [2, 1, 7, 256], strides = [1, 1, 1, 1]} : vector<2x11x7x256xf32> to vector<2x1x7x256xf32>
    %710 = vector.shape_cast %709 : vector<2x1x7x256xf32> to vector<2x7x256xf32>
    %711 = vector.broadcast %8 : vector<1x1x256xf32> to vector<2x7x256xf32>
    %712 = arith.mulf %710, %711 : vector<2x7x256xf32>
    %713 = vector.extract_strided_slice %1 {offsets = [0, 6, 0, 0], sizes = [2, 1, 7, 256], strides = [1, 1, 1, 1]} : vector<2x11x7x256xf32> to vector<2x1x7x256xf32>
    %714 = vector.shape_cast %713 : vector<2x1x7x256xf32> to vector<2x7x256xf32>
    %715 = vector.broadcast %18 : vector<1x1x256xf32> to vector<2x7x256xf32>
    %716 = arith.mulf %714, %715 : vector<2x7x256xf32>
    %717 = arith.addf %712, %716 : vector<2x7x256xf32>
    %718 = vector.extract_strided_slice %1 {offsets = [0, 7, 0, 0], sizes = [2, 1, 7, 256], strides = [1, 1, 1, 1]} : vector<2x11x7x256xf32> to vector<2x1x7x256xf32>
    %719 = vector.shape_cast %718 : vector<2x1x7x256xf32> to vector<2x7x256xf32>
    %720 = vector.broadcast %28 : vector<1x1x256xf32> to vector<2x7x256xf32>
    %721 = arith.mulf %719, %720 : vector<2x7x256xf32>
    %722 = arith.addf %717, %721 : vector<2x7x256xf32>
    %723 = vector.extract_strided_slice %1 {offsets = [0, 8, 0, 0], sizes = [2, 1, 7, 256], strides = [1, 1, 1, 1]} : vector<2x11x7x256xf32> to vector<2x1x7x256xf32>
    %724 = vector.shape_cast %723 : vector<2x1x7x256xf32> to vector<2x7x256xf32>
    %725 = vector.broadcast %38 : vector<1x1x256xf32> to vector<2x7x256xf32>
    %726 = arith.mulf %724, %725 : vector<2x7x256xf32>
    %727 = arith.addf %722, %726 : vector<2x7x256xf32>
    %728 = vector.extract_strided_slice %1 {offsets = [0, 9, 0, 0], sizes = [2, 1, 7, 256], strides = [1, 1, 1, 1]} : vector<2x11x7x256xf32> to vector<2x1x7x256xf32>
    %729 = vector.shape_cast %728 : vector<2x1x7x256xf32> to vector<2x7x256xf32>
    %730 = vector.broadcast %48 : vector<1x1x256xf32> to vector<2x7x256xf32>
    %731 = arith.mulf %729, %730 : vector<2x7x256xf32>
    %732 = arith.addf %727, %731 : vector<2x7x256xf32>
    %733 = vector.extract_strided_slice %2 {offsets = [0, 5, 0, 0], sizes = [2, 1, 7, 256], strides = [1, 1, 1, 1]} : vector<2x11x7x256xf32> to vector<2x1x7x256xf32>
    %734 = vector.shape_cast %733 : vector<2x1x7x256xf32> to vector<2x7x256xf32>
    %735 = vector.broadcast %10 : vector<1x1x256xf32> to vector<2x7x256xf32>
    %736 = arith.mulf %734, %735 : vector<2x7x256xf32>
    %737 = arith.addf %732, %736 : vector<2x7x256xf32>
    %738 = vector.extract_strided_slice %2 {offsets = [0, 6, 0, 0], sizes = [2, 1, 7, 256], strides = [1, 1, 1, 1]} : vector<2x11x7x256xf32> to vector<2x1x7x256xf32>
    %739 = vector.shape_cast %738 : vector<2x1x7x256xf32> to vector<2x7x256xf32>
    %740 = vector.broadcast %20 : vector<1x1x256xf32> to vector<2x7x256xf32>
    %741 = arith.mulf %739, %740 : vector<2x7x256xf32>
    %742 = arith.addf %737, %741 : vector<2x7x256xf32>
    %743 = vector.extract_strided_slice %2 {offsets = [0, 7, 0, 0], sizes = [2, 1, 7, 256], strides = [1, 1, 1, 1]} : vector<2x11x7x256xf32> to vector<2x1x7x256xf32>
    %744 = vector.shape_cast %743 : vector<2x1x7x256xf32> to vector<2x7x256xf32>
    %745 = vector.broadcast %30 : vector<1x1x256xf32> to vector<2x7x256xf32>
    %746 = arith.mulf %744, %745 : vector<2x7x256xf32>
    %747 = arith.addf %742, %746 : vector<2x7x256xf32>
    %748 = vector.extract_strided_slice %2 {offsets = [0, 8, 0, 0], sizes = [2, 1, 7, 256], strides = [1, 1, 1, 1]} : vector<2x11x7x256xf32> to vector<2x1x7x256xf32>
    %749 = vector.shape_cast %748 : vector<2x1x7x256xf32> to vector<2x7x256xf32>
    %750 = vector.broadcast %40 : vector<1x1x256xf32> to vector<2x7x256xf32>
    %751 = arith.mulf %749, %750 : vector<2x7x256xf32>
    %752 = arith.addf %747, %751 : vector<2x7x256xf32>
    %753 = vector.extract_strided_slice %2 {offsets = [0, 9, 0, 0], sizes = [2, 1, 7, 256], strides = [1, 1, 1, 1]} : vector<2x11x7x256xf32> to vector<2x1x7x256xf32>
    %754 = vector.shape_cast %753 : vector<2x1x7x256xf32> to vector<2x7x256xf32>
    %755 = vector.broadcast %50 : vector<1x1x256xf32> to vector<2x7x256xf32>
    %756 = arith.mulf %754, %755 : vector<2x7x256xf32>
    %757 = arith.addf %752, %756 : vector<2x7x256xf32>
    %758 = vector.extract_strided_slice %3 {offsets = [0, 5, 0, 0], sizes = [2, 1, 7, 256], strides = [1, 1, 1, 1]} : vector<2x11x7x256xf32> to vector<2x1x7x256xf32>
    %759 = vector.shape_cast %758 : vector<2x1x7x256xf32> to vector<2x7x256xf32>
    %760 = vector.broadcast %12 : vector<1x1x256xf32> to vector<2x7x256xf32>
    %761 = arith.mulf %759, %760 : vector<2x7x256xf32>
    %762 = arith.addf %757, %761 : vector<2x7x256xf32>
    %763 = vector.extract_strided_slice %3 {offsets = [0, 6, 0, 0], sizes = [2, 1, 7, 256], strides = [1, 1, 1, 1]} : vector<2x11x7x256xf32> to vector<2x1x7x256xf32>
    %764 = vector.shape_cast %763 : vector<2x1x7x256xf32> to vector<2x7x256xf32>
    %765 = vector.broadcast %22 : vector<1x1x256xf32> to vector<2x7x256xf32>
    %766 = arith.mulf %764, %765 : vector<2x7x256xf32>
    %767 = arith.addf %762, %766 : vector<2x7x256xf32>
    %768 = vector.extract_strided_slice %3 {offsets = [0, 7, 0, 0], sizes = [2, 1, 7, 256], strides = [1, 1, 1, 1]} : vector<2x11x7x256xf32> to vector<2x1x7x256xf32>
    %769 = vector.shape_cast %768 : vector<2x1x7x256xf32> to vector<2x7x256xf32>
    %770 = vector.broadcast %32 : vector<1x1x256xf32> to vector<2x7x256xf32>
    %771 = arith.mulf %769, %770 : vector<2x7x256xf32>
    %772 = arith.addf %767, %771 : vector<2x7x256xf32>
    %773 = vector.extract_strided_slice %3 {offsets = [0, 8, 0, 0], sizes = [2, 1, 7, 256], strides = [1, 1, 1, 1]} : vector<2x11x7x256xf32> to vector<2x1x7x256xf32>
    %774 = vector.shape_cast %773 : vector<2x1x7x256xf32> to vector<2x7x256xf32>
    %775 = vector.broadcast %42 : vector<1x1x256xf32> to vector<2x7x256xf32>
    %776 = arith.mulf %774, %775 : vector<2x7x256xf32>
    %777 = arith.addf %772, %776 : vector<2x7x256xf32>
    %778 = vector.extract_strided_slice %3 {offsets = [0, 9, 0, 0], sizes = [2, 1, 7, 256], strides = [1, 1, 1, 1]} : vector<2x11x7x256xf32> to vector<2x1x7x256xf32>
    %779 = vector.shape_cast %778 : vector<2x1x7x256xf32> to vector<2x7x256xf32>
    %780 = vector.broadcast %52 : vector<1x1x256xf32> to vector<2x7x256xf32>
    %781 = arith.mulf %779, %780 : vector<2x7x256xf32>
    %782 = arith.addf %777, %781 : vector<2x7x256xf32>
    %783 = vector.extract_strided_slice %4 {offsets = [0, 5, 0, 0], sizes = [2, 1, 7, 256], strides = [1, 1, 1, 1]} : vector<2x11x7x256xf32> to vector<2x1x7x256xf32>
    %784 = vector.shape_cast %783 : vector<2x1x7x256xf32> to vector<2x7x256xf32>
    %785 = vector.broadcast %14 : vector<1x1x256xf32> to vector<2x7x256xf32>
    %786 = arith.mulf %784, %785 : vector<2x7x256xf32>
    %787 = arith.addf %782, %786 : vector<2x7x256xf32>
    %788 = vector.extract_strided_slice %4 {offsets = [0, 6, 0, 0], sizes = [2, 1, 7, 256], strides = [1, 1, 1, 1]} : vector<2x11x7x256xf32> to vector<2x1x7x256xf32>
    %789 = vector.shape_cast %788 : vector<2x1x7x256xf32> to vector<2x7x256xf32>
    %790 = vector.broadcast %24 : vector<1x1x256xf32> to vector<2x7x256xf32>
    %791 = arith.mulf %789, %790 : vector<2x7x256xf32>
    %792 = arith.addf %787, %791 : vector<2x7x256xf32>
    %793 = vector.extract_strided_slice %4 {offsets = [0, 7, 0, 0], sizes = [2, 1, 7, 256], strides = [1, 1, 1, 1]} : vector<2x11x7x256xf32> to vector<2x1x7x256xf32>
    %794 = vector.shape_cast %793 : vector<2x1x7x256xf32> to vector<2x7x256xf32>
    %795 = vector.broadcast %34 : vector<1x1x256xf32> to vector<2x7x256xf32>
    %796 = arith.mulf %794, %795 : vector<2x7x256xf32>
    %797 = arith.addf %792, %796 : vector<2x7x256xf32>
    %798 = vector.extract_strided_slice %4 {offsets = [0, 8, 0, 0], sizes = [2, 1, 7, 256], strides = [1, 1, 1, 1]} : vector<2x11x7x256xf32> to vector<2x1x7x256xf32>
    %799 = vector.shape_cast %798 : vector<2x1x7x256xf32> to vector<2x7x256xf32>
    %800 = vector.broadcast %44 : vector<1x1x256xf32> to vector<2x7x256xf32>
    %801 = arith.mulf %799, %800 : vector<2x7x256xf32>
    %802 = arith.addf %797, %801 : vector<2x7x256xf32>
    %803 = vector.extract_strided_slice %4 {offsets = [0, 9, 0, 0], sizes = [2, 1, 7, 256], strides = [1, 1, 1, 1]} : vector<2x11x7x256xf32> to vector<2x1x7x256xf32>
    %804 = vector.shape_cast %803 : vector<2x1x7x256xf32> to vector<2x7x256xf32>
    %805 = vector.broadcast %54 : vector<1x1x256xf32> to vector<2x7x256xf32>
    %806 = arith.mulf %804, %805 : vector<2x7x256xf32>
    %807 = arith.addf %802, %806 : vector<2x7x256xf32>
    %808 = vector.extract_strided_slice %5 {offsets = [0, 5, 0, 0], sizes = [2, 1, 7, 256], strides = [1, 1, 1, 1]} : vector<2x11x7x256xf32> to vector<2x1x7x256xf32>
    %809 = vector.shape_cast %808 : vector<2x1x7x256xf32> to vector<2x7x256xf32>
    %810 = vector.broadcast %16 : vector<1x1x256xf32> to vector<2x7x256xf32>
    %811 = arith.mulf %809, %810 : vector<2x7x256xf32>
    %812 = arith.addf %807, %811 : vector<2x7x256xf32>
    %813 = vector.extract_strided_slice %5 {offsets = [0, 6, 0, 0], sizes = [2, 1, 7, 256], strides = [1, 1, 1, 1]} : vector<2x11x7x256xf32> to vector<2x1x7x256xf32>
    %814 = vector.shape_cast %813 : vector<2x1x7x256xf32> to vector<2x7x256xf32>
    %815 = vector.broadcast %26 : vector<1x1x256xf32> to vector<2x7x256xf32>
    %816 = arith.mulf %814, %815 : vector<2x7x256xf32>
    %817 = arith.addf %812, %816 : vector<2x7x256xf32>
    %818 = vector.extract_strided_slice %5 {offsets = [0, 7, 0, 0], sizes = [2, 1, 7, 256], strides = [1, 1, 1, 1]} : vector<2x11x7x256xf32> to vector<2x1x7x256xf32>
    %819 = vector.shape_cast %818 : vector<2x1x7x256xf32> to vector<2x7x256xf32>
    %820 = vector.broadcast %36 : vector<1x1x256xf32> to vector<2x7x256xf32>
    %821 = arith.mulf %819, %820 : vector<2x7x256xf32>
    %822 = arith.addf %817, %821 : vector<2x7x256xf32>
    %823 = vector.extract_strided_slice %5 {offsets = [0, 8, 0, 0], sizes = [2, 1, 7, 256], strides = [1, 1, 1, 1]} : vector<2x11x7x256xf32> to vector<2x1x7x256xf32>
    %824 = vector.shape_cast %823 : vector<2x1x7x256xf32> to vector<2x7x256xf32>
    %825 = vector.broadcast %46 : vector<1x1x256xf32> to vector<2x7x256xf32>
    %826 = arith.mulf %824, %825 : vector<2x7x256xf32>
    %827 = arith.addf %822, %826 : vector<2x7x256xf32>
    %828 = vector.extract_strided_slice %5 {offsets = [0, 9, 0, 0], sizes = [2, 1, 7, 256], strides = [1, 1, 1, 1]} : vector<2x11x7x256xf32> to vector<2x1x7x256xf32>
    %829 = vector.shape_cast %828 : vector<2x1x7x256xf32> to vector<2x7x256xf32>
    %830 = vector.broadcast %56 : vector<1x1x256xf32> to vector<2x7x256xf32>
    %831 = arith.mulf %829, %830 : vector<2x7x256xf32>
    %832 = arith.addf %827, %831 : vector<2x7x256xf32>
    %c0_22 = arith.constant 0 : index
    %c5 = arith.constant 5 : index
    %c0_23 = arith.constant 0 : index
    %c0_24 = arith.constant 0 : index
    %833 = vector.load %arg6[%c0_22, %c5, %c0_23, %c0_24] : memref<2x7x7x256xf32, #tpu.memory_space<vmem>>, vector<2x1x7x256xf32>
    %834 = vector.shape_cast %833 : vector<2x1x7x256xf32> to vector<2x7x256xf32>
    %835 = vector.shape_cast %832 : vector<2x7x256xf32> to vector<2x1x7x256xf32>
    tpu.vector_store %arg6[%c0_22, %c5, %c0_23, %c0_24], %835 {strides = array<i32>} : memref<2x7x7x256xf32, #tpu.memory_space<vmem>>, vector<2x1x7x256xf32>,
    %836 = arith.addf %706, %832 : vector<2x7x256xf32>
    %837 = arith.mulf %832, %832 : vector<2x7x256xf32>
    %838 = arith.addf %708, %837 : vector<2x7x256xf32>
    %839 = vector.extract_strided_slice %1 {offsets = [0, 6, 0, 0], sizes = [2, 1, 7, 256], strides = [1, 1, 1, 1]} : vector<2x11x7x256xf32> to vector<2x1x7x256xf32>
    %840 = vector.shape_cast %839 : vector<2x1x7x256xf32> to vector<2x7x256xf32>
    %841 = vector.broadcast %8 : vector<1x1x256xf32> to vector<2x7x256xf32>
    %842 = arith.mulf %840, %841 : vector<2x7x256xf32>
    %843 = vector.extract_strided_slice %1 {offsets = [0, 7, 0, 0], sizes = [2, 1, 7, 256], strides = [1, 1, 1, 1]} : vector<2x11x7x256xf32> to vector<2x1x7x256xf32>
    %844 = vector.shape_cast %843 : vector<2x1x7x256xf32> to vector<2x7x256xf32>
    %845 = vector.broadcast %18 : vector<1x1x256xf32> to vector<2x7x256xf32>
    %846 = arith.mulf %844, %845 : vector<2x7x256xf32>
    %847 = arith.addf %842, %846 : vector<2x7x256xf32>
    %848 = vector.extract_strided_slice %1 {offsets = [0, 8, 0, 0], sizes = [2, 1, 7, 256], strides = [1, 1, 1, 1]} : vector<2x11x7x256xf32> to vector<2x1x7x256xf32>
    %849 = vector.shape_cast %848 : vector<2x1x7x256xf32> to vector<2x7x256xf32>
    %850 = vector.broadcast %28 : vector<1x1x256xf32> to vector<2x7x256xf32>
    %851 = arith.mulf %849, %850 : vector<2x7x256xf32>
    %852 = arith.addf %847, %851 : vector<2x7x256xf32>
    %853 = vector.extract_strided_slice %1 {offsets = [0, 9, 0, 0], sizes = [2, 1, 7, 256], strides = [1, 1, 1, 1]} : vector<2x11x7x256xf32> to vector<2x1x7x256xf32>
    %854 = vector.shape_cast %853 : vector<2x1x7x256xf32> to vector<2x7x256xf32>
    %855 = vector.broadcast %38 : vector<1x1x256xf32> to vector<2x7x256xf32>
    %856 = arith.mulf %854, %855 : vector<2x7x256xf32>
    %857 = arith.addf %852, %856 : vector<2x7x256xf32>
    %858 = vector.extract_strided_slice %1 {offsets = [0, 10, 0, 0], sizes = [2, 1, 7, 256], strides = [1, 1, 1, 1]} : vector<2x11x7x256xf32> to vector<2x1x7x256xf32>
    %859 = vector.shape_cast %858 : vector<2x1x7x256xf32> to vector<2x7x256xf32>
    %860 = vector.broadcast %48 : vector<1x1x256xf32> to vector<2x7x256xf32>
    %861 = arith.mulf %859, %860 : vector<2x7x256xf32>
    %862 = arith.addf %857, %861 : vector<2x7x256xf32>
    %863 = vector.extract_strided_slice %2 {offsets = [0, 6, 0, 0], sizes = [2, 1, 7, 256], strides = [1, 1, 1, 1]} : vector<2x11x7x256xf32> to vector<2x1x7x256xf32>
    %864 = vector.shape_cast %863 : vector<2x1x7x256xf32> to vector<2x7x256xf32>
    %865 = vector.broadcast %10 : vector<1x1x256xf32> to vector<2x7x256xf32>
    %866 = arith.mulf %864, %865 : vector<2x7x256xf32>
    %867 = arith.addf %862, %866 : vector<2x7x256xf32>
    %868 = vector.extract_strided_slice %2 {offsets = [0, 7, 0, 0], sizes = [2, 1, 7, 256], strides = [1, 1, 1, 1]} : vector<2x11x7x256xf32> to vector<2x1x7x256xf32>
    %869 = vector.shape_cast %868 : vector<2x1x7x256xf32> to vector<2x7x256xf32>
    %870 = vector.broadcast %20 : vector<1x1x256xf32> to vector<2x7x256xf32>
    %871 = arith.mulf %869, %870 : vector<2x7x256xf32>
    %872 = arith.addf %867, %871 : vector<2x7x256xf32>
    %873 = vector.extract_strided_slice %2 {offsets = [0, 8, 0, 0], sizes = [2, 1, 7, 256], strides = [1, 1, 1, 1]} : vector<2x11x7x256xf32> to vector<2x1x7x256xf32>
    %874 = vector.shape_cast %873 : vector<2x1x7x256xf32> to vector<2x7x256xf32>
    %875 = vector.broadcast %30 : vector<1x1x256xf32> to vector<2x7x256xf32>
    %876 = arith.mulf %874, %875 : vector<2x7x256xf32>
    %877 = arith.addf %872, %876 : vector<2x7x256xf32>
    %878 = vector.extract_strided_slice %2 {offsets = [0, 9, 0, 0], sizes = [2, 1, 7, 256], strides = [1, 1, 1, 1]} : vector<2x11x7x256xf32> to vector<2x1x7x256xf32>
    %879 = vector.shape_cast %878 : vector<2x1x7x256xf32> to vector<2x7x256xf32>
    %880 = vector.broadcast %40 : vector<1x1x256xf32> to vector<2x7x256xf32>
    %881 = arith.mulf %879, %880 : vector<2x7x256xf32>
    %882 = arith.addf %877, %881 : vector<2x7x256xf32>
    %883 = vector.extract_strided_slice %2 {offsets = [0, 10, 0, 0], sizes = [2, 1, 7, 256], strides = [1, 1, 1, 1]} : vector<2x11x7x256xf32> to vector<2x1x7x256xf32>
    %884 = vector.shape_cast %883 : vector<2x1x7x256xf32> to vector<2x7x256xf32>
    %885 = vector.broadcast %50 : vector<1x1x256xf32> to vector<2x7x256xf32>
    %886 = arith.mulf %884, %885 : vector<2x7x256xf32>
    %887 = arith.addf %882, %886 : vector<2x7x256xf32>
    %888 = vector.extract_strided_slice %3 {offsets = [0, 6, 0, 0], sizes = [2, 1, 7, 256], strides = [1, 1, 1, 1]} : vector<2x11x7x256xf32> to vector<2x1x7x256xf32>
    %889 = vector.shape_cast %888 : vector<2x1x7x256xf32> to vector<2x7x256xf32>
    %890 = vector.broadcast %12 : vector<1x1x256xf32> to vector<2x7x256xf32>
    %891 = arith.mulf %889, %890 : vector<2x7x256xf32>
    %892 = arith.addf %887, %891 : vector<2x7x256xf32>
    %893 = vector.extract_strided_slice %3 {offsets = [0, 7, 0, 0], sizes = [2, 1, 7, 256], strides = [1, 1, 1, 1]} : vector<2x11x7x256xf32> to vector<2x1x7x256xf32>
    %894 = vector.shape_cast %893 : vector<2x1x7x256xf32> to vector<2x7x256xf32>
    %895 = vector.broadcast %22 : vector<1x1x256xf32> to vector<2x7x256xf32>
    %896 = arith.mulf %894, %895 : vector<2x7x256xf32>
    %897 = arith.addf %892, %896 : vector<2x7x256xf32>
    %898 = vector.extract_strided_slice %3 {offsets = [0, 8, 0, 0], sizes = [2, 1, 7, 256], strides = [1, 1, 1, 1]} : vector<2x11x7x256xf32> to vector<2x1x7x256xf32>
    %899 = vector.shape_cast %898 : vector<2x1x7x256xf32> to vector<2x7x256xf32>
    %900 = vector.broadcast %32 : vector<1x1x256xf32> to vector<2x7x256xf32>
    %901 = arith.mulf %899, %900 : vector<2x7x256xf32>
    %902 = arith.addf %897, %901 : vector<2x7x256xf32>
    %903 = vector.extract_strided_slice %3 {offsets = [0, 9, 0, 0], sizes = [2, 1, 7, 256], strides = [1, 1, 1, 1]} : vector<2x11x7x256xf32> to vector<2x1x7x256xf32>
    %904 = vector.shape_cast %903 : vector<2x1x7x256xf32> to vector<2x7x256xf32>
    %905 = vector.broadcast %42 : vector<1x1x256xf32> to vector<2x7x256xf32>
    %906 = arith.mulf %904, %905 : vector<2x7x256xf32>
    %907 = arith.addf %902, %906 : vector<2x7x256xf32>
    %908 = vector.extract_strided_slice %3 {offsets = [0, 10, 0, 0], sizes = [2, 1, 7, 256], strides = [1, 1, 1, 1]} : vector<2x11x7x256xf32> to vector<2x1x7x256xf32>
    %909 = vector.shape_cast %908 : vector<2x1x7x256xf32> to vector<2x7x256xf32>
    %910 = vector.broadcast %52 : vector<1x1x256xf32> to vector<2x7x256xf32>
    %911 = arith.mulf %909, %910 : vector<2x7x256xf32>
    %912 = arith.addf %907, %911 : vector<2x7x256xf32>
    %913 = vector.extract_strided_slice %4 {offsets = [0, 6, 0, 0], sizes = [2, 1, 7, 256], strides = [1, 1, 1, 1]} : vector<2x11x7x256xf32> to vector<2x1x7x256xf32>
    %914 = vector.shape_cast %913 : vector<2x1x7x256xf32> to vector<2x7x256xf32>
    %915 = vector.broadcast %14 : vector<1x1x256xf32> to vector<2x7x256xf32>
    %916 = arith.mulf %914, %915 : vector<2x7x256xf32>
    %917 = arith.addf %912, %916 : vector<2x7x256xf32>
    %918 = vector.extract_strided_slice %4 {offsets = [0, 7, 0, 0], sizes = [2, 1, 7, 256], strides = [1, 1, 1, 1]} : vector<2x11x7x256xf32> to vector<2x1x7x256xf32>
    %919 = vector.shape_cast %918 : vector<2x1x7x256xf32> to vector<2x7x256xf32>
    %920 = vector.broadcast %24 : vector<1x1x256xf32> to vector<2x7x256xf32>
    %921 = arith.mulf %919, %920 : vector<2x7x256xf32>
    %922 = arith.addf %917, %921 : vector<2x7x256xf32>
    %923 = vector.extract_strided_slice %4 {offsets = [0, 8, 0, 0], sizes = [2, 1, 7, 256], strides = [1, 1, 1, 1]} : vector<2x11x7x256xf32> to vector<2x1x7x256xf32>
    %924 = vector.shape_cast %923 : vector<2x1x7x256xf32> to vector<2x7x256xf32>
    %925 = vector.broadcast %34 : vector<1x1x256xf32> to vector<2x7x256xf32>
    %926 = arith.mulf %924, %925 : vector<2x7x256xf32>
    %927 = arith.addf %922, %926 : vector<2x7x256xf32>
    %928 = vector.extract_strided_slice %4 {offsets = [0, 9, 0, 0], sizes = [2, 1, 7, 256], strides = [1, 1, 1, 1]} : vector<2x11x7x256xf32> to vector<2x1x7x256xf32>
    %929 = vector.shape_cast %928 : vector<2x1x7x256xf32> to vector<2x7x256xf32>
    %930 = vector.broadcast %44 : vector<1x1x256xf32> to vector<2x7x256xf32>
    %931 = arith.mulf %929, %930 : vector<2x7x256xf32>
    %932 = arith.addf %927, %931 : vector<2x7x256xf32>
    %933 = vector.extract_strided_slice %4 {offsets = [0, 10, 0, 0], sizes = [2, 1, 7, 256], strides = [1, 1, 1, 1]} : vector<2x11x7x256xf32> to vector<2x1x7x256xf32>
    %934 = vector.shape_cast %933 : vector<2x1x7x256xf32> to vector<2x7x256xf32>
    %935 = vector.broadcast %54 : vector<1x1x256xf32> to vector<2x7x256xf32>
    %936 = arith.mulf %934, %935 : vector<2x7x256xf32>
    %937 = arith.addf %932, %936 : vector<2x7x256xf32>
    %938 = vector.extract_strided_slice %5 {offsets = [0, 6, 0, 0], sizes = [2, 1, 7, 256], strides = [1, 1, 1, 1]} : vector<2x11x7x256xf32> to vector<2x1x7x256xf32>
    %939 = vector.shape_cast %938 : vector<2x1x7x256xf32> to vector<2x7x256xf32>
    %940 = vector.broadcast %16 : vector<1x1x256xf32> to vector<2x7x256xf32>
    %941 = arith.mulf %939, %940 : vector<2x7x256xf32>
    %942 = arith.addf %937, %941 : vector<2x7x256xf32>
    %943 = vector.extract_strided_slice %5 {offsets = [0, 7, 0, 0], sizes = [2, 1, 7, 256], strides = [1, 1, 1, 1]} : vector<2x11x7x256xf32> to vector<2x1x7x256xf32>
    %944 = vector.shape_cast %943 : vector<2x1x7x256xf32> to vector<2x7x256xf32>
    %945 = vector.broadcast %26 : vector<1x1x256xf32> to vector<2x7x256xf32>
    %946 = arith.mulf %944, %945 : vector<2x7x256xf32>
    %947 = arith.addf %942, %946 : vector<2x7x256xf32>
    %948 = vector.extract_strided_slice %5 {offsets = [0, 8, 0, 0], sizes = [2, 1, 7, 256], strides = [1, 1, 1, 1]} : vector<2x11x7x256xf32> to vector<2x1x7x256xf32>
    %949 = vector.shape_cast %948 : vector<2x1x7x256xf32> to vector<2x7x256xf32>
    %950 = vector.broadcast %36 : vector<1x1x256xf32> to vector<2x7x256xf32>
    %951 = arith.mulf %949, %950 : vector<2x7x256xf32>
    %952 = arith.addf %947, %951 : vector<2x7x256xf32>
    %953 = vector.extract_strided_slice %5 {offsets = [0, 9, 0, 0], sizes = [2, 1, 7, 256], strides = [1, 1, 1, 1]} : vector<2x11x7x256xf32> to vector<2x1x7x256xf32>
    %954 = vector.shape_cast %953 : vector<2x1x7x256xf32> to vector<2x7x256xf32>
    %955 = vector.broadcast %46 : vector<1x1x256xf32> to vector<2x7x256xf32>
    %956 = arith.mulf %954, %955 : vector<2x7x256xf32>
    %957 = arith.addf %952, %956 : vector<2x7x256xf32>
    %958 = vector.extract_strided_slice %5 {offsets = [0, 10, 0, 0], sizes = [2, 1, 7, 256], strides = [1, 1, 1, 1]} : vector<2x11x7x256xf32> to vector<2x1x7x256xf32>
    %959 = vector.shape_cast %958 : vector<2x1x7x256xf32> to vector<2x7x256xf32>
    %960 = vector.broadcast %56 : vector<1x1x256xf32> to vector<2x7x256xf32>
    %961 = arith.mulf %959, %960 : vector<2x7x256xf32>
    %962 = arith.addf %957, %961 : vector<2x7x256xf32>
    %c0_25 = arith.constant 0 : index
    %c6 = arith.constant 6 : index
    %c0_26 = arith.constant 0 : index
    %c0_27 = arith.constant 0 : index
    %963 = vector.load %arg6[%c0_25, %c6, %c0_26, %c0_27] : memref<2x7x7x256xf32, #tpu.memory_space<vmem>>, vector<2x1x7x256xf32>
    %964 = vector.shape_cast %963 : vector<2x1x7x256xf32> to vector<2x7x256xf32>
    %965 = vector.shape_cast %962 : vector<2x7x256xf32> to vector<2x1x7x256xf32>
    tpu.vector_store %arg6[%c0_25, %c6, %c0_26, %c0_27], %965 {strides = array<i32>} : memref<2x7x7x256xf32, #tpu.memory_space<vmem>>, vector<2x1x7x256xf32>,
    %966 = arith.addf %836, %962 : vector<2x7x256xf32>
    %967 = arith.mulf %962, %962 : vector<2x7x256xf32>
    %968 = arith.addf %838, %967 : vector<2x7x256xf32>
    %cst_28 = arith.constant dense<0.000000e+00> : vector<256xf32>
    %969 = vector.multi_reduction <add>, %966, %cst_28 [0, 1] : vector<2x7x256xf32> to vector<256xf32>
    %970 = vector.shape_cast %969 : vector<256xf32> to vector<1x1x256xf32>
    %cst_29 = arith.constant dense<0.000000e+00> : vector<256xf32>
    %971 = vector.multi_reduction <add>, %968, %cst_29 [0, 1] : vector<2x7x256xf32> to vector<256xf32>
    %972 = vector.shape_cast %971 : vector<256xf32> to vector<1x1x256xf32>
    %cst_30 = arith.constant 9.800000e+01 : f32
    %973 = vector.broadcast %cst_30 : f32 to vector<1x1x256xf32>
    %974 = arith.divf %970, %973 : vector<1x1x256xf32>
    %cst_31 = arith.constant 9.800000e+01 : f32
    %975 = vector.broadcast %cst_31 : f32 to vector<1x1x256xf32>
    %976 = arith.divf %972, %975 : vector<1x1x256xf32>
    %977 = arith.mulf %974, %974 : vector<1x1x256xf32>
    %978 = arith.subf %976, %977 : vector<1x1x256xf32>
    %cst_32 = arith.constant 0.000000e+00 : f32
    %979 = vector.broadcast %cst_32 : f32 to vector<1x1x256xf32>
    %980 = arith.maximumf %978, %979 : vector<1x1x256xf32>
    %cst_33 = arith.constant 1.000000e-03 : f32
    %981 = vector.broadcast %cst_33 : f32 to vector<1x1x256xf32>
    %982 = arith.addf %980, %981 : vector<1x1x256xf32>
    %983 = math.rsqrt %982 : vector<1x1x256xf32>
    %c0_34 = arith.constant 0 : index
    %c0_35 = arith.constant 0 : index
    %984 = vector.load %arg3[%c0_34, %c0_35] : memref<1x256xf32, #tpu.memory_space<vmem>>, vector<1x256xf32>
    %985 = vector.shape_cast %984 : vector<1x256xf32> to vector<1x1x256xf32>
    %c0_36 = arith.constant 0 : index
    %c0_37 = arith.constant 0 : index
    %986 = vector.load %arg4[%c0_36, %c0_37] : memref<1x256xf32, #tpu.memory_space<vmem>>, vector<1x256xf32>
    %987 = vector.shape_cast %986 : vector<1x256xf32> to vector<1x1x256xf32>
    %988 = arith.mulf %985, %983 : vector<1x1x256xf32>
    %989 = vector.shape_cast %988 : vector<1x1x256xf32> to vector<1x1x1x256xf32>
    %990 = arith.mulf %974, %985 : vector<1x1x256xf32>
    %991 = arith.mulf %990, %983 : vector<1x1x256xf32>
    %992 = arith.subf %987, %991 : vector<1x1x256xf32>
    %993 = vector.shape_cast %992 : vector<1x1x256xf32> to vector<1x1x1x256xf32>
    %c0_38 = arith.constant 0 : index
    %c0_39 = arith.constant 0 : index
    %c0_40 = arith.constant 0 : index
    %c0_41 = arith.constant 0 : index
    %994 = vector.load %arg6[%c0_38, %c0_39, %c0_40, %c0_41] : memref<2x7x7x256xf32, #tpu.memory_space<vmem>>, vector<2x7x7x256xf32>
    %995 = vector.broadcast %989 : vector<1x1x1x256xf32> to vector<2x7x7x256xf32>
    %996 = arith.mulf %994, %995 : vector<2x7x7x256xf32>
    %997 = vector.broadcast %993 : vector<1x1x1x256xf32> to vector<2x7x7x256xf32>
    %998 = arith.addf %996, %997 : vector<2x7x7x256xf32>
    %c0_42 = arith.constant 0 : index
    %c0_43 = arith.constant 0 : index
    %c0_44 = arith.constant 0 : index
    %c0_45 = arith.constant 0 : index
    %999 = vector.load %arg5[%c0_42, %c0_43, %c0_44, %c0_45] : memref<2x7x7x256xf32, #tpu.memory_space<vmem>>, vector<2x7x7x256xf32>
    tpu.vector_store %arg5[%c0_42, %c0_43, %c0_44, %c0_45], %998 {strides = array<i32>} : memref<2x7x7x256xf32, #tpu.memory_space<vmem>>, vector<2x7x7x256xf32>,
    return
  }
  func.func @transform_0(%arg0: i32) -> (i32, i32, i32, i32) {
    %c0_i32 = arith.constant 0 : i32
    %c0_i32_0 = arith.constant 0 : i32
    %c0_i32_1 = arith.constant 0 : i32
    %c0_i32_2 = arith.constant 0 : i32
    return %c0_i32, %c0_i32_0, %c0_i32_1, %arg0 : i32, i32, i32, i32
  }
  func.func @transform_1(%arg0: i32) -> (i32, i32) {
    %c0_i32 = arith.constant 0 : i32
    %c0_i32_0 = arith.constant 0 : i32
    return %c0_i32, %arg0 : i32, i32
  }
  func.func @transform_2(%arg0: i32) -> (i32, i32) {
    %c0_i32 = arith.constant 0 : i32
    %c0_i32_0 = arith.constant 0 : i32
    return %c0_i32, %arg0 : i32, i32
  }
  func.func @transform_3(%arg0: i32) -> (i32, i32) {
    %c0_i32 = arith.constant 0 : i32
    %c0_i32_0 = arith.constant 0 : i32
    return %c0_i32, %arg0 : i32, i32
  }
  func.func @transform_4(%arg0: i32) -> (i32, i32, i32, i32) {
    %c0_i32 = arith.constant 0 : i32
    %c0_i32_0 = arith.constant 0 : i32
    %c0_i32_1 = arith.constant 0 : i32
    %c0_i32_2 = arith.constant 0 : i32
    return %c0_i32, %c0_i32_0, %c0_i32_1, %arg0 : i32, i32, i32, i32
  }
}

</mosaic_0001>

<llo_original>
// kernel: dwconv_bn.1
$region0: #{dwconv_bn.1}
  #allocation0 [shape = 'u32[]', space=smem, size = 0x4, offset = 0x4, fixed_abs, tag = 'smem constant byte address 0x4 - core index']
  #allocation1 [shape = 'u32[144,128]{1,0:T(1,128)}', space=vmem, size = 0x12000, scoped, tag = 'internal scratch']
  #allocation2 [shape = 'f32[2,7,7,256]{3,2,1,0:T(8,128)}', space=vmem, size = 0x1c000, scoped, tag = 'scratch operand']
  %s0 = inlined_call_operand.hbm [shape: f32[2,11,11,256], index: 0, kind: input, shape index: {}]
  %s1 = inlined_call_operand.hbm [shape: f32[25,256], index: 1, kind: input, shape index: {}]
  %s2 = inlined_call_operand.hbm [shape: f32[1,256], index: 2, kind: input, shape index: {}]
  %s3 = inlined_call_operand.hbm [shape: f32[1,256], index: 3, kind: input, shape index: {}]
  %s4 = inlined_call_operand.hbm [shape: f32[2,7,7,256], index: 4, kind: output, shape index: {}]
  %s5 = sld [smem:[#allocation0]]
  $region42: #{dwconv_bn.1} parent=0
    _
  %s7 = ssub.s32 1, %s5
  %s8 = scalar_select 0, %s7, %s5
  $region1: #{dwconv_bn.1} parent=0
    #allocation3 [shape = 'u8[360448]{0}', space=vmem, size = 0x58000, scoped, tag = 'input window, operand 0, single buffered']
    #allocation4 [shape = 's32[1]{0}', space=sflag, size = 0x4, scoped, tag = 'scoped memory for dwconv_bn.1']
    #allocation5 [shape = 's32[1]{0}', space=sflag, size = 0x4, scoped, tag = 'scoped memory for dwconv_bn.1']
    #allocation6 [shape = 'u8[32768]{0}', space=vmem, size = 0x8000, scoped, tag = 'input window, operand 1, single buffered']
    #allocation7 [shape = 's32[1]{0}', space=sflag, size = 0x4, scoped, tag = 'scoped memory for dwconv_bn.1']
    #allocation8 [shape = 'u8[1024]{0}', space=vmem, size = 0x400, scoped, tag = 'input window, operand 2, single buffered']
    #allocation9 [shape = 'u8[1024]{0}', space=vmem, size = 0x400, scoped, tag = 'input window, operand 3, single buffered']
    #allocation10 [shape = 's32[1]{0}', space=sflag, size = 0x4, scoped, tag = 'scoped memory for dwconv_bn.1']
    #allocation11 [shape = 'u8[114688]{0}', space=vmem, size = 0x1c000, scoped, tag = 'output window, operand 0, single buffered']
    %9 = vsyncpa [#allocation4], 0
    %10 = vsyncpa [#allocation7], 0
    %11 = vsyncpa [#allocation10], 0
    %12 = vsyncpa [#allocation5], 0
    // Predicated region
    $region2: #{dwconv_bn.1} parent=1 // pred_check
      _
    $region3: #{dwconv_bn.1} parent=1 // pred_check_branch
      %14 = sbr.rel (0) target = $region5
    $region4: #{dwconv_bn.1} parent=1 // pred_region
      %s16 = ssub.s32 11264, 11264
      %17 = vsyncadd [#allocation4], %s16
      %s18 = sshll.u32 [#allocation3], 4
      %s19 = int_to_ptr.vmem [resolvable:$true] %s18
      %24 = dma.hbm_to_vmem [thread:$0]  %s0, 11264, %s19, [#allocation4], 256, 256, 16
    $region5: #{dwconv_bn.1} parent=1 // pred_fallthru
      _
    // Predicated region
    $region6: #{dwconv_bn.1} parent=1 // pred_check
      _
    $region7: #{dwconv_bn.1} parent=1 // pred_check_branch
      %26 = sbr.rel (0) target = $region9
    $region8: #{dwconv_bn.1} parent=1 // pred_region
      %s28 = ssub.s32 1024, 1024
      %29 = vsyncadd [#allocation7], %s28
      %s30 = sshll.u32 [#allocation6], 4
      %s31 = int_to_ptr.vmem [resolvable:$true] %s30
      %36 = dma.hbm_to_vmem [thread:$0]  %s1, 1024, %s31, [#allocation7], 256, 256, 16
    $region9: #{dwconv_bn.1} parent=1 // pred_fallthru
      _
    // Predicated region
    $region10: #{dwconv_bn.1} parent=1 // pred_check
      _
    $region11: #{dwconv_bn.1} parent=1 // pred_check_branch
      %38 = sbr.rel (0) target = $region13
    $region12: #{dwconv_bn.1} parent=1 // pred_region
      %s40 = ssub.s32 32, 32
      %41 = vsyncadd [#allocation7], %s40
      %s43 = sshll.u32 [#allocation8], 4
      %s44 = int_to_ptr.vmem [resolvable:$true] %s43
      %46 = dma.hbm_to_vmem [thread:$0]  %s2, 32, %s44, [#allocation7]
    $region13: #{dwconv_bn.1} parent=1 // pred_fallthru
      _
    // Predicated region
    $region14: #{dwconv_bn.1} parent=1 // pred_check
      _
    $region15: #{dwconv_bn.1} parent=1 // pred_check_branch
      %48 = sbr.rel (0) target = $region17
    $region16: #{dwconv_bn.1} parent=1 // pred_region
      %s50 = ssub.s32 32, 32
      %51 = vsyncadd [#allocation10], %s50
      %s53 = sshll.u32 [#allocation9], 4
      %s54 = int_to_ptr.vmem [resolvable:$true] %s53
      %56 = dma.hbm_to_vmem [thread:$0]  %s3, 32, %s54, [#allocation10]
    $region17: #{dwconv_bn.1} parent=1 // pred_fallthru
      _
    // Predicated region
    $region18: #{dwconv_bn.1} parent=1 // pred_check
      _
    $region19: #{dwconv_bn.1} parent=1 // pred_check_branch
      %58 = sbr.rel (0) target = $region21
    $region20: #{dwconv_bn.1} parent=1 // pred_region
      %59 = dma.done [#allocation4], 11264
    $region21: #{dwconv_bn.1} parent=1 // pred_fallthru
      _
    // Predicated region
    $region22: #{dwconv_bn.1} parent=1 // pred_check
      _
    $region23: #{dwconv_bn.1} parent=1 // pred_check_branch
      %61 = sbr.rel (0) target = $region25
    $region24: #{dwconv_bn.1} parent=1 // pred_region
      %62 = dma.done [#allocation7], 1024
    $region25: #{dwconv_bn.1} parent=1 // pred_fallthru
      _
    // Predicated region
    $region26: #{dwconv_bn.1} parent=1 // pred_check
      _
    $region27: #{dwconv_bn.1} parent=1 // pred_check_branch
      %64 = sbr.rel (0) target = $region29
    $region28: #{dwconv_bn.1} parent=1 // pred_region
      %65 = dma.done [#allocation7], 32
    $region29: #{dwconv_bn.1} parent=1 // pred_fallthru
      _
    // Predicated region
    $region30: #{dwconv_bn.1} parent=1 // pred_check
      _
    $region31: #{dwconv_bn.1} parent=1 // pred_check_branch
      %67 = sbr.rel (0) target = $region33
    $region32: #{dwconv_bn.1} parent=1 // pred_region
      %68 = dma.done [#allocation10], 32
    $region33: #{dwconv_bn.1} parent=1 // pred_fallthru
      _
    %v69 = vld [vmem:[#allocation3] sm:$0xff]
    %v70 = vld [vmem:[#allocation3 + $0x8] sm:$0xff]
    %v71 = vld [vmem:[#allocation3 + $0x10] sm:$0x7]
    %v72 = vld [vmem:[#allocation3 + $0x18] sm:$0x7]
    %v73 = vld [vmem:[#allocation3 + $0x20] sm:$0xff]
    %v74 = vld [vmem:[#allocation3 + $0x28] sm:$0xff]
    %v75 = vld [vmem:[#allocation3 + $0x30] sm:$0x7]
    %v76 = vld [vmem:[#allocation3 + $0x38] sm:$0x7]
    %v77 = vld [vmem:[#allocation3 + $0x40] sm:$0xff]
    %v78 = vld [vmem:[#allocation3 + $0x48] sm:$0xff]
    %v79 = vld [vmem:[#allocation3 + $0x50] sm:$0x7]
    %v80 = vld [vmem:[#allocation3 + $0x58] sm:$0x7]
    %v81 = vld [vmem:[#allocation3 + $0x60] sm:$0xff]
    %v82 = vld [vmem:[#allocation3 + $0x68] sm:$0xff]
    %v83 = vld [vmem:[#allocation3 + $0x70] sm:$0x7]
    %v84 = vld [vmem:[#allocation3 + $0x78] sm:$0x7]
    %v85 = vld [vmem:[#allocation3 + $0x80] sm:$0xff]
    %v86 = vld [vmem:[#allocation3 + $0x88] sm:$0xff]
    %v87 = vld [vmem:[#allocation3 + $0x90] sm:$0x7]
    %v88 = vld [vmem:[#allocation3 + $0x98] sm:$0x7]
    %v89 = vld [vmem:[#allocation3 + $0xa0] sm:$0xff]
    %v90 = vld [vmem:[#allocation3 + $0xa8] sm:$0xff]
    %v91 = vld [vmem:[#allocation3 + $0xb0] sm:$0x7]
    %v92 = vld [vmem:[#allocation3 + $0xb8] sm:$0x7]
    %v93 = vld [vmem:[#allocation3 + $0xc0] sm:$0xff]
    %v94 = vld [vmem:[#allocation3 + $0xc8] sm:$0xff]
    %v95 = vld [vmem:[#allocation3 + $0xd0] sm:$0x7]
    %v96 = vld [vmem:[#allocation3 + $0xd8] sm:$0x7]
    %v97 = vld [vmem:[#allocation3 + $0xe0] sm:$0xff]
    %v98 = vld [vmem:[#allocation3 + $0xe8] sm:$0xff]
    %v99 = vld [vmem:[#allocation3 + $0xf0] sm:$0x7]
    %v100 = vld [vmem:[#allocation3 + $0xf8] sm:$0x7]
    %v101 = vld [vmem:[#allocation3 + $0x100] sm:$0xff]
    %v102 = vld [vmem:[#allocation3 + $0x108] sm:$0xff]
    %v103 = vld [vmem:[#allocation3 + $0x110] sm:$0x7]
    %v104 = vld [vmem:[#allocation3 + $0x118] sm:$0x7]
    %v105 = vld [vmem:[#allocation3 + $0x120] sm:$0xff]
    %v106 = vld [vmem:[#allocation3 + $0x128] sm:$0xff]
    %v107 = vld [vmem:[#allocation3 + $0x130] sm:$0x7]
    %v108 = vld [vmem:[#allocation3 + $0x138] sm:$0x7]
    %v109 = vld [vmem:[#allocation3 + $0x140] sm:$0xff]
    %v110 = vld [vmem:[#allocation3 + $0x148] sm:$0xff]
    %v111 = vld [vmem:[#allocation3 + $0x150] sm:$0x7]
    %v112 = vld [vmem:[#allocation3 + $0x158] sm:$0x7]
    %v113 = vld [vmem:[#allocation3 + $0x160] sm:$0xff]
    %v114 = vld [vmem:[#allocation3 + $0x168] sm:$0xff]
    %v115 = vld [vmem:[#allocation3 + $0x170] sm:$0x7]
    %v116 = vld [vmem:[#allocation3 + $0x178] sm:$0x7]
    %v117 = vld [vmem:[#allocation3 + $0x180] sm:$0xff]
    %v118 = vld [vmem:[#allocation3 + $0x188] sm:$0xff]
    %v119 = vld [vmem:[#allocation3 + $0x190] sm:$0x7]
    %v120 = vld [vmem:[#allocation3 + $0x198] sm:$0x7]
    %v121 = vld [vmem:[#allocation3 + $0x1a0] sm:$0xff]
    %v122 = vld [vmem:[#allocation3 + $0x1a8] sm:$0xff]
    %v123 = vld [vmem:[#allocation3 + $0x1b0] sm:$0x7]
    %v124 = vld [vmem:[#allocation3 + $0x1b8] sm:$0x7]
    %v125 = vld [vmem:[#allocation3 + $0x1c0] sm:$0xff]
    %v126 = vld [vmem:[#allocation3 + $0x1c8] sm:$0xff]
    %v127 = vld [vmem:[#allocation3 + $0x1d0] sm:$0x7]
    %v128 = vld [vmem:[#allocation3 + $0x1d8] sm:$0x7]
    %v129 = vld [vmem:[#allocation3 + $0x1e0] sm:$0xff]
    %v130 = vld [vmem:[#allocation3 + $0x1e8] sm:$0xff]
    %v131 = vld [vmem:[#allocation3 + $0x1f0] sm:$0x7]
    %v132 = vld [vmem:[#allocation3 + $0x1f8] sm:$0x7]
    %v133 = vld [vmem:[#allocation3 + $0x200] sm:$0xff]
    %v134 = vld [vmem:[#allocation3 + $0x208] sm:$0xff]
    %v135 = vld [vmem:[#allocation3 + $0x210] sm:$0x7]
    %v136 = vld [vmem:[#allocation3 + $0x218] sm:$0x7]
    %v137 = vld [vmem:[#allocation3 + $0x220] sm:$0xff]
    %v138 = vld [vmem:[#allocation3 + $0x228] sm:$0xff]
    %v139 = vld [vmem:[#allocation3 + $0x230] sm:$0x7]
    %v140 = vld [vmem:[#allocation3 + $0x238] sm:$0x7]
    %v141 = vld [vmem:[#allocation3 + $0x240] sm:$0xff]
    %v142 = vld [vmem:[#allocation3 + $0x248] sm:$0xff]
    %v143 = vld [vmem:[#allocation3 + $0x250] sm:$0x7]
    %v144 = vld [vmem:[#allocation3 + $0x258] sm:$0x7]
    %v145 = vld [vmem:[#allocation3 + $0x260] sm:$0xff]
    %v146 = vld [vmem:[#allocation3 + $0x268] sm:$0xff]
    %v147 = vld [vmem:[#allocation3 + $0x270] sm:$0x7]
    %v148 = vld [vmem:[#allocation3 + $0x278] sm:$0x7]
    %v149 = vld [vmem:[#allocation3 + $0x280] sm:$0xff]
    %v150 = vld [vmem:[#allocation3 + $0x288] sm:$0xff]
    %v151 = vld [vmem:[#allocation3 + $0x290] sm:$0x7]
    %v152 = vld [vmem:[#allocation3 + $0x298] sm:$0x7]
    %v153 = vld [vmem:[#allocation3 + $0x2a0] sm:$0xff]
    %v154 = vld [vmem:[#allocation3 + $0x2a8] sm:$0xff]
    %v155 = vld [vmem:[#allocation3 + $0x2b0] sm:$0x7]
    %v156 = vld [vmem:[#allocation3 + $0x2b8] sm:$0x7]
    %v157 = vld [vmem:[#allocation6] sm:$0xff]
    %v158 = vld [vmem:[#allocation6 + $0x8] sm:$0xff]
    %v159 = vld [vmem:[#allocation6 + $0x10] sm:$0xff]
    %v160 = vld [vmem:[#allocation6 + $0x18] sm:$0xff]
    %v161 = vld [vmem:[#allocation6 + $0x20] sm:$0xff]
    %v162 = vld [vmem:[#allocation6 + $0x28] sm:$0xff]
    %v163 = vld [vmem:[#allocation6 + $0x30] sm:$0x1]
    %v164 = vld [vmem:[#allocation6 + $0x38] sm:$0x1]
    %v165 = vlaneseq
    %v166 = vshrl.u32 %v165, 7
    %v167 = vsub.s32 0, %v166
    %v168 = vrot.slane %v157, %v167
    %v169 = vlaneseq
    %v170 = vshrl.u32 %v169, 7
    %v171 = vsub.s32 0, %v170
    %v172 = vrot.slane %v158, %v171
    %v173 = vmul.f32 %v69, %v168
    %v174 = vmul.f32 %v70, %v172
    %v175 = vmul.f32 %v113, %v168
    %v176 = vmul.f32 %v114, %v172
    %v177 = vlaneseq
    %v178 = vshrl.u32 %v177, 7
    %v179 = vsub.s32 5, %v178
    %v180 = vrot.slane %v157, %v179
    %v181 = vlaneseq
    %v182 = vshrl.u32 %v181, 7
    %v183 = vsub.s32 5, %v182
    %v184 = vrot.slane %v158, %v183
    %v185 = vmul.f32 %v73, %v180
    %v186 = vmul.f32 %v74, %v184
    %v187 = vmul.f32 %v117, %v180
    %v188 = vmul.f32 %v118, %v184
    %v189 = vadd.f32 %v173, %v185
    %v190 = vadd.f32 %v174, %v186
    %v191 = vadd.f32 %v175, %v187
    %v192 = vadd.f32 %v176, %v188
    %v193 = vlaneseq
    %v194 = vshrl.u32 %v193, 7
    %v195 = vsub.s32 2, %v194
    %v196 = vrot.slane %v159, %v195
    %v197 = vlaneseq
    %v198 = vshrl.u32 %v197, 7
    %v199 = vsub.s32 2, %v198
    %v200 = vrot.slane %v160, %v199
    %v201 = vmul.f32 %v77, %v196
    %v202 = vmul.f32 %v78, %v200
    %v203 = vmul.f32 %v121, %v196
    %v204 = vmul.f32 %v122, %v200
    %v205 = vadd.f32 %v189, %v201
    %v206 = vadd.f32 %v190, %v202
    %v207 = vadd.f32 %v191, %v203
    %v208 = vadd.f32 %v192, %v204
    %v209 = vlaneseq
    %v210 = vshrl.u32 %v209, 7
    %v211 = vsub.s32 7, %v210
    %v212 = vrot.slane %v159, %v211
    %v213 = vlaneseq
    %v214 = vshrl.u32 %v213, 7
    %v215 = vsub.s32 7, %v214
    %v216 = vrot.slane %v160, %v215
    %v217 = vmul.f32 %v81, %v212
    %v218 = vmul.f32 %v82, %v216
    %v219 = vmul.f32 %v125, %v212
    %v220 = vmul.f32 %v126, %v216
    %v221 = vadd.f32 %v205, %v217
    %v222 = vadd.f32 %v206, %v218
    %v223 = vadd.f32 %v207, %v219
    %v224 = vadd.f32 %v208, %v220
    %v225 = vlaneseq
    %v226 = vshrl.u32 %v225, 7
    %v227 = vsub.s32 4, %v226
    %v228 = vrot.slane %v161, %v227
    %v229 = vlaneseq
    %v230 = vshrl.u32 %v229, 7
    %v231 = vsub.s32 4, %v230
    %v232 = vrot.slane %v162, %v231
    %v233 = vmul.f32 %v85, %v228
    %v234 = vmul.f32 %v86, %v232
    %v235 = vmul.f32 %v129, %v228
    %v236 = vmul.f32 %v130, %v232
    %v237 = vadd.f32 %v221, %v233
    %v238 = vadd.f32 %v222, %v234
    %v239 = vadd.f32 %v223, %v235
    %v240 = vadd.f32 %v224, %v236
    %v241 = vlaneseq
    %v242 = vshrl.u32 %v241, 7
    %v243 = vsub.s32 1, %v242
    %v244 = vrot.slane %v157, %v243
    %v245 = vlaneseq
    %v246 = vshrl.u32 %v245, 7
    %v247 = vsub.s32 1, %v246
    %v248 = vrot.slane %v158, %v247
    %v249 = vmul.f32 %v69, %v244
    %v250 = vmul.f32 %v70, %v248
    %v251 = vmul.f32 %v113, %v244
    %v252 = vmul.f32 %v114, %v248
    %v257 = vrot.slane %v249, 1
    %v258 = vrot.slane %v250, 1
    %v259 = vrot.slane %v251, 1
    %v260 = vrot.slane %v252, 1
    %v265 = vadd.f32 %v237, %v257
    %v266 = vadd.f32 %v238, %v258
    %v267 = vadd.f32 %v239, %v259
    %v268 = vadd.f32 %v240, %v260
    %v269 = vlaneseq
    %v270 = vshrl.u32 %v269, 7
    %v271 = vsub.s32 6, %v270
    %v272 = vrot.slane %v157, %v271
    %v273 = vlaneseq
    %v274 = vshrl.u32 %v273, 7
    %v275 = vsub.s32 6, %v274
    %v276 = vrot.slane %v158, %v275
    %v277 = vmul.f32 %v73, %v272
    %v278 = vmul.f32 %v74, %v276
    %v279 = vmul.f32 %v117, %v272
    %v280 = vmul.f32 %v118, %v276
    %v285 = vrot.slane %v277, 1
    %v286 = vrot.slane %v278, 1
    %v287 = vrot.slane %v279, 1
    %v288 = vrot.slane %v280, 1
    %v293 = vadd.f32 %v265, %v285
    %v294 = vadd.f32 %v266, %v286
    %v295 = vadd.f32 %v267, %v287
    %v296 = vadd.f32 %v268, %v288
    %v297 = vlaneseq
    %v298 = vshrl.u32 %v297, 7
    %v299 = vsub.s32 3, %v298
    %v300 = vrot.slane %v159, %v299
    %v301 = vlaneseq
    %v302 = vshrl.u32 %v301, 7
    %v303 = vsub.s32 3, %v302
    %v304 = vrot.slane %v160, %v303
    %v305 = vmul.f32 %v77, %v300
    %v306 = vmul.f32 %v78, %v304
    %v307 = vmul.f32 %v121, %v300
    %v308 = vmul.f32 %v122, %v304
    %v313 = vrot.slane %v305, 1
    %v314 = vrot.slane %v306, 1
    %v315 = vrot.slane %v307, 1
    %v316 = vrot.slane %v308, 1
    %v321 = vadd.f32 %v293, %v313
    %v322 = vadd.f32 %v294, %v314
    %v323 = vadd.f32 %v295, %v315
    %v324 = vadd.f32 %v296, %v316
    %v325 = vlaneseq
    %v326 = vshrl.u32 %v325, 7
    %v327 = vsub.s32 0, %v326
    %v328 = vrot.slane %v161, %v327
    %v329 = vlaneseq
    %v330 = vshrl.u32 %v329, 7
    %v331 = vsub.s32 0, %v330
    %v332 = vrot.slane %v162, %v331
    %v333 = vmul.f32 %v81, %v328
    %v334 = vmul.f32 %v82, %v332
    %v335 = vmul.f32 %v125, %v328
    %v336 = vmul.f32 %v126, %v332
    %v341 = vrot.slane %v333, 1
    %v342 = vrot.slane %v334, 1
    %v343 = vrot.slane %v335, 1
    %v344 = vrot.slane %v336, 1
    %v349 = vadd.f32 %v321, %v341
    %v350 = vadd.f32 %v322, %v342
    %v351 = vadd.f32 %v323, %v343
    %v352 = vadd.f32 %v324, %v344
    %v353 = vlaneseq
    %v354 = vshrl.u32 %v353, 7
    %v355 = vsub.s32 5, %v354
    %v356 = vrot.slane %v161, %v355
    %v357 = vlaneseq
    %v358 = vshrl.u32 %v357, 7
    %v359 = vsub.s32 5, %v358
    %v360 = vrot.slane %v162, %v359
    %v361 = vmul.f32 %v85, %v356
    %v362 = vmul.f32 %v86, %v360
    %v363 = vmul.f32 %v129, %v356
    %v364 = vmul.f32 %v130, %v360
    %v369 = vrot.slane %v361, 1
    %v370 = vrot.slane %v362, 1
    %v371 = vrot.slane %v363, 1
    %v372 = vrot.slane %v364, 1
    %v377 = vadd.f32 %v349, %v369
    %v378 = vadd.f32 %v350, %v370
    %v379 = vadd.f32 %v351, %v371
    %v380 = vadd.f32 %v352, %v372
    %v381 = vlaneseq
    %v382 = vshrl.u32 %v381, 7
    %v383 = vsub.s32 2, %v382
    %v384 = vrot.slane %v157, %v383
    %v385 = vlaneseq
    %v386 = vshrl.u32 %v385, 7
    %v387 = vsub.s32 2, %v386
    %v388 = vrot.slane %v158, %v387
    %v389 = vmul.f32 %v69, %v384
    %v390 = vmul.f32 %v70, %v388
    %v391 = vmul.f32 %v71, %v384
    %v392 = vmul.f32 %v72, %v388
    %v393 = vmul.f32 %v113, %v384
    %v394 = vmul.f32 %v114, %v388
    %v395 = vmul.f32 %v115, %v384
    %v396 = vmul.f32 %v116, %v388
    %vm405 = vcmask 1045504
    %v406 = vrot.slane %v389, 2
    %v407 = vrot.slane %v391, 2
    %v408 = vsel %vm405, %v406, %v407
    %v409 = vrot.slane %v390, 2
    %v410 = vrot.slane %v392, 2
    %v411 = vsel %vm405, %v409, %v410
    %v412 = vrot.slane %v393, 2
    %v413 = vrot.slane %v395, 2
    %v414 = vsel %vm405, %v412, %v413
    %v415 = vrot.slane %v394, 2
    %v416 = vrot.slane %v396, 2
    %v417 = vsel %vm405, %v415, %v416
    %v422 = vadd.f32 %v377, %v408
    %v423 = vadd.f32 %v378, %v411
    %v424 = vadd.f32 %v379, %v414
    %v425 = vadd.f32 %v380, %v417
    %v426 = vlaneseq
    %v427 = vshrl.u32 %v426, 7
    %v428 = vsub.s32 7, %v427
    %v429 = vrot.slane %v157, %v428
    %v430 = vlaneseq
    %v431 = vshrl.u32 %v430, 7
    %v432 = vsub.s32 7, %v431
    %v433 = vrot.slane %v158, %v432
    %v434 = vmul.f32 %v73, %v429
    %v435 = vmul.f32 %v74, %v433
    %v436 = vmul.f32 %v75, %v429
    %v437 = vmul.f32 %v76, %v433
    %v438 = vmul.f32 %v117, %v429
    %v439 = vmul.f32 %v118, %v433
    %v440 = vmul.f32 %v119, %v429
    %v441 = vmul.f32 %v120, %v433
    %v450 = vrot.slane %v434, 2
    %v451 = vrot.slane %v436, 2
    %v452 = vsel %vm405, %v450, %v451
    %v453 = vrot.slane %v435, 2
    %v454 = vrot.slane %v437, 2
    %v455 = vsel %vm405, %v453, %v454
    %v456 = vrot.slane %v438, 2
    %v457 = vrot.slane %v440, 2
    %v458 = vsel %vm405, %v456, %v457
    %v459 = vrot.slane %v439, 2
    %v460 = vrot.slane %v441, 2
    %v461 = vsel %vm405, %v459, %v460
    %v466 = vadd.f32 %v422, %v452
    %v467 = vadd.f32 %v423, %v455
    %v468 = vadd.f32 %v424, %v458
    %v469 = vadd.f32 %v425, %v461
    %v470 = vlaneseq
    %v471 = vshrl.u32 %v470, 7
    %v472 = vsub.s32 4, %v471
    %v473 = vrot.slane %v159, %v472
    %v474 = vlaneseq
    %v475 = vshrl.u32 %v474, 7
    %v476 = vsub.s32 4, %v475
    %v477 = vrot.slane %v160, %v476
    %v478 = vmul.f32 %v77, %v473
    %v479 = vmul.f32 %v78, %v477
    %v480 = vmul.f32 %v79, %v473
    %v481 = vmul.f32 %v80, %v477
    %v482 = vmul.f32 %v121, %v473
    %v483 = vmul.f32 %v122, %v477
    %v484 = vmul.f32 %v123, %v473
    %v485 = vmul.f32 %v124, %v477
    %v494 = vrot.slane %v478, 2
    %v495 = vrot.slane %v480, 2
    %v496 = vsel %vm405, %v494, %v495
    %v497 = vrot.slane %v479, 2
    %v498 = vrot.slane %v481, 2
    %v499 = vsel %vm405, %v497, %v498
    %v500 = vrot.slane %v482, 2
    %v501 = vrot.slane %v484, 2
    %v502 = vsel %vm405, %v500, %v501
    %v503 = vrot.slane %v483, 2
    %v504 = vrot.slane %v485, 2
    %v505 = vsel %vm405, %v503, %v504
    %v510 = vadd.f32 %v466, %v496
    %v511 = vadd.f32 %v467, %v499
    %v512 = vadd.f32 %v468, %v502
    %v513 = vadd.f32 %v469, %v505
    %v514 = vlaneseq
    %v515 = vshrl.u32 %v514, 7
    %v516 = vsub.s32 1, %v515
    %v517 = vrot.slane %v161, %v516
    %v518 = vlaneseq
    %v519 = vshrl.u32 %v518, 7
    %v520 = vsub.s32 1, %v519
    %v521 = vrot.slane %v162, %v520
    %v522 = vmul.f32 %v81, %v517
    %v523 = vmul.f32 %v82, %v521
    %v524 = vmul.f32 %v83, %v517
    %v525 = vmul.f32 %v84, %v521
    %v526 = vmul.f32 %v125, %v517
    %v527 = vmul.f32 %v126, %v521
    %v528 = vmul.f32 %v127, %v517
    %v529 = vmul.f32 %v128, %v521
    %v538 = vrot.slane %v522, 2
    %v539 = vrot.slane %v524, 2
    %v540 = vsel %vm405, %v538, %v539
    %v541 = vrot.slane %v523, 2
    %v542 = vrot.slane %v525, 2
    %v543 = vsel %vm405, %v541, %v542
    %v544 = vrot.slane %v526, 2
    %v545 = vrot.slane %v528, 2
    %v546 = vsel %vm405, %v544, %v545
    %v547 = vrot.slane %v527, 2
    %v548 = vrot.slane %v529, 2
    %v549 = vsel %vm405, %v547, %v548
    %v554 = vadd.f32 %v510, %v540
    %v555 = vadd.f32 %v511, %v543
    %v556 = vadd.f32 %v512, %v546
    %v557 = vadd.f32 %v513, %v549
    %v558 = vlaneseq
    %v559 = vshrl.u32 %v558, 7
    %v560 = vsub.s32 6, %v559
    %v561 = vrot.slane %v161, %v560
    %v562 = vlaneseq
    %v563 = vshrl.u32 %v562, 7
    %v564 = vsub.s32 6, %v563
    %v565 = vrot.slane %v162, %v564
    %v566 = vmul.f32 %v85, %v561
    %v567 = vmul.f32 %v86, %v565
    %v568 = vmul.f32 %v87, %v561
    %v569 = vmul.f32 %v88, %v565
    %v570 = vmul.f32 %v129, %v561
    %v571 = vmul.f32 %v130, %v565
    %v572 = vmul.f32 %v131, %v561
    %v573 = vmul.f32 %v132, %v565
    %v582 = vrot.slane %v566, 2
    %v583 = vrot.slane %v568, 2
    %v584 = vsel %vm405, %v582, %v583
    %v585 = vrot.slane %v567, 2
    %v586 = vrot.slane %v569, 2
    %v587 = vsel %vm405, %v585, %v586
    %v588 = vrot.slane %v570, 2
    %v589 = vrot.slane %v572, 2
    %v590 = vsel %vm405, %v588, %v589
    %v591 = vrot.slane %v571, 2
    %v592 = vrot.slane %v573, 2
    %v593 = vsel %vm405, %v591, %v592
    %v598 = vadd.f32 %v554, %v584
    %v599 = vadd.f32 %v555, %v587
    %v600 = vadd.f32 %v556, %v590
    %v601 = vadd.f32 %v557, %v593
    %v602 = vlaneseq
    %v603 = vshrl.u32 %v602, 7
    %v604 = vsub.s32 3, %v603
    %v605 = vrot.slane %v157, %v604
    %v606 = vlaneseq
    %v607 = vshrl.u32 %v606, 7
    %v608 = vsub.s32 3, %v607
    %v609 = vrot.slane %v158, %v608
    %v610 = vmul.f32 %v69, %v605
    %v611 = vmul.f32 %v70, %v609
    %v612 = vmul.f32 %v71, %v605
    %v613 = vmul.f32 %v72, %v609
    %v614 = vmul.f32 %v113, %v605
    %v615 = vmul.f32 %v114, %v609
    %v616 = vmul.f32 %v115, %v605
    %v617 = vmul.f32 %v116, %v609
    %vm626 = vcmask 1044480
    %v627 = vrot.slane %v610, 3
    %v628 = vrot.slane %v612, 3
    %v629 = vsel %vm626, %v627, %v628
    %v630 = vrot.slane %v611, 3
    %v631 = vrot.slane %v613, 3
    %v632 = vsel %vm626, %v630, %v631
    %v633 = vrot.slane %v614, 3
    %v634 = vrot.slane %v616, 3
    %v635 = vsel %vm626, %v633, %v634
    %v636 = vrot.slane %v615, 3
    %v637 = vrot.slane %v617, 3
    %v638 = vsel %vm626, %v636, %v637
    %v643 = vadd.f32 %v598, %v629
    %v644 = vadd.f32 %v599, %v632
    %v645 = vadd.f32 %v600, %v635
    %v646 = vadd.f32 %v601, %v638
    %v647 = vlaneseq
    %v648 = vshrl.u32 %v647, 7
    %v649 = vsub.s32 0, %v648
    %v650 = vrot.slane %v159, %v649
    %v651 = vlaneseq
    %v652 = vshrl.u32 %v651, 7
    %v653 = vsub.s32 0, %v652
    %v654 = vrot.slane %v160, %v653
    %v655 = vmul.f32 %v73, %v650
    %v656 = vmul.f32 %v74, %v654
    %v657 = vmul.f32 %v75, %v650
    %v658 = vmul.f32 %v76, %v654
    %v659 = vmul.f32 %v117, %v650
    %v660 = vmul.f32 %v118, %v654
    %v661 = vmul.f32 %v119, %v650
    %v662 = vmul.f32 %v120, %v654
    %v671 = vrot.slane %v655, 3
    %v672 = vrot.slane %v657, 3
    %v673 = vsel %vm626, %v671, %v672
    %v674 = vrot.slane %v656, 3
    %v675 = vrot.slane %v658, 3
    %v676 = vsel %vm626, %v674, %v675
    %v677 = vrot.slane %v659, 3
    %v678 = vrot.slane %v661, 3
    %v679 = vsel %vm626, %v677, %v678
    %v680 = vrot.slane %v660, 3
    %v681 = vrot.slane %v662, 3
    %v682 = vsel %vm626, %v680, %v681
    %v687 = vadd.f32 %v643, %v673
    %v688 = vadd.f32 %v644, %v676
    %v689 = vadd.f32 %v645, %v679
    %v690 = vadd.f32 %v646, %v682
    %v691 = vlaneseq
    %v692 = vshrl.u32 %v691, 7
    %v693 = vsub.s32 5, %v692
    %v694 = vrot.slane %v159, %v693
    %v695 = vlaneseq
    %v696 = vshrl.u32 %v695, 7
    %v697 = vsub.s32 5, %v696
    %v698 = vrot.slane %v160, %v697
    %v699 = vmul.f32 %v77, %v694
    %v700 = vmul.f32 %v78, %v698
    %v701 = vmul.f32 %v79, %v694
    %v702 = vmul.f32 %v80, %v698
    %v703 = vmul.f32 %v121, %v694
    %v704 = vmul.f32 %v122, %v698
    %v705 = vmul.f32 %v123, %v694
    %v706 = vmul.f32 %v124, %v698
    %v715 = vrot.slane %v699, 3
    %v716 = vrot.slane %v701, 3
    %v717 = vsel %vm626, %v715, %v716
    %v718 = vrot.slane %v700, 3
    %v719 = vrot.slane %v702, 3
    %v720 = vsel %vm626, %v718, %v719
    %v721 = vrot.slane %v703, 3
    %v722 = vrot.slane %v705, 3
    %v723 = vsel %vm626, %v721, %v722
    %v724 = vrot.slane %v704, 3
    %v725 = vrot.slane %v706, 3
    %v726 = vsel %vm626, %v724, %v725
    %v731 = vadd.f32 %v687, %v717
    %v732 = vadd.f32 %v688, %v720
    %v733 = vadd.f32 %v689, %v723
    %v734 = vadd.f32 %v690, %v726
    %v735 = vlaneseq
    %v736 = vshrl.u32 %v735, 7
    %v737 = vsub.s32 2, %v736
    %v738 = vrot.slane %v161, %v737
    %v739 = vlaneseq
    %v740 = vshrl.u32 %v739, 7
    %v741 = vsub.s32 2, %v740
    %v742 = vrot.slane %v162, %v741
    %v743 = vmul.f32 %v81, %v738
    %v744 = vmul.f32 %v82, %v742
    %v745 = vmul.f32 %v83, %v738
    %v746 = vmul.f32 %v84, %v742
    %v747 = vmul.f32 %v125, %v738
    %v748 = vmul.f32 %v126, %v742
    %v749 = vmul.f32 %v127, %v738
    %v750 = vmul.f32 %v128, %v742
    %v759 = vrot.slane %v743, 3
    %v760 = vrot.slane %v745, 3
    %v761 = vsel %vm626, %v759, %v760
    %v762 = vrot.slane %v744, 3
    %v763 = vrot.slane %v746, 3
    %v764 = vsel %vm626, %v762, %v763
    %v765 = vrot.slane %v747, 3
    %v766 = vrot.slane %v749, 3
    %v767 = vsel %vm626, %v765, %v766
    %v768 = vrot.slane %v748, 3
    %v769 = vrot.slane %v750, 3
    %v770 = vsel %vm626, %v768, %v769
    %v775 = vadd.f32 %v731, %v761
    %v776 = vadd.f32 %v732, %v764
    %v777 = vadd.f32 %v733, %v767
    %v778 = vadd.f32 %v734, %v770
    %v779 = vlaneseq
    %v780 = vshrl.u32 %v779, 7
    %v781 = vsub.s32 7, %v780
    %v782 = vrot.slane %v161, %v781
    %v783 = vlaneseq
    %v784 = vshrl.u32 %v783, 7
    %v785 = vsub.s32 7, %v784
    %v786 = vrot.slane %v162, %v785
    %v787 = vmul.f32 %v85, %v782
    %v788 = vmul.f32 %v86, %v786
    %v789 = vmul.f32 %v87, %v782
    %v790 = vmul.f32 %v88, %v786
    %v791 = vmul.f32 %v129, %v782
    %v792 = vmul.f32 %v130, %v786
    %v793 = vmul.f32 %v131, %v782
    %v794 = vmul.f32 %v132, %v786
    %v803 = vrot.slane %v787, 3
    %v804 = vrot.slane %v789, 3
    %v805 = vsel %vm626, %v803, %v804
    %v806 = vrot.slane %v788, 3
    %v807 = vrot.slane %v790, 3
    %v808 = vsel %vm626, %v806, %v807
    %v809 = vrot.slane %v791, 3
    %v810 = vrot.slane %v793, 3
    %v811 = vsel %vm626, %v809, %v810
    %v812 = vrot.slane %v792, 3
    %v813 = vrot.slane %v794, 3
    %v814 = vsel %vm626, %v812, %v813
    %v819 = vadd.f32 %v775, %v805
    %v820 = vadd.f32 %v776, %v808
    %v821 = vadd.f32 %v777, %v811
    %v822 = vadd.f32 %v778, %v814
    %v823 = vlaneseq
    %v824 = vshrl.u32 %v823, 7
    %v825 = vsub.s32 4, %v824
    %v826 = vrot.slane %v157, %v825
    %v827 = vlaneseq
    %v828 = vshrl.u32 %v827, 7
    %v829 = vsub.s32 4, %v828
    %v830 = vrot.slane %v158, %v829
    %v831 = vmul.f32 %v69, %v826
    %v832 = vmul.f32 %v70, %v830
    %v833 = vmul.f32 %v71, %v826
    %v834 = vmul.f32 %v72, %v830
    %v835 = vmul.f32 %v113, %v826
    %v836 = vmul.f32 %v114, %v830
    %v837 = vmul.f32 %v115, %v826
    %v838 = vmul.f32 %v116, %v830
    %vm847 = vcmask 1043456
    %v848 = vrot.slane %v831, 4
    %v849 = vrot.slane %v833, 4
    %v850 = vsel %vm847, %v848, %v849
    %v851 = vrot.slane %v832, 4
    %v852 = vrot.slane %v834, 4
    %v853 = vsel %vm847, %v851, %v852
    %v854 = vrot.slane %v835, 4
    %v855 = vrot.slane %v837, 4
    %v856 = vsel %vm847, %v854, %v855
    %v857 = vrot.slane %v836, 4
    %v858 = vrot.slane %v838, 4
    %v859 = vsel %vm847, %v857, %v858
    %v864 = vadd.f32 %v819, %v850
    %v865 = vadd.f32 %v820, %v853
    %v866 = vadd.f32 %v821, %v856
    %v867 = vadd.f32 %v822, %v859
    %v868 = vlaneseq
    %v869 = vshrl.u32 %v868, 7
    %v870 = vsub.s32 1, %v869
    %v871 = vrot.slane %v159, %v870
    %v872 = vlaneseq
    %v873 = vshrl.u32 %v872, 7
    %v874 = vsub.s32 1, %v873
    %v875 = vrot.slane %v160, %v874
    %v876 = vmul.f32 %v73, %v871
    %v877 = vmul.f32 %v74, %v875
    %v878 = vmul.f32 %v75, %v871
    %v879 = vmul.f32 %v76, %v875
    %v880 = vmul.f32 %v117, %v871
    %v881 = vmul.f32 %v118, %v875
    %v882 = vmul.f32 %v119, %v871
    %v883 = vmul.f32 %v120, %v875
    %v892 = vrot.slane %v876, 4
    %v893 = vrot.slane %v878, 4
    %v894 = vsel %vm847, %v892, %v893
    %v895 = vrot.slane %v877, 4
    %v896 = vrot.slane %v879, 4
    %v897 = vsel %vm847, %v895, %v896
    %v898 = vrot.slane %v880, 4
    %v899 = vrot.slane %v882, 4
    %v900 = vsel %vm847, %v898, %v899
    %v901 = vrot.slane %v881, 4
    %v902 = vrot.slane %v883, 4
    %v903 = vsel %vm847, %v901, %v902
    %v908 = vadd.f32 %v864, %v894
    %v909 = vadd.f32 %v865, %v897
    %v910 = vadd.f32 %v866, %v900
    %v911 = vadd.f32 %v867, %v903
    %v912 = vlaneseq
    %v913 = vshrl.u32 %v912, 7
    %v914 = vsub.s32 6, %v913
    %v915 = vrot.slane %v159, %v914
    %v916 = vlaneseq
    %v917 = vshrl.u32 %v916, 7
    %v918 = vsub.s32 6, %v917
    %v919 = vrot.slane %v160, %v918
    %v920 = vmul.f32 %v77, %v915
    %v921 = vmul.f32 %v78, %v919
    %v922 = vmul.f32 %v79, %v915
    %v923 = vmul.f32 %v80, %v919
    %v924 = vmul.f32 %v121, %v915
    %v925 = vmul.f32 %v122, %v919
    %v926 = vmul.f32 %v123, %v915
    %v927 = vmul.f32 %v124, %v919
    %v936 = vrot.slane %v920, 4
    %v937 = vrot.slane %v922, 4
    %v938 = vsel %vm847, %v936, %v937
    %v939 = vrot.slane %v921, 4
    %v940 = vrot.slane %v923, 4
    %v941 = vsel %vm847, %v939, %v940
    %v942 = vrot.slane %v924, 4
    %v943 = vrot.slane %v926, 4
    %v944 = vsel %vm847, %v942, %v943
    %v945 = vrot.slane %v925, 4
    %v946 = vrot.slane %v927, 4
    %v947 = vsel %vm847, %v945, %v946
    %v952 = vadd.f32 %v908, %v938
    %v953 = vadd.f32 %v909, %v941
    %v954 = vadd.f32 %v910, %v944
    %v955 = vadd.f32 %v911, %v947
    %v956 = vlaneseq
    %v957 = vshrl.u32 %v956, 7
    %v958 = vsub.s32 3, %v957
    %v959 = vrot.slane %v161, %v958
    %v960 = vlaneseq
    %v961 = vshrl.u32 %v960, 7
    %v962 = vsub.s32 3, %v961
    %v963 = vrot.slane %v162, %v962
    %v964 = vmul.f32 %v81, %v959
    %v965 = vmul.f32 %v82, %v963
    %v966 = vmul.f32 %v83, %v959
    %v967 = vmul.f32 %v84, %v963
    %v968 = vmul.f32 %v125, %v959
    %v969 = vmul.f32 %v126, %v963
    %v970 = vmul.f32 %v127, %v959
    %v971 = vmul.f32 %v128, %v963
    %v980 = vrot.slane %v964, 4
    %v981 = vrot.slane %v966, 4
    %v982 = vsel %vm847, %v980, %v981
    %v983 = vrot.slane %v965, 4
    %v984 = vrot.slane %v967, 4
    %v985 = vsel %vm847, %v983, %v984
    %v986 = vrot.slane %v968, 4
    %v987 = vrot.slane %v970, 4
    %v988 = vsel %vm847, %v986, %v987
    %v989 = vrot.slane %v969, 4
    %v990 = vrot.slane %v971, 4
    %v991 = vsel %vm847, %v989, %v990
    %v996 = vadd.f32 %v952, %v982
    %v997 = vadd.f32 %v953, %v985
    %v998 = vadd.f32 %v954, %v988
    %v999 = vadd.f32 %v955, %v991
    %v1000 = vlaneseq
    %v1001 = vshrl.u32 %v1000, 7
    %v1002 = vsub.s32 0, %v1001
    %v1003 = vrot.slane %v163, %v1002
    %v1004 = vlaneseq
    %v1005 = vshrl.u32 %v1004, 7
    %v1006 = vsub.s32 0, %v1005
    %v1007 = vrot.slane %v164, %v1006
    %v1008 = vmul.f32 %v85, %v1003
    %v1009 = vmul.f32 %v86, %v1007
    %v1010 = vmul.f32 %v87, %v1003
    %v1011 = vmul.f32 %v88, %v1007
    %v1012 = vmul.f32 %v129, %v1003
    %v1013 = vmul.f32 %v130, %v1007
    %v1014 = vmul.f32 %v131, %v1003
    %v1015 = vmul.f32 %v132, %v1007
    %v1024 = vrot.slane %v1008, 4
    %v1025 = vrot.slane %v1010, 4
    %v1026 = vsel %vm847, %v1024, %v1025
    %v1027 = vrot.slane %v1009, 4
    %v1028 = vrot.slane %v1011, 4
    %v1029 = vsel %vm847, %v1027, %v1028
    %v1030 = vrot.slane %v1012, 4
    %v1031 = vrot.slane %v1014, 4
    %v1032 = vsel %vm847, %v1030, %v1031
    %v1033 = vrot.slane %v1013, 4
    %v1034 = vrot.slane %v1015, 4
    %v1035 = vsel %vm847, %v1033, %v1034
    %v1040 = vadd.f32 %v996, %v1026
    %v1041 = vadd.f32 %v997, %v1029
    %v1042 = vadd.f32 %v998, %v1032
    %v1043 = vadd.f32 %v999, %v1035
    %1044 = vst [vmem:[#allocation2] sm:$0x7f] %v1040
    %1045 = vst [vmem:[#allocation2 + $0x8] sm:$0x7f] %v1041
    %1046 = vst [vmem:[#allocation2 + $0x70] sm:$0x7f] %v1042
    %1047 = vst [vmem:[#allocation2 + $0x78] sm:$0x7f] %v1043
    %v1048 = vadd.f32 %v1040, 0.0
    %v1049 = vadd.f32 %v1041, 0.0
    %v1050 = vadd.f32 %v1042, 0.0
    %v1051 = vadd.f32 %v1043, 0.0
    %v1052 = vmul.f32 %v1040, %v1040
    %v1053 = vmul.f32 %v1041, %v1041
    %v1054 = vmul.f32 %v1042, %v1042
    %v1055 = vmul.f32 %v1043, %v1043
    %v1056 = vadd.f32 %v1052, 0.0
    %v1057 = vadd.f32 %v1053, 0.0
    %v1058 = vadd.f32 %v1054, 0.0
    %v1059 = vadd.f32 %v1055, 0.0
    %v1060 = vmul.f32 %v73, %v168
    %v1061 = vmul.f32 %v74, %v172
    %v1062 = vmul.f32 %v117, %v168
    %v1063 = vmul.f32 %v118, %v172
    %v1064 = vmul.f32 %v77, %v180
    %v1065 = vmul.f32 %v78, %v184
    %v1066 = vmul.f32 %v121, %v180
    %v1067 = vmul.f32 %v122, %v184
    %v1068 = vadd.f32 %v1060, %v1064
    %v1069 = vadd.f32 %v1061, %v1065
    %v1070 = vadd.f32 %v1062, %v1066
    %v1071 = vadd.f32 %v1063, %v1067
    %v1072 = vmul.f32 %v81, %v196
    %v1073 = vmul.f32 %v82, %v200
    %v1074 = vmul.f32 %v125, %v196
    %v1075 = vmul.f32 %v126, %v200
    %v1076 = vadd.f32 %v1068, %v1072
    %v1077 = vadd.f32 %v1069, %v1073
    %v1078 = vadd.f32 %v1070, %v1074
    %v1079 = vadd.f32 %v1071, %v1075
    %v1080 = vmul.f32 %v85, %v212
    %v1081 = vmul.f32 %v86, %v216
    %v1082 = vmul.f32 %v129, %v212
    %v1083 = vmul.f32 %v130, %v216
    %v1084 = vadd.f32 %v1076, %v1080
    %v1085 = vadd.f32 %v1077, %v1081
    %v1086 = vadd.f32 %v1078, %v1082
    %v1087 = vadd.f32 %v1079, %v1083
    %v1088 = vmul.f32 %v89, %v228
    %v1089 = vmul.f32 %v90, %v232
    %v1090 = vmul.f32 %v133, %v228
    %v1091 = vmul.f32 %v134, %v232
    %v1092 = vadd.f32 %v1084, %v1088
    %v1093 = vadd.f32 %v1085, %v1089
    %v1094 = vadd.f32 %v1086, %v1090
    %v1095 = vadd.f32 %v1087, %v1091
    %v1096 = vmul.f32 %v73, %v244
    %v1097 = vmul.f32 %v74, %v248
    %v1098 = vmul.f32 %v117, %v244
    %v1099 = vmul.f32 %v118, %v248
    %v1104 = vrot.slane %v1096, 1
    %v1105 = vrot.slane %v1097, 1
    %v1106 = vrot.slane %v1098, 1
    %v1107 = vrot.slane %v1099, 1
    %v1112 = vadd.f32 %v1092, %v1104
    %v1113 = vadd.f32 %v1093, %v1105
    %v1114 = vadd.f32 %v1094, %v1106
    %v1115 = vadd.f32 %v1095, %v1107
    %v1116 = vmul.f32 %v77, %v272
    %v1117 = vmul.f32 %v78, %v276
    %v1118 = vmul.f32 %v121, %v272
    %v1119 = vmul.f32 %v122, %v276
    %v1124 = vrot.slane %v1116, 1
    %v1125 = vrot.slane %v1117, 1
    %v1126 = vrot.slane %v1118, 1
    %v1127 = vrot.slane %v1119, 1
    %v1132 = vadd.f32 %v1112, %v1124
    %v1133 = vadd.f32 %v1113, %v1125
    %v1134 = vadd.f32 %v1114, %v1126
    %v1135 = vadd.f32 %v1115, %v1127
    %v1136 = vmul.f32 %v81, %v300
    %v1137 = vmul.f32 %v82, %v304
    %v1138 = vmul.f32 %v125, %v300
    %v1139 = vmul.f32 %v126, %v304
    %v1144 = vrot.slane %v1136, 1
    %v1145 = vrot.slane %v1137, 1
    %v1146 = vrot.slane %v1138, 1
    %v1147 = vrot.slane %v1139, 1
    %v1152 = vadd.f32 %v1132, %v1144
    %v1153 = vadd.f32 %v1133, %v1145
    %v1154 = vadd.f32 %v1134, %v1146
    %v1155 = vadd.f32 %v1135, %v1147
    %v1156 = vmul.f32 %v85, %v328
    %v1157 = vmul.f32 %v86, %v332
    %v1158 = vmul.f32 %v129, %v328
    %v1159 = vmul.f32 %v130, %v332
    %v1164 = vrot.slane %v1156, 1
    %v1165 = vrot.slane %v1157, 1
    %v1166 = vrot.slane %v1158, 1
    %v1167 = vrot.slane %v1159, 1
    %v1172 = vadd.f32 %v1152, %v1164
    %v1173 = vadd.f32 %v1153, %v1165
    %v1174 = vadd.f32 %v1154, %v1166
    %v1175 = vadd.f32 %v1155, %v1167
    %v1176 = vmul.f32 %v89, %v356
    %v1177 = vmul.f32 %v90, %v360
    %v1178 = vmul.f32 %v133, %v356
    %v1179 = vmul.f32 %v134, %v360
    %v1184 = vrot.slane %v1176, 1
    %v1185 = vrot.slane %v1177, 1
    %v1186 = vrot.slane %v1178, 1
    %v1187 = vrot.slane %v1179, 1
    %v1192 = vadd.f32 %v1172, %v1184
    %v1193 = vadd.f32 %v1173, %v1185
    %v1194 = vadd.f32 %v1174, %v1186
    %v1195 = vadd.f32 %v1175, %v1187
    %v1196 = vmul.f32 %v73, %v384
    %v1197 = vmul.f32 %v74, %v388
    %v1198 = vmul.f32 %v75, %v384
    %v1199 = vmul.f32 %v76, %v388
    %v1200 = vmul.f32 %v117, %v384
    %v1201 = vmul.f32 %v118, %v388
    %v1202 = vmul.f32 %v119, %v384
    %v1203 = vmul.f32 %v120, %v388
    %v1212 = vrot.slane %v1196, 2
    %v1213 = vrot.slane %v1198, 2
    %v1214 = vsel %vm405, %v1212, %v1213
    %v1215 = vrot.slane %v1197, 2
    %v1216 = vrot.slane %v1199, 2
    %v1217 = vsel %vm405, %v1215, %v1216
    %v1218 = vrot.slane %v1200, 2
    %v1219 = vrot.slane %v1202, 2
    %v1220 = vsel %vm405, %v1218, %v1219
    %v1221 = vrot.slane %v1201, 2
    %v1222 = vrot.slane %v1203, 2
    %v1223 = vsel %vm405, %v1221, %v1222
    %v1228 = vadd.f32 %v1192, %v1214
    %v1229 = vadd.f32 %v1193, %v1217
    %v1230 = vadd.f32 %v1194, %v1220
    %v1231 = vadd.f32 %v1195, %v1223
    %v1232 = vmul.f32 %v77, %v429
    %v1233 = vmul.f32 %v78, %v433
    %v1234 = vmul.f32 %v79, %v429
    %v1235 = vmul.f32 %v80, %v433
    %v1236 = vmul.f32 %v121, %v429
    %v1237 = vmul.f32 %v122, %v433
    %v1238 = vmul.f32 %v123, %v429
    %v1239 = vmul.f32 %v124, %v433
    %v1248 = vrot.slane %v1232, 2
    %v1249 = vrot.slane %v1234, 2
    %v1250 = vsel %vm405, %v1248, %v1249
    %v1251 = vrot.slane %v1233, 2
    %v1252 = vrot.slane %v1235, 2
    %v1253 = vsel %vm405, %v1251, %v1252
    %v1254 = vrot.slane %v1236, 2
    %v1255 = vrot.slane %v1238, 2
    %v1256 = vsel %vm405, %v1254, %v1255
    %v1257 = vrot.slane %v1237, 2
    %v1258 = vrot.slane %v1239, 2
    %v1259 = vsel %vm405, %v1257, %v1258
    %v1264 = vadd.f32 %v1228, %v1250
    %v1265 = vadd.f32 %v1229, %v1253
    %v1266 = vadd.f32 %v1230, %v1256
    %v1267 = vadd.f32 %v1231, %v1259
    %v1268 = vmul.f32 %v81, %v473
    %v1269 = vmul.f32 %v82, %v477
    %v1270 = vmul.f32 %v83, %v473
    %v1271 = vmul.f32 %v84, %v477
    %v1272 = vmul.f32 %v125, %v473
    %v1273 = vmul.f32 %v126, %v477
    %v1274 = vmul.f32 %v127, %v473
    %v1275 = vmul.f32 %v128, %v477
    %v1284 = vrot.slane %v1268, 2
    %v1285 = vrot.slane %v1270, 2
    %v1286 = vsel %vm405, %v1284, %v1285
    %v1287 = vrot.slane %v1269, 2
    %v1288 = vrot.slane %v1271, 2
    %v1289 = vsel %vm405, %v1287, %v1288
    %v1290 = vrot.slane %v1272, 2
    %v1291 = vrot.slane %v1274, 2
    %v1292 = vsel %vm405, %v1290, %v1291
    %v1293 = vrot.slane %v1273, 2
    %v1294 = vrot.slane %v1275, 2
    %v1295 = vsel %vm405, %v1293, %v1294
    %v1300 = vadd.f32 %v1264, %v1286
    %v1301 = vadd.f32 %v1265, %v1289
    %v1302 = vadd.f32 %v1266, %v1292
    %v1303 = vadd.f32 %v1267, %v1295
    %v1304 = vmul.f32 %v85, %v517
    %v1305 = vmul.f32 %v86, %v521
    %v1306 = vmul.f32 %v87, %v517
    %v1307 = vmul.f32 %v88, %v521
    %v1308 = vmul.f32 %v129, %v517
    %v1309 = vmul.f32 %v130, %v521
    %v1310 = vmul.f32 %v131, %v517
    %v1311 = vmul.f32 %v132, %v521
    %v1320 = vrot.slane %v1304, 2
    %v1321 = vrot.slane %v1306, 2
    %v1322 = vsel %vm405, %v1320, %v1321
    %v1323 = vrot.slane %v1305, 2
    %v1324 = vrot.slane %v1307, 2
    %v1325 = vsel %vm405, %v1323, %v1324
    %v1326 = vrot.slane %v1308, 2
    %v1327 = vrot.slane %v1310, 2
    %v1328 = vsel %vm405, %v1326, %v1327
    %v1329 = vrot.slane %v1309, 2
    %v1330 = vrot.slane %v1311, 2
    %v1331 = vsel %vm405, %v1329, %v1330
    %v1336 = vadd.f32 %v1300, %v1322
    %v1337 = vadd.f32 %v1301, %v1325
    %v1338 = vadd.f32 %v1302, %v1328
    %v1339 = vadd.f32 %v1303, %v1331
    %v1340 = vmul.f32 %v89, %v561
    %v1341 = vmul.f32 %v90, %v565
    %v1342 = vmul.f32 %v91, %v561
    %v1343 = vmul.f32 %v92, %v565
    %v1344 = vmul.f32 %v133, %v561
    %v1345 = vmul.f32 %v134, %v565
    %v1346 = vmul.f32 %v135, %v561
    %v1347 = vmul.f32 %v136, %v565
    %v1356 = vrot.slane %v1340, 2
    %v1357 = vrot.slane %v1342, 2
    %v1358 = vsel %vm405, %v1356, %v1357
    %v1359 = vrot.slane %v1341, 2
    %v1360 = vrot.slane %v1343, 2
    %v1361 = vsel %vm405, %v1359, %v1360
    %v1362 = vrot.slane %v1344, 2
    %v1363 = vrot.slane %v1346, 2
    %v1364 = vsel %vm405, %v1362, %v1363
    %v1365 = vrot.slane %v1345, 2
    %v1366 = vrot.slane %v1347, 2
    %v1367 = vsel %vm405, %v1365, %v1366
    %v1372 = vadd.f32 %v1336, %v1358
    %v1373 = vadd.f32 %v1337, %v1361
    %v1374 = vadd.f32 %v1338, %v1364
    %v1375 = vadd.f32 %v1339, %v1367
    %v1376 = vmul.f32 %v73, %v605
    %v1377 = vmul.f32 %v74, %v609
    %v1378 = vmul.f32 %v75, %v605
    %v1379 = vmul.f32 %v76, %v609
    %v1380 = vmul.f32 %v117, %v605
    %v1381 = vmul.f32 %v118, %v609
    %v1382 = vmul.f32 %v119, %v605
    %v1383 = vmul.f32 %v120, %v609
    %v1392 = vrot.slane %v1376, 3
    %v1393 = vrot.slane %v1378, 3
    %v1394 = vsel %vm626, %v1392, %v1393
    %v1395 = vrot.slane %v1377, 3
    %v1396 = vrot.slane %v1379, 3
    %v1397 = vsel %vm626, %v1395, %v1396
    %v1398 = vrot.slane %v1380, 3
    %v1399 = vrot.slane %v1382, 3
    %v1400 = vsel %vm626, %v1398, %v1399
    %v1401 = vrot.slane %v1381, 3
    %v1402 = vrot.slane %v1383, 3
    %v1403 = vsel %vm626, %v1401, %v1402
    %v1408 = vadd.f32 %v1372, %v1394
    %v1409 = vadd.f32 %v1373, %v1397
    %v1410 = vadd.f32 %v1374, %v1400
    %v1411 = vadd.f32 %v1375, %v1403
    %v1412 = vmul.f32 %v77, %v650
    %v1413 = vmul.f32 %v78, %v654
    %v1414 = vmul.f32 %v79, %v650
    %v1415 = vmul.f32 %v80, %v654
    %v1416 = vmul.f32 %v121, %v650
    %v1417 = vmul.f32 %v122, %v654
    %v1418 = vmul.f32 %v123, %v650
    %v1419 = vmul.f32 %v124, %v654
    %v1428 = vrot.slane %v1412, 3
    %v1429 = vrot.slane %v1414, 3
    %v1430 = vsel %vm626, %v1428, %v1429
    %v1431 = vrot.slane %v1413, 3
    %v1432 = vrot.slane %v1415, 3
    %v1433 = vsel %vm626, %v1431, %v1432
    %v1434 = vrot.slane %v1416, 3
    %v1435 = vrot.slane %v1418, 3
    %v1436 = vsel %vm626, %v1434, %v1435
    %v1437 = vrot.slane %v1417, 3
    %v1438 = vrot.slane %v1419, 3
    %v1439 = vsel %vm626, %v1437, %v1438
    %v1444 = vadd.f32 %v1408, %v1430
    %v1445 = vadd.f32 %v1409, %v1433
    %v1446 = vadd.f32 %v1410, %v1436
    %v1447 = vadd.f32 %v1411, %v1439
    %v1448 = vmul.f32 %v81, %v694
    %v1449 = vmul.f32 %v82, %v698
    %v1450 = vmul.f32 %v83, %v694
    %v1451 = vmul.f32 %v84, %v698
    %v1452 = vmul.f32 %v125, %v694
    %v1453 = vmul.f32 %v126, %v698
    %v1454 = vmul.f32 %v127, %v694
    %v1455 = vmul.f32 %v128, %v698
    %v1464 = vrot.slane %v1448, 3
    %v1465 = vrot.slane %v1450, 3
    %v1466 = vsel %vm626, %v1464, %v1465
    %v1467 = vrot.slane %v1449, 3
    %v1468 = vrot.slane %v1451, 3
    %v1469 = vsel %vm626, %v1467, %v1468
    %v1470 = vrot.slane %v1452, 3
    %v1471 = vrot.slane %v1454, 3
    %v1472 = vsel %vm626, %v1470, %v1471
    %v1473 = vrot.slane %v1453, 3
    %v1474 = vrot.slane %v1455, 3
    %v1475 = vsel %vm626, %v1473, %v1474
    %v1480 = vadd.f32 %v1444, %v1466
    %v1481 = vadd.f32 %v1445, %v1469
    %v1482 = vadd.f32 %v1446, %v1472
    %v1483 = vadd.f32 %v1447, %v1475
    %v1484 = vmul.f32 %v85, %v738
    %v1485 = vmul.f32 %v86, %v742
    %v1486 = vmul.f32 %v87, %v738
    %v1487 = vmul.f32 %v88, %v742
    %v1488 = vmul.f32 %v129, %v738
    %v1489 = vmul.f32 %v130, %v742
    %v1490 = vmul.f32 %v131, %v738
    %v1491 = vmul.f32 %v132, %v742
    %v1500 = vrot.slane %v1484, 3
    %v1501 = vrot.slane %v1486, 3
    %v1502 = vsel %vm626, %v1500, %v1501
    %v1503 = vrot.slane %v1485, 3
    %v1504 = vrot.slane %v1487, 3
    %v1505 = vsel %vm626, %v1503, %v1504
    %v1506 = vrot.slane %v1488, 3
    %v1507 = vrot.slane %v1490, 3
    %v1508 = vsel %vm626, %v1506, %v1507
    %v1509 = vrot.slane %v1489, 3
    %v1510 = vrot.slane %v1491, 3
    %v1511 = vsel %vm626, %v1509, %v1510
    %v1516 = vadd.f32 %v1480, %v1502
    %v1517 = vadd.f32 %v1481, %v1505
    %v1518 = vadd.f32 %v1482, %v1508
    %v1519 = vadd.f32 %v1483, %v1511
    %v1520 = vmul.f32 %v89, %v782
    %v1521 = vmul.f32 %v90, %v786
    %v1522 = vmul.f32 %v91, %v782
    %v1523 = vmul.f32 %v92, %v786
    %v1524 = vmul.f32 %v133, %v782
    %v1525 = vmul.f32 %v134, %v786
    %v1526 = vmul.f32 %v135, %v782
    %v1527 = vmul.f32 %v136, %v786
    %v1536 = vrot.slane %v1520, 3
    %v1537 = vrot.slane %v1522, 3
    %v1538 = vsel %vm626, %v1536, %v1537
    %v1539 = vrot.slane %v1521, 3
    %v1540 = vrot.slane %v1523, 3
    %v1541 = vsel %vm626, %v1539, %v1540
    %v1542 = vrot.slane %v1524, 3
    %v1543 = vrot.slane %v1526, 3
    %v1544 = vsel %vm626, %v1542, %v1543
    %v1545 = vrot.slane %v1525, 3
    %v1546 = vrot.slane %v1527, 3
    %v1547 = vsel %vm626, %v1545, %v1546
    %v1552 = vadd.f32 %v1516, %v1538
    %v1553 = vadd.f32 %v1517, %v1541
    %v1554 = vadd.f32 %v1518, %v1544
    %v1555 = vadd.f32 %v1519, %v1547
    %v1556 = vmul.f32 %v73, %v826
    %v1557 = vmul.f32 %v74, %v830
    %v1558 = vmul.f32 %v75, %v826
    %v1559 = vmul.f32 %v76, %v830
    %v1560 = vmul.f32 %v117, %v826
    %v1561 = vmul.f32 %v118, %v830
    %v1562 = vmul.f32 %v119, %v826
    %v1563 = vmul.f32 %v120, %v830
    %v1572 = vrot.slane %v1556, 4
    %v1573 = vrot.slane %v1558, 4
    %v1574 = vsel %vm847, %v1572, %v1573
    %v1575 = vrot.slane %v1557, 4
    %v1576 = vrot.slane %v1559, 4
    %v1577 = vsel %vm847, %v1575, %v1576
    %v1578 = vrot.slane %v1560, 4
    %v1579 = vrot.slane %v1562, 4
    %v1580 = vsel %vm847, %v1578, %v1579
    %v1581 = vrot.slane %v1561, 4
    %v1582 = vrot.slane %v1563, 4
    %v1583 = vsel %vm847, %v1581, %v1582
    %v1588 = vadd.f32 %v1552, %v1574
    %v1589 = vadd.f32 %v1553, %v1577
    %v1590 = vadd.f32 %v1554, %v1580
    %v1591 = vadd.f32 %v1555, %v1583
    %v1592 = vmul.f32 %v77, %v871
    %v1593 = vmul.f32 %v78, %v875
    %v1594 = vmul.f32 %v79, %v871
    %v1595 = vmul.f32 %v80, %v875
    %v1596 = vmul.f32 %v121, %v871
    %v1597 = vmul.f32 %v122, %v875
    %v1598 = vmul.f32 %v123, %v871
    %v1599 = vmul.f32 %v124, %v875
    %v1608 = vrot.slane %v1592, 4
    %v1609 = vrot.slane %v1594, 4
    %v1610 = vsel %vm847, %v1608, %v1609
    %v1611 = vrot.slane %v1593, 4
    %v1612 = vrot.slane %v1595, 4
    %v1613 = vsel %vm847, %v1611, %v1612
    %v1614 = vrot.slane %v1596, 4
    %v1615 = vrot.slane %v1598, 4
    %v1616 = vsel %vm847, %v1614, %v1615
    %v1617 = vrot.slane %v1597, 4
    %v1618 = vrot.slane %v1599, 4
    %v1619 = vsel %vm847, %v1617, %v1618
    %v1624 = vadd.f32 %v1588, %v1610
    %v1625 = vadd.f32 %v1589, %v1613
    %v1626 = vadd.f32 %v1590, %v1616
    %v1627 = vadd.f32 %v1591, %v1619
    %v1628 = vmul.f32 %v81, %v915
    %v1629 = vmul.f32 %v82, %v919
    %v1630 = vmul.f32 %v83, %v915
    %v1631 = vmul.f32 %v84, %v919
    %v1632 = vmul.f32 %v125, %v915
    %v1633 = vmul.f32 %v126, %v919
    %v1634 = vmul.f32 %v127, %v915
    %v1635 = vmul.f32 %v128, %v919
    %v1644 = vrot.slane %v1628, 4
    %v1645 = vrot.slane %v1630, 4
    %v1646 = vsel %vm847, %v1644, %v1645
    %v1647 = vrot.slane %v1629, 4
    %v1648 = vrot.slane %v1631, 4
    %v1649 = vsel %vm847, %v1647, %v1648
    %v1650 = vrot.slane %v1632, 4
    %v1651 = vrot.slane %v1634, 4
    %v1652 = vsel %vm847, %v1650, %v1651
    %v1653 = vrot.slane %v1633, 4
    %v1654 = vrot.slane %v1635, 4
    %v1655 = vsel %vm847, %v1653, %v1654
    %v1660 = vadd.f32 %v1624, %v1646
    %v1661 = vadd.f32 %v1625, %v1649
    %v1662 = vadd.f32 %v1626, %v1652
    %v1663 = vadd.f32 %v1627, %v1655
    %v1664 = vmul.f32 %v85, %v959
    %v1665 = vmul.f32 %v86, %v963
    %v1666 = vmul.f32 %v87, %v959
    %v1667 = vmul.f32 %v88, %v963
    %v1668 = vmul.f32 %v129, %v959
    %v1669 = vmul.f32 %v130, %v963
    %v1670 = vmul.f32 %v131, %v959
    %v1671 = vmul.f32 %v132, %v963
    %v1680 = vrot.slane %v1664, 4
    %v1681 = vrot.slane %v1666, 4
    %v1682 = vsel %vm847, %v1680, %v1681
    %v1683 = vrot.slane %v1665, 4
    %v1684 = vrot.slane %v1667, 4
    %v1685 = vsel %vm847, %v1683, %v1684
    %v1686 = vrot.slane %v1668, 4
    %v1687 = vrot.slane %v1670, 4
    %v1688 = vsel %vm847, %v1686, %v1687
    %v1689 = vrot.slane %v1669, 4
    %v1690 = vrot.slane %v1671, 4
    %v1691 = vsel %vm847, %v1689, %v1690
    %v1696 = vadd.f32 %v1660, %v1682
    %v1697 = vadd.f32 %v1661, %v1685
    %v1698 = vadd.f32 %v1662, %v1688
    %v1699 = vadd.f32 %v1663, %v1691
    %v1700 = vmul.f32 %v89, %v1003
    %v1701 = vmul.f32 %v90, %v1007
    %v1702 = vmul.f32 %v91, %v1003
    %v1703 = vmul.f32 %v92, %v1007
    %v1704 = vmul.f32 %v133, %v1003
    %v1705 = vmul.f32 %v134, %v1007
    %v1706 = vmul.f32 %v135, %v1003
    %v1707 = vmul.f32 %v136, %v1007
    %v1716 = vrot.slane %v1700, 4
    %v1717 = vrot.slane %v1702, 4
    %v1718 = vsel %vm847, %v1716, %v1717
    %v1719 = vrot.slane %v1701, 4
    %v1720 = vrot.slane %v1703, 4
    %v1721 = vsel %vm847, %v1719, %v1720
    %v1722 = vrot.slane %v1704, 4
    %v1723 = vrot.slane %v1706, 4
    %v1724 = vsel %vm847, %v1722, %v1723
    %v1725 = vrot.slane %v1705, 4
    %v1726 = vrot.slane %v1707, 4
    %v1727 = vsel %vm847, %v1725, %v1726
    %v1732 = vadd.f32 %v1696, %v1718
    %v1733 = vadd.f32 %v1697, %v1721
    %v1734 = vadd.f32 %v1698, %v1724
    %v1735 = vadd.f32 %v1699, %v1727
    %s1736 = scalar_lea.vmem [#allocation2], 16
    %1737 = vst [vmem:[%s1736] sm:$0x7f] %v1732
    %1738 = vst [vmem:[%s1736 + $0x8] sm:$0x7f] %v1733
    %1739 = vst [vmem:[%s1736 + $0x70] sm:$0x7f] %v1734
    %1740 = vst [vmem:[%s1736 + $0x78] sm:$0x7f] %v1735
    %v1741 = vadd.f32 %v1048, %v1732
    %v1742 = vadd.f32 %v1049, %v1733
    %v1743 = vadd.f32 %v1050, %v1734
    %v1744 = vadd.f32 %v1051, %v1735
    %v1745 = vmul.f32 %v1732, %v1732
    %v1746 = vmul.f32 %v1733, %v1733
    %v1747 = vmul.f32 %v1734, %v1734
    %v1748 = vmul.f32 %v1735, %v1735
    %v1749 = vadd.f32 %v1056, %v1745
    %v1750 = vadd.f32 %v1057, %v1746
    %v1751 = vadd.f32 %v1058, %v1747
    %v1752 = vadd.f32 %v1059, %v1748
    %v1753 = vmul.f32 %v77, %v168
    %v1754 = vmul.f32 %v78, %v172
    %v1755 = vmul.f32 %v121, %v168
    %v1756 = vmul.f32 %v122, %v172
    %v1757 = vmul.f32 %v81, %v180
    %v1758 = vmul.f32 %v82, %v184
    %v1759 = vmul.f32 %v125, %v180
    %v1760 = vmul.f32 %v126, %v184
    %v1761 = vadd.f32 %v1753, %v1757
    %v1762 = vadd.f32 %v1754, %v1758
    %v1763 = vadd.f32 %v1755, %v1759
    %v1764 = vadd.f32 %v1756, %v1760
    %v1765 = vmul.f32 %v85, %v196
    %v1766 = vmul.f32 %v86, %v200
    %v1767 = vmul.f32 %v129, %v196
    %v1768 = vmul.f32 %v130, %v200
    %v1769 = vadd.f32 %v1761, %v1765
    %v1770 = vadd.f32 %v1762, %v1766
    %v1771 = vadd.f32 %v1763, %v1767
    %v1772 = vadd.f32 %v1764, %v1768
    %v1773 = vmul.f32 %v89, %v212
    %v1774 = vmul.f32 %v90, %v216
    %v1775 = vmul.f32 %v133, %v212
    %v1776 = vmul.f32 %v134, %v216
    %v1777 = vadd.f32 %v1769, %v1773
    %v1778 = vadd.f32 %v1770, %v1774
    %v1779 = vadd.f32 %v1771, %v1775
    %v1780 = vadd.f32 %v1772, %v1776
    %v1781 = vmul.f32 %v93, %v228
    %v1782 = vmul.f32 %v94, %v232
    %v1783 = vmul.f32 %v137, %v228
    %v1784 = vmul.f32 %v138, %v232
    %v1785 = vadd.f32 %v1777, %v1781
    %v1786 = vadd.f32 %v1778, %v1782
    %v1787 = vadd.f32 %v1779, %v1783
    %v1788 = vadd.f32 %v1780, %v1784
    %v1789 = vmul.f32 %v77, %v244
    %v1790 = vmul.f32 %v78, %v248
    %v1791 = vmul.f32 %v121, %v244
    %v1792 = vmul.f32 %v122, %v248
    %v1797 = vrot.slane %v1789, 1
    %v1798 = vrot.slane %v1790, 1
    %v1799 = vrot.slane %v1791, 1
    %v1800 = vrot.slane %v1792, 1
    %v1805 = vadd.f32 %v1785, %v1797
    %v1806 = vadd.f32 %v1786, %v1798
    %v1807 = vadd.f32 %v1787, %v1799
    %v1808 = vadd.f32 %v1788, %v1800
    %v1809 = vmul.f32 %v81, %v272
    %v1810 = vmul.f32 %v82, %v276
    %v1811 = vmul.f32 %v125, %v272
    %v1812 = vmul.f32 %v126, %v276
    %v1817 = vrot.slane %v1809, 1
    %v1818 = vrot.slane %v1810, 1
    %v1819 = vrot.slane %v1811, 1
    %v1820 = vrot.slane %v1812, 1
    %v1825 = vadd.f32 %v1805, %v1817
    %v1826 = vadd.f32 %v1806, %v1818
    %v1827 = vadd.f32 %v1807, %v1819
    %v1828 = vadd.f32 %v1808, %v1820
    %v1829 = vmul.f32 %v85, %v300
    %v1830 = vmul.f32 %v86, %v304
    %v1831 = vmul.f32 %v129, %v300
    %v1832 = vmul.f32 %v130, %v304
    %v1837 = vrot.slane %v1829, 1
    %v1838 = vrot.slane %v1830, 1
    %v1839 = vrot.slane %v1831, 1
    %v1840 = vrot.slane %v1832, 1
    %v1845 = vadd.f32 %v1825, %v1837
    %v1846 = vadd.f32 %v1826, %v1838
    %v1847 = vadd.f32 %v1827, %v1839
    %v1848 = vadd.f32 %v1828, %v1840
    %v1849 = vmul.f32 %v89, %v328
    %v1850 = vmul.f32 %v90, %v332
    %v1851 = vmul.f32 %v133, %v328
    %v1852 = vmul.f32 %v134, %v332
    %v1857 = vrot.slane %v1849, 1
    %v1858 = vrot.slane %v1850, 1
    %v1859 = vrot.slane %v1851, 1
    %v1860 = vrot.slane %v1852, 1
    %v1865 = vadd.f32 %v1845, %v1857
    %v1866 = vadd.f32 %v1846, %v1858
    %v1867 = vadd.f32 %v1847, %v1859
    %v1868 = vadd.f32 %v1848, %v1860
    %v1869 = vmul.f32 %v93, %v356
    %v1870 = vmul.f32 %v94, %v360
    %v1871 = vmul.f32 %v137, %v356
    %v1872 = vmul.f32 %v138, %v360
    %v1877 = vrot.slane %v1869, 1
    %v1878 = vrot.slane %v1870, 1
    %v1879 = vrot.slane %v1871, 1
    %v1880 = vrot.slane %v1872, 1
    %v1885 = vadd.f32 %v1865, %v1877
    %v1886 = vadd.f32 %v1866, %v1878
    %v1887 = vadd.f32 %v1867, %v1879
    %v1888 = vadd.f32 %v1868, %v1880
    %v1889 = vmul.f32 %v77, %v384
    %v1890 = vmul.f32 %v78, %v388
    %v1891 = vmul.f32 %v79, %v384
    %v1892 = vmul.f32 %v80, %v388
    %v1893 = vmul.f32 %v121, %v384
    %v1894 = vmul.f32 %v122, %v388
    %v1895 = vmul.f32 %v123, %v384
    %v1896 = vmul.f32 %v124, %v388
    %v1905 = vrot.slane %v1889, 2
    %v1906 = vrot.slane %v1891, 2
    %v1907 = vsel %vm405, %v1905, %v1906
    %v1908 = vrot.slane %v1890, 2
    %v1909 = vrot.slane %v1892, 2
    %v1910 = vsel %vm405, %v1908, %v1909
    %v1911 = vrot.slane %v1893, 2
    %v1912 = vrot.slane %v1895, 2
    %v1913 = vsel %vm405, %v1911, %v1912
    %v1914 = vrot.slane %v1894, 2
    %v1915 = vrot.slane %v1896, 2
    %v1916 = vsel %vm405, %v1914, %v1915
    %v1921 = vadd.f32 %v1885, %v1907
    %v1922 = vadd.f32 %v1886, %v1910
    %v1923 = vadd.f32 %v1887, %v1913
    %v1924 = vadd.f32 %v1888, %v1916
    %v1925 = vmul.f32 %v81, %v429
    %v1926 = vmul.f32 %v82, %v433
    %v1927 = vmul.f32 %v83, %v429
    %v1928 = vmul.f32 %v84, %v433
    %v1929 = vmul.f32 %v125, %v429
    %v1930 = vmul.f32 %v126, %v433
    %v1931 = vmul.f32 %v127, %v429
    %v1932 = vmul.f32 %v128, %v433
    %v1941 = vrot.slane %v1925, 2
    %v1942 = vrot.slane %v1927, 2
    %v1943 = vsel %vm405, %v1941, %v1942
    %v1944 = vrot.slane %v1926, 2
    %v1945 = vrot.slane %v1928, 2
    %v1946 = vsel %vm405, %v1944, %v1945
    %v1947 = vrot.slane %v1929, 2
    %v1948 = vrot.slane %v1931, 2
    %v1949 = vsel %vm405, %v1947, %v1948
    %v1950 = vrot.slane %v1930, 2
    %v1951 = vrot.slane %v1932, 2
    %v1952 = vsel %vm405, %v1950, %v1951
    %v1957 = vadd.f32 %v1921, %v1943
    %v1958 = vadd.f32 %v1922, %v1946
    %v1959 = vadd.f32 %v1923, %v1949
    %v1960 = vadd.f32 %v1924, %v1952
    %v1961 = vmul.f32 %v85, %v473
    %v1962 = vmul.f32 %v86, %v477
    %v1963 = vmul.f32 %v87, %v473
    %v1964 = vmul.f32 %v88, %v477
    %v1965 = vmul.f32 %v129, %v473
    %v1966 = vmul.f32 %v130, %v477
    %v1967 = vmul.f32 %v131, %v473
    %v1968 = vmul.f32 %v132, %v477
    %v1977 = vrot.slane %v1961, 2
    %v1978 = vrot.slane %v1963, 2
    %v1979 = vsel %vm405, %v1977, %v1978
    %v1980 = vrot.slane %v1962, 2
    %v1981 = vrot.slane %v1964, 2
    %v1982 = vsel %vm405, %v1980, %v1981
    %v1983 = vrot.slane %v1965, 2
    %v1984 = vrot.slane %v1967, 2
    %v1985 = vsel %vm405, %v1983, %v1984
    %v1986 = vrot.slane %v1966, 2
    %v1987 = vrot.slane %v1968, 2
    %v1988 = vsel %vm405, %v1986, %v1987
    %v1993 = vadd.f32 %v1957, %v1979
    %v1994 = vadd.f32 %v1958, %v1982
    %v1995 = vadd.f32 %v1959, %v1985
    %v1996 = vadd.f32 %v1960, %v1988
    %v1997 = vmul.f32 %v89, %v517
    %v1998 = vmul.f32 %v90, %v521
    %v1999 = vmul.f32 %v91, %v517
    %v2000 = vmul.f32 %v92, %v521
    %v2001 = vmul.f32 %v133, %v517
    %v2002 = vmul.f32 %v134, %v521
    %v2003 = vmul.f32 %v135, %v517
    %v2004 = vmul.f32 %v136, %v521
    %v2013 = vrot.slane %v1997, 2
    %v2014 = vrot.slane %v1999, 2
    %v2015 = vsel %vm405, %v2013, %v2014
    %v2016 = vrot.slane %v1998, 2
    %v2017 = vrot.slane %v2000, 2
    %v2018 = vsel %vm405, %v2016, %v2017
    %v2019 = vrot.slane %v2001, 2
    %v2020 = vrot.slane %v2003, 2
    %v2021 = vsel %vm405, %v2019, %v2020
    %v2022 = vrot.slane %v2002, 2
    %v2023 = vrot.slane %v2004, 2
    %v2024 = vsel %vm405, %v2022, %v2023
    %v2029 = vadd.f32 %v1993, %v2015
    %v2030 = vadd.f32 %v1994, %v2018
    %v2031 = vadd.f32 %v1995, %v2021
    %v2032 = vadd.f32 %v1996, %v2024
    %v2033 = vmul.f32 %v93, %v561
    %v2034 = vmul.f32 %v94, %v565
    %v2035 = vmul.f32 %v95, %v561
    %v2036 = vmul.f32 %v96, %v565
    %v2037 = vmul.f32 %v137, %v561
    %v2038 = vmul.f32 %v138, %v565
    %v2039 = vmul.f32 %v139, %v561
    %v2040 = vmul.f32 %v140, %v565
    %v2049 = vrot.slane %v2033, 2
    %v2050 = vrot.slane %v2035, 2
    %v2051 = vsel %vm405, %v2049, %v2050
    %v2052 = vrot.slane %v2034, 2
    %v2053 = vrot.slane %v2036, 2
    %v2054 = vsel %vm405, %v2052, %v2053
    %v2055 = vrot.slane %v2037, 2
    %v2056 = vrot.slane %v2039, 2
    %v2057 = vsel %vm405, %v2055, %v2056
    %v2058 = vrot.slane %v2038, 2
    %v2059 = vrot.slane %v2040, 2
    %v2060 = vsel %vm405, %v2058, %v2059
    %v2065 = vadd.f32 %v2029, %v2051
    %v2066 = vadd.f32 %v2030, %v2054
    %v2067 = vadd.f32 %v2031, %v2057
    %v2068 = vadd.f32 %v2032, %v2060
    %v2069 = vmul.f32 %v77, %v605
    %v2070 = vmul.f32 %v78, %v609
    %v2071 = vmul.f32 %v79, %v605
    %v2072 = vmul.f32 %v80, %v609
    %v2073 = vmul.f32 %v121, %v605
    %v2074 = vmul.f32 %v122, %v609
    %v2075 = vmul.f32 %v123, %v605
    %v2076 = vmul.f32 %v124, %v609
    %v2085 = vrot.slane %v2069, 3
    %v2086 = vrot.slane %v2071, 3
    %v2087 = vsel %vm626, %v2085, %v2086
    %v2088 = vrot.slane %v2070, 3
    %v2089 = vrot.slane %v2072, 3
    %v2090 = vsel %vm626, %v2088, %v2089
    %v2091 = vrot.slane %v2073, 3
    %v2092 = vrot.slane %v2075, 3
    %v2093 = vsel %vm626, %v2091, %v2092
    %v2094 = vrot.slane %v2074, 3
    %v2095 = vrot.slane %v2076, 3
    %v2096 = vsel %vm626, %v2094, %v2095
    %v2101 = vadd.f32 %v2065, %v2087
    %v2102 = vadd.f32 %v2066, %v2090
    %v2103 = vadd.f32 %v2067, %v2093
    %v2104 = vadd.f32 %v2068, %v2096
    %v2105 = vmul.f32 %v81, %v650
    %v2106 = vmul.f32 %v82, %v654
    %v2107 = vmul.f32 %v83, %v650
    %v2108 = vmul.f32 %v84, %v654
    %v2109 = vmul.f32 %v125, %v650
    %v2110 = vmul.f32 %v126, %v654
    %v2111 = vmul.f32 %v127, %v650
    %v2112 = vmul.f32 %v128, %v654
    %v2121 = vrot.slane %v2105, 3
    %v2122 = vrot.slane %v2107, 3
    %v2123 = vsel %vm626, %v2121, %v2122
    %v2124 = vrot.slane %v2106, 3
    %v2125 = vrot.slane %v2108, 3
    %v2126 = vsel %vm626, %v2124, %v2125
    %v2127 = vrot.slane %v2109, 3
    %v2128 = vrot.slane %v2111, 3
    %v2129 = vsel %vm626, %v2127, %v2128
    %v2130 = vrot.slane %v2110, 3
    %v2131 = vrot.slane %v2112, 3
    %v2132 = vsel %vm626, %v2130, %v2131
    %v2137 = vadd.f32 %v2101, %v2123
    %v2138 = vadd.f32 %v2102, %v2126
    %v2139 = vadd.f32 %v2103, %v2129
    %v2140 = vadd.f32 %v2104, %v2132
    %v2141 = vmul.f32 %v85, %v694
    %v2142 = vmul.f32 %v86, %v698
    %v2143 = vmul.f32 %v87, %v694
    %v2144 = vmul.f32 %v88, %v698
    %v2145 = vmul.f32 %v129, %v694
    %v2146 = vmul.f32 %v130, %v698
    %v2147 = vmul.f32 %v131, %v694
    %v2148 = vmul.f32 %v132, %v698
    %v2157 = vrot.slane %v2141, 3
    %v2158 = vrot.slane %v2143, 3
    %v2159 = vsel %vm626, %v2157, %v2158
    %v2160 = vrot.slane %v2142, 3
    %v2161 = vrot.slane %v2144, 3
    %v2162 = vsel %vm626, %v2160, %v2161
    %v2163 = vrot.slane %v2145, 3
    %v2164 = vrot.slane %v2147, 3
    %v2165 = vsel %vm626, %v2163, %v2164
    %v2166 = vrot.slane %v2146, 3
    %v2167 = vrot.slane %v2148, 3
    %v2168 = vsel %vm626, %v2166, %v2167
    %v2173 = vadd.f32 %v2137, %v2159
    %v2174 = vadd.f32 %v2138, %v2162
    %v2175 = vadd.f32 %v2139, %v2165
    %v2176 = vadd.f32 %v2140, %v2168
    %v2177 = vmul.f32 %v89, %v738
    %v2178 = vmul.f32 %v90, %v742
    %v2179 = vmul.f32 %v91, %v738
    %v2180 = vmul.f32 %v92, %v742
    %v2181 = vmul.f32 %v133, %v738
    %v2182 = vmul.f32 %v134, %v742
    %v2183 = vmul.f32 %v135, %v738
    %v2184 = vmul.f32 %v136, %v742
    %v2193 = vrot.slane %v2177, 3
    %v2194 = vrot.slane %v2179, 3
    %v2195 = vsel %vm626, %v2193, %v2194
    %v2196 = vrot.slane %v2178, 3
    %v2197 = vrot.slane %v2180, 3
    %v2198 = vsel %vm626, %v2196, %v2197
    %v2199 = vrot.slane %v2181, 3
    %v2200 = vrot.slane %v2183, 3
    %v2201 = vsel %vm626, %v2199, %v2200
    %v2202 = vrot.slane %v2182, 3
    %v2203 = vrot.slane %v2184, 3
    %v2204 = vsel %vm626, %v2202, %v2203
    %v2209 = vadd.f32 %v2173, %v2195
    %v2210 = vadd.f32 %v2174, %v2198
    %v2211 = vadd.f32 %v2175, %v2201
    %v2212 = vadd.f32 %v2176, %v2204
    %v2213 = vmul.f32 %v93, %v782
    %v2214 = vmul.f32 %v94, %v786
    %v2215 = vmul.f32 %v95, %v782
    %v2216 = vmul.f32 %v96, %v786
    %v2217 = vmul.f32 %v137, %v782
    %v2218 = vmul.f32 %v138, %v786
    %v2219 = vmul.f32 %v139, %v782
    %v2220 = vmul.f32 %v140, %v786
    %v2229 = vrot.slane %v2213, 3
    %v2230 = vrot.slane %v2215, 3
    %v2231 = vsel %vm626, %v2229, %v2230
    %v2232 = vrot.slane %v2214, 3
    %v2233 = vrot.slane %v2216, 3
    %v2234 = vsel %vm626, %v2232, %v2233
    %v2235 = vrot.slane %v2217, 3
    %v2236 = vrot.slane %v2219, 3
    %v2237 = vsel %vm626, %v2235, %v2236
    %v2238 = vrot.slane %v2218, 3
    %v2239 = vrot.slane %v2220, 3
    %v2240 = vsel %vm626, %v2238, %v2239
    %v2245 = vadd.f32 %v2209, %v2231
    %v2246 = vadd.f32 %v2210, %v2234
    %v2247 = vadd.f32 %v2211, %v2237
    %v2248 = vadd.f32 %v2212, %v2240
    %v2249 = vmul.f32 %v77, %v826
    %v2250 = vmul.f32 %v78, %v830
    %v2251 = vmul.f32 %v79, %v826
    %v2252 = vmul.f32 %v80, %v830
    %v2253 = vmul.f32 %v121, %v826
    %v2254 = vmul.f32 %v122, %v830
    %v2255 = vmul.f32 %v123, %v826
    %v2256 = vmul.f32 %v124, %v830
    %v2265 = vrot.slane %v2249, 4
    %v2266 = vrot.slane %v2251, 4
    %v2267 = vsel %vm847, %v2265, %v2266
    %v2268 = vrot.slane %v2250, 4
    %v2269 = vrot.slane %v2252, 4
    %v2270 = vsel %vm847, %v2268, %v2269
    %v2271 = vrot.slane %v2253, 4
    %v2272 = vrot.slane %v2255, 4
    %v2273 = vsel %vm847, %v2271, %v2272
    %v2274 = vrot.slane %v2254, 4
    %v2275 = vrot.slane %v2256, 4
    %v2276 = vsel %vm847, %v2274, %v2275
    %v2281 = vadd.f32 %v2245, %v2267
    %v2282 = vadd.f32 %v2246, %v2270
    %v2283 = vadd.f32 %v2247, %v2273
    %v2284 = vadd.f32 %v2248, %v2276
    %v2285 = vmul.f32 %v81, %v871
    %v2286 = vmul.f32 %v82, %v875
    %v2287 = vmul.f32 %v83, %v871
    %v2288 = vmul.f32 %v84, %v875
    %v2289 = vmul.f32 %v125, %v871
    %v2290 = vmul.f32 %v126, %v875
    %v2291 = vmul.f32 %v127, %v871
    %v2292 = vmul.f32 %v128, %v875
    %v2301 = vrot.slane %v2285, 4
    %v2302 = vrot.slane %v2287, 4
    %v2303 = vsel %vm847, %v2301, %v2302
    %v2304 = vrot.slane %v2286, 4
    %v2305 = vrot.slane %v2288, 4
    %v2306 = vsel %vm847, %v2304, %v2305
    %v2307 = vrot.slane %v2289, 4
    %v2308 = vrot.slane %v2291, 4
    %v2309 = vsel %vm847, %v2307, %v2308
    %v2310 = vrot.slane %v2290, 4
    %v2311 = vrot.slane %v2292, 4
    %v2312 = vsel %vm847, %v2310, %v2311
    %v2317 = vadd.f32 %v2281, %v2303
    %v2318 = vadd.f32 %v2282, %v2306
    %v2319 = vadd.f32 %v2283, %v2309
    %v2320 = vadd.f32 %v2284, %v2312
    %v2321 = vmul.f32 %v85, %v915
    %v2322 = vmul.f32 %v86, %v919
    %v2323 = vmul.f32 %v87, %v915
    %v2324 = vmul.f32 %v88, %v919
    %v2325 = vmul.f32 %v129, %v915
    %v2326 = vmul.f32 %v130, %v919
    %v2327 = vmul.f32 %v131, %v915
    %v2328 = vmul.f32 %v132, %v919
    %v2337 = vrot.slane %v2321, 4
    %v2338 = vrot.slane %v2323, 4
    %v2339 = vsel %vm847, %v2337, %v2338
    %v2340 = vrot.slane %v2322, 4
    %v2341 = vrot.slane %v2324, 4
    %v2342 = vsel %vm847, %v2340, %v2341
    %v2343 = vrot.slane %v2325, 4
    %v2344 = vrot.slane %v2327, 4
    %v2345 = vsel %vm847, %v2343, %v2344
    %v2346 = vrot.slane %v2326, 4
    %v2347 = vrot.slane %v2328, 4
    %v2348 = vsel %vm847, %v2346, %v2347
    %v2353 = vadd.f32 %v2317, %v2339
    %v2354 = vadd.f32 %v2318, %v2342
    %v2355 = vadd.f32 %v2319, %v2345
    %v2356 = vadd.f32 %v2320, %v2348
    %v2357 = vmul.f32 %v89, %v959
    %v2358 = vmul.f32 %v90, %v963
    %v2359 = vmul.f32 %v91, %v959
    %v2360 = vmul.f32 %v92, %v963
    %v2361 = vmul.f32 %v133, %v959
    %v2362 = vmul.f32 %v134, %v963
    %v2363 = vmul.f32 %v135, %v959
    %v2364 = vmul.f32 %v136, %v963
    %v2373 = vrot.slane %v2357, 4
    %v2374 = vrot.slane %v2359, 4
    %v2375 = vsel %vm847, %v2373, %v2374
    %v2376 = vrot.slane %v2358, 4
    %v2377 = vrot.slane %v2360, 4
    %v2378 = vsel %vm847, %v2376, %v2377
    %v2379 = vrot.slane %v2361, 4
    %v2380 = vrot.slane %v2363, 4
    %v2381 = vsel %vm847, %v2379, %v2380
    %v2382 = vrot.slane %v2362, 4
    %v2383 = vrot.slane %v2364, 4
    %v2384 = vsel %vm847, %v2382, %v2383
    %v2389 = vadd.f32 %v2353, %v2375
    %v2390 = vadd.f32 %v2354, %v2378
    %v2391 = vadd.f32 %v2355, %v2381
    %v2392 = vadd.f32 %v2356, %v2384
    %v2393 = vmul.f32 %v93, %v1003
    %v2394 = vmul.f32 %v94, %v1007
    %v2395 = vmul.f32 %v95, %v1003
    %v2396 = vmul.f32 %v96, %v1007
    %v2397 = vmul.f32 %v137, %v1003
    %v2398 = vmul.f32 %v138, %v1007
    %v2399 = vmul.f32 %v139, %v1003
    %v2400 = vmul.f32 %v140, %v1007
    %v2409 = vrot.slane %v2393, 4
    %v2410 = vrot.slane %v2395, 4
    %v2411 = vsel %vm847, %v2409, %v2410
    %v2412 = vrot.slane %v2394, 4
    %v2413 = vrot.slane %v2396, 4
    %v2414 = vsel %vm847, %v2412, %v2413
    %v2415 = vrot.slane %v2397, 4
    %v2416 = vrot.slane %v2399, 4
    %v2417 = vsel %vm847, %v2415, %v2416
    %v2418 = vrot.slane %v2398, 4
    %v2419 = vrot.slane %v2400, 4
    %v2420 = vsel %vm847, %v2418, %v2419
    %v2425 = vadd.f32 %v2389, %v2411
    %v2426 = vadd.f32 %v2390, %v2414
    %v2427 = vadd.f32 %v2391, %v2417
    %v2428 = vadd.f32 %v2392, %v2420
    %s2429 = scalar_lea.vmem [#allocation2], 32
    %2430 = vst [vmem:[%s2429] sm:$0x7f] %v2425
    %2431 = vst [vmem:[%s2429 + $0x8] sm:$0x7f] %v2426
    %2432 = vst [vmem:[%s2429 + $0x70] sm:$0x7f] %v2427
    %2433 = vst [vmem:[%s2429 + $0x78] sm:$0x7f] %v2428
    %v2434 = vadd.f32 %v1741, %v2425
    %v2435 = vadd.f32 %v1742, %v2426
    %v2436 = vadd.f32 %v1743, %v2427
    %v2437 = vadd.f32 %v1744, %v2428
    %v2438 = vmul.f32 %v2425, %v2425
    %v2439 = vmul.f32 %v2426, %v2426
    %v2440 = vmul.f32 %v2427, %v2427
    %v2441 = vmul.f32 %v2428, %v2428
    %v2442 = vadd.f32 %v1749, %v2438
    %v2443 = vadd.f32 %v1750, %v2439
    %v2444 = vadd.f32 %v1751, %v2440
    %v2445 = vadd.f32 %v1752, %v2441
    %v2446 = vmul.f32 %v81, %v168
    %v2447 = vmul.f32 %v82, %v172
    %v2448 = vmul.f32 %v125, %v168
    %v2449 = vmul.f32 %v126, %v172
    %v2450 = vmul.f32 %v85, %v180
    %v2451 = vmul.f32 %v86, %v184
    %v2452 = vmul.f32 %v129, %v180
    %v2453 = vmul.f32 %v130, %v184
    %v2454 = vadd.f32 %v2446, %v2450
    %v2455 = vadd.f32 %v2447, %v2451
    %v2456 = vadd.f32 %v2448, %v2452
    %v2457 = vadd.f32 %v2449, %v2453
    %v2458 = vmul.f32 %v89, %v196
    %v2459 = vmul.f32 %v90, %v200
    %v2460 = vmul.f32 %v133, %v196
    %v2461 = vmul.f32 %v134, %v200
    %v2462 = vadd.f32 %v2454, %v2458
    %v2463 = vadd.f32 %v2455, %v2459
    %v2464 = vadd.f32 %v2456, %v2460
    %v2465 = vadd.f32 %v2457, %v2461
    %v2466 = vmul.f32 %v93, %v212
    %v2467 = vmul.f32 %v94, %v216
    %v2468 = vmul.f32 %v137, %v212
    %v2469 = vmul.f32 %v138, %v216
    %v2470 = vadd.f32 %v2462, %v2466
    %v2471 = vadd.f32 %v2463, %v2467
    %v2472 = vadd.f32 %v2464, %v2468
    %v2473 = vadd.f32 %v2465, %v2469
    %v2474 = vmul.f32 %v97, %v228
    %v2475 = vmul.f32 %v98, %v232
    %v2476 = vmul.f32 %v141, %v228
    %v2477 = vmul.f32 %v142, %v232
    %v2478 = vadd.f32 %v2470, %v2474
    %v2479 = vadd.f32 %v2471, %v2475
    %v2480 = vadd.f32 %v2472, %v2476
    %v2481 = vadd.f32 %v2473, %v2477
    %v2482 = vmul.f32 %v81, %v244
    %v2483 = vmul.f32 %v82, %v248
    %v2484 = vmul.f32 %v125, %v244
    %v2485 = vmul.f32 %v126, %v248
    %v2490 = vrot.slane %v2482, 1
    %v2491 = vrot.slane %v2483, 1
    %v2492 = vrot.slane %v2484, 1
    %v2493 = vrot.slane %v2485, 1
    %v2498 = vadd.f32 %v2478, %v2490
    %v2499 = vadd.f32 %v2479, %v2491
    %v2500 = vadd.f32 %v2480, %v2492
    %v2501 = vadd.f32 %v2481, %v2493
    %v2502 = vmul.f32 %v85, %v272
    %v2503 = vmul.f32 %v86, %v276
    %v2504 = vmul.f32 %v129, %v272
    %v2505 = vmul.f32 %v130, %v276
    %v2510 = vrot.slane %v2502, 1
    %v2511 = vrot.slane %v2503, 1
    %v2512 = vrot.slane %v2504, 1
    %v2513 = vrot.slane %v2505, 1
    %v2518 = vadd.f32 %v2498, %v2510
    %v2519 = vadd.f32 %v2499, %v2511
    %v2520 = vadd.f32 %v2500, %v2512
    %v2521 = vadd.f32 %v2501, %v2513
    %v2522 = vmul.f32 %v89, %v300
    %v2523 = vmul.f32 %v90, %v304
    %v2524 = vmul.f32 %v133, %v300
    %v2525 = vmul.f32 %v134, %v304
    %v2530 = vrot.slane %v2522, 1
    %v2531 = vrot.slane %v2523, 1
    %v2532 = vrot.slane %v2524, 1
    %v2533 = vrot.slane %v2525, 1
    %v2538 = vadd.f32 %v2518, %v2530
    %v2539 = vadd.f32 %v2519, %v2531
    %v2540 = vadd.f32 %v2520, %v2532
    %v2541 = vadd.f32 %v2521, %v2533
    %v2542 = vmul.f32 %v93, %v328
    %v2543 = vmul.f32 %v94, %v332
    %v2544 = vmul.f32 %v137, %v328
    %v2545 = vmul.f32 %v138, %v332
    %v2550 = vrot.slane %v2542, 1
    %v2551 = vrot.slane %v2543, 1
    %v2552 = vrot.slane %v2544, 1
    %v2553 = vrot.slane %v2545, 1
    %v2558 = vadd.f32 %v2538, %v2550
    %v2559 = vadd.f32 %v2539, %v2551
    %v2560 = vadd.f32 %v2540, %v2552
    %v2561 = vadd.f32 %v2541, %v2553
    %v2562 = vmul.f32 %v97, %v356
    %v2563 = vmul.f32 %v98, %v360
    %v2564 = vmul.f32 %v141, %v356
    %v2565 = vmul.f32 %v142, %v360
    %v2570 = vrot.slane %v2562, 1
    %v2571 = vrot.slane %v2563, 1
    %v2572 = vrot.slane %v2564, 1
    %v2573 = vrot.slane %v2565, 1
    %v2578 = vadd.f32 %v2558, %v2570
    %v2579 = vadd.f32 %v2559, %v2571
    %v2580 = vadd.f32 %v2560, %v2572
    %v2581 = vadd.f32 %v2561, %v2573
    %v2582 = vmul.f32 %v81, %v384
    %v2583 = vmul.f32 %v82, %v388
    %v2584 = vmul.f32 %v83, %v384
    %v2585 = vmul.f32 %v84, %v388
    %v2586 = vmul.f32 %v125, %v384
    %v2587 = vmul.f32 %v126, %v388
    %v2588 = vmul.f32 %v127, %v384
    %v2589 = vmul.f32 %v128, %v388
    %v2598 = vrot.slane %v2582, 2
    %v2599 = vrot.slane %v2584, 2
    %v2600 = vsel %vm405, %v2598, %v2599
    %v2601 = vrot.slane %v2583, 2
    %v2602 = vrot.slane %v2585, 2
    %v2603 = vsel %vm405, %v2601, %v2602
    %v2604 = vrot.slane %v2586, 2
    %v2605 = vrot.slane %v2588, 2
    %v2606 = vsel %vm405, %v2604, %v2605
    %v2607 = vrot.slane %v2587, 2
    %v2608 = vrot.slane %v2589, 2
    %v2609 = vsel %vm405, %v2607, %v2608
    %v2614 = vadd.f32 %v2578, %v2600
    %v2615 = vadd.f32 %v2579, %v2603
    %v2616 = vadd.f32 %v2580, %v2606
    %v2617 = vadd.f32 %v2581, %v2609
    %v2618 = vmul.f32 %v85, %v429
    %v2619 = vmul.f32 %v86, %v433
    %v2620 = vmul.f32 %v87, %v429
    %v2621 = vmul.f32 %v88, %v433
    %v2622 = vmul.f32 %v129, %v429
    %v2623 = vmul.f32 %v130, %v433
    %v2624 = vmul.f32 %v131, %v429
    %v2625 = vmul.f32 %v132, %v433
    %v2634 = vrot.slane %v2618, 2
    %v2635 = vrot.slane %v2620, 2
    %v2636 = vsel %vm405, %v2634, %v2635
    %v2637 = vrot.slane %v2619, 2
    %v2638 = vrot.slane %v2621, 2
    %v2639 = vsel %vm405, %v2637, %v2638
    %v2640 = vrot.slane %v2622, 2
    %v2641 = vrot.slane %v2624, 2
    %v2642 = vsel %vm405, %v2640, %v2641
    %v2643 = vrot.slane %v2623, 2
    %v2644 = vrot.slane %v2625, 2
    %v2645 = vsel %vm405, %v2643, %v2644
    %v2650 = vadd.f32 %v2614, %v2636
    %v2651 = vadd.f32 %v2615, %v2639
    %v2652 = vadd.f32 %v2616, %v2642
    %v2653 = vadd.f32 %v2617, %v2645
    %v2654 = vmul.f32 %v89, %v473
    %v2655 = vmul.f32 %v90, %v477
    %v2656 = vmul.f32 %v91, %v473
    %v2657 = vmul.f32 %v92, %v477
    %v2658 = vmul.f32 %v133, %v473
    %v2659 = vmul.f32 %v134, %v477
    %v2660 = vmul.f32 %v135, %v473
    %v2661 = vmul.f32 %v136, %v477
    %v2670 = vrot.slane %v2654, 2
    %v2671 = vrot.slane %v2656, 2
    %v2672 = vsel %vm405, %v2670, %v2671
    %v2673 = vrot.slane %v2655, 2
    %v2674 = vrot.slane %v2657, 2
    %v2675 = vsel %vm405, %v2673, %v2674
    %v2676 = vrot.slane %v2658, 2
    %v2677 = vrot.slane %v2660, 2
    %v2678 = vsel %vm405, %v2676, %v2677
    %v2679 = vrot.slane %v2659, 2
    %v2680 = vrot.slane %v2661, 2
    %v2681 = vsel %vm405, %v2679, %v2680
    %v2686 = vadd.f32 %v2650, %v2672
    %v2687 = vadd.f32 %v2651, %v2675
    %v2688 = vadd.f32 %v2652, %v2678
    %v2689 = vadd.f32 %v2653, %v2681
    %v2690 = vmul.f32 %v93, %v517
    %v2691 = vmul.f32 %v94, %v521
    %v2692 = vmul.f32 %v95, %v517
    %v2693 = vmul.f32 %v96, %v521
    %v2694 = vmul.f32 %v137, %v517
    %v2695 = vmul.f32 %v138, %v521
    %v2696 = vmul.f32 %v139, %v517
    %v2697 = vmul.f32 %v140, %v521
    %v2706 = vrot.slane %v2690, 2
    %v2707 = vrot.slane %v2692, 2
    %v2708 = vsel %vm405, %v2706, %v2707
    %v2709 = vrot.slane %v2691, 2
    %v2710 = vrot.slane %v2693, 2
    %v2711 = vsel %vm405, %v2709, %v2710
    %v2712 = vrot.slane %v2694, 2
    %v2713 = vrot.slane %v2696, 2
    %v2714 = vsel %vm405, %v2712, %v2713
    %v2715 = vrot.slane %v2695, 2
    %v2716 = vrot.slane %v2697, 2
    %v2717 = vsel %vm405, %v2715, %v2716
    %v2722 = vadd.f32 %v2686, %v2708
    %v2723 = vadd.f32 %v2687, %v2711
    %v2724 = vadd.f32 %v2688, %v2714
    %v2725 = vadd.f32 %v2689, %v2717
    %v2726 = vmul.f32 %v97, %v561
    %v2727 = vmul.f32 %v98, %v565
    %v2728 = vmul.f32 %v99, %v561
    %v2729 = vmul.f32 %v100, %v565
    %v2730 = vmul.f32 %v141, %v561
    %v2731 = vmul.f32 %v142, %v565
    %v2732 = vmul.f32 %v143, %v561
    %v2733 = vmul.f32 %v144, %v565
    %v2742 = vrot.slane %v2726, 2
    %v2743 = vrot.slane %v2728, 2
    %v2744 = vsel %vm405, %v2742, %v2743
    %v2745 = vrot.slane %v2727, 2
    %v2746 = vrot.slane %v2729, 2
    %v2747 = vsel %vm405, %v2745, %v2746
    %v2748 = vrot.slane %v2730, 2
    %v2749 = vrot.slane %v2732, 2
    %v2750 = vsel %vm405, %v2748, %v2749
    %v2751 = vrot.slane %v2731, 2
    %v2752 = vrot.slane %v2733, 2
    %v2753 = vsel %vm405, %v2751, %v2752
    %v2758 = vadd.f32 %v2722, %v2744
    %v2759 = vadd.f32 %v2723, %v2747
    %v2760 = vadd.f32 %v2724, %v2750
    %v2761 = vadd.f32 %v2725, %v2753
    %v2762 = vmul.f32 %v81, %v605
    %v2763 = vmul.f32 %v82, %v609
    %v2764 = vmul.f32 %v83, %v605
    %v2765 = vmul.f32 %v84, %v609
    %v2766 = vmul.f32 %v125, %v605
    %v2767 = vmul.f32 %v126, %v609
    %v2768 = vmul.f32 %v127, %v605
    %v2769 = vmul.f32 %v128, %v609
    %v2778 = vrot.slane %v2762, 3
    %v2779 = vrot.slane %v2764, 3
    %v2780 = vsel %vm626, %v2778, %v2779
    %v2781 = vrot.slane %v2763, 3
    %v2782 = vrot.slane %v2765, 3
    %v2783 = vsel %vm626, %v2781, %v2782
    %v2784 = vrot.slane %v2766, 3
    %v2785 = vrot.slane %v2768, 3
    %v2786 = vsel %vm626, %v2784, %v2785
    %v2787 = vrot.slane %v2767, 3
    %v2788 = vrot.slane %v2769, 3
    %v2789 = vsel %vm626, %v2787, %v2788
    %v2794 = vadd.f32 %v2758, %v2780
    %v2795 = vadd.f32 %v2759, %v2783
    %v2796 = vadd.f32 %v2760, %v2786
    %v2797 = vadd.f32 %v2761, %v2789
    %v2798 = vmul.f32 %v85, %v650
    %v2799 = vmul.f32 %v86, %v654
    %v2800 = vmul.f32 %v87, %v650
    %v2801 = vmul.f32 %v88, %v654
    %v2802 = vmul.f32 %v129, %v650
    %v2803 = vmul.f32 %v130, %v654
    %v2804 = vmul.f32 %v131, %v650
    %v2805 = vmul.f32 %v132, %v654
    %v2814 = vrot.slane %v2798, 3
    %v2815 = vrot.slane %v2800, 3
    %v2816 = vsel %vm626, %v2814, %v2815
    %v2817 = vrot.slane %v2799, 3
    %v2818 = vrot.slane %v2801, 3
    %v2819 = vsel %vm626, %v2817, %v2818
    %v2820 = vrot.slane %v2802, 3
    %v2821 = vrot.slane %v2804, 3
    %v2822 = vsel %vm626, %v2820, %v2821
    %v2823 = vrot.slane %v2803, 3
    %v2824 = vrot.slane %v2805, 3
    %v2825 = vsel %vm626, %v2823, %v2824
    %v2830 = vadd.f32 %v2794, %v2816
    %v2831 = vadd.f32 %v2795, %v2819
    %v2832 = vadd.f32 %v2796, %v2822
    %v2833 = vadd.f32 %v2797, %v2825
    %v2834 = vmul.f32 %v89, %v694
    %v2835 = vmul.f32 %v90, %v698
    %v2836 = vmul.f32 %v91, %v694
    %v2837 = vmul.f32 %v92, %v698
    %v2838 = vmul.f32 %v133, %v694
    %v2839 = vmul.f32 %v134, %v698
    %v2840 = vmul.f32 %v135, %v694
    %v2841 = vmul.f32 %v136, %v698
    %v2850 = vrot.slane %v2834, 3
    %v2851 = vrot.slane %v2836, 3
    %v2852 = vsel %vm626, %v2850, %v2851
    %v2853 = vrot.slane %v2835, 3
    %v2854 = vrot.slane %v2837, 3
    %v2855 = vsel %vm626, %v2853, %v2854
    %v2856 = vrot.slane %v2838, 3
    %v2857 = vrot.slane %v2840, 3
    %v2858 = vsel %vm626, %v2856, %v2857
    %v2859 = vrot.slane %v2839, 3
    %v2860 = vrot.slane %v2841, 3
    %v2861 = vsel %vm626, %v2859, %v2860
    %v2866 = vadd.f32 %v2830, %v2852
    %v2867 = vadd.f32 %v2831, %v2855
    %v2868 = vadd.f32 %v2832, %v2858
    %v2869 = vadd.f32 %v2833, %v2861
    %v2870 = vmul.f32 %v93, %v738
    %v2871 = vmul.f32 %v94, %v742
    %v2872 = vmul.f32 %v95, %v738
    %v2873 = vmul.f32 %v96, %v742
    %v2874 = vmul.f32 %v137, %v738
    %v2875 = vmul.f32 %v138, %v742
    %v2876 = vmul.f32 %v139, %v738
    %v2877 = vmul.f32 %v140, %v742
    %v2886 = vrot.slane %v2870, 3
    %v2887 = vrot.slane %v2872, 3
    %v2888 = vsel %vm626, %v2886, %v2887
    %v2889 = vrot.slane %v2871, 3
    %v2890 = vrot.slane %v2873, 3
    %v2891 = vsel %vm626, %v2889, %v2890
    %v2892 = vrot.slane %v2874, 3
    %v2893 = vrot.slane %v2876, 3
    %v2894 = vsel %vm626, %v2892, %v2893
    %v2895 = vrot.slane %v2875, 3
    %v2896 = vrot.slane %v2877, 3
    %v2897 = vsel %vm626, %v2895, %v2896
    %v2902 = vadd.f32 %v2866, %v2888
    %v2903 = vadd.f32 %v2867, %v2891
    %v2904 = vadd.f32 %v2868, %v2894
    %v2905 = vadd.f32 %v2869, %v2897
    %v2906 = vmul.f32 %v97, %v782
    %v2907 = vmul.f32 %v98, %v786
    %v2908 = vmul.f32 %v99, %v782
    %v2909 = vmul.f32 %v100, %v786
    %v2910 = vmul.f32 %v141, %v782
    %v2911 = vmul.f32 %v142, %v786
    %v2912 = vmul.f32 %v143, %v782
    %v2913 = vmul.f32 %v144, %v786
    %v2922 = vrot.slane %v2906, 3
    %v2923 = vrot.slane %v2908, 3
    %v2924 = vsel %vm626, %v2922, %v2923
    %v2925 = vrot.slane %v2907, 3
    %v2926 = vrot.slane %v2909, 3
    %v2927 = vsel %vm626, %v2925, %v2926
    %v2928 = vrot.slane %v2910, 3
    %v2929 = vrot.slane %v2912, 3
    %v2930 = vsel %vm626, %v2928, %v2929
    %v2931 = vrot.slane %v2911, 3
    %v2932 = vrot.slane %v2913, 3
    %v2933 = vsel %vm626, %v2931, %v2932
    %v2938 = vadd.f32 %v2902, %v2924
    %v2939 = vadd.f32 %v2903, %v2927
    %v2940 = vadd.f32 %v2904, %v2930
    %v2941 = vadd.f32 %v2905, %v2933
    %v2942 = vmul.f32 %v81, %v826
    %v2943 = vmul.f32 %v82, %v830
    %v2944 = vmul.f32 %v83, %v826
    %v2945 = vmul.f32 %v84, %v830
    %v2946 = vmul.f32 %v125, %v826
    %v2947 = vmul.f32 %v126, %v830
    %v2948 = vmul.f32 %v127, %v826
    %v2949 = vmul.f32 %v128, %v830
    %v2958 = vrot.slane %v2942, 4
    %v2959 = vrot.slane %v2944, 4
    %v2960 = vsel %vm847, %v2958, %v2959
    %v2961 = vrot.slane %v2943, 4
    %v2962 = vrot.slane %v2945, 4
    %v2963 = vsel %vm847, %v2961, %v2962
    %v2964 = vrot.slane %v2946, 4
    %v2965 = vrot.slane %v2948, 4
    %v2966 = vsel %vm847, %v2964, %v2965
    %v2967 = vrot.slane %v2947, 4
    %v2968 = vrot.slane %v2949, 4
    %v2969 = vsel %vm847, %v2967, %v2968
    %v2974 = vadd.f32 %v2938, %v2960
    %v2975 = vadd.f32 %v2939, %v2963
    %v2976 = vadd.f32 %v2940, %v2966
    %v2977 = vadd.f32 %v2941, %v2969
    %v2978 = vmul.f32 %v85, %v871
    %v2979 = vmul.f32 %v86, %v875
    %v2980 = vmul.f32 %v87, %v871
    %v2981 = vmul.f32 %v88, %v875
    %v2982 = vmul.f32 %v129, %v871
    %v2983 = vmul.f32 %v130, %v875
    %v2984 = vmul.f32 %v131, %v871
    %v2985 = vmul.f32 %v132, %v875
    %v2994 = vrot.slane %v2978, 4
    %v2995 = vrot.slane %v2980, 4
    %v2996 = vsel %vm847, %v2994, %v2995
    %v2997 = vrot.slane %v2979, 4
    %v2998 = vrot.slane %v2981, 4
    %v2999 = vsel %vm847, %v2997, %v2998
    %v3000 = vrot.slane %v2982, 4
    %v3001 = vrot.slane %v2984, 4
    %v3002 = vsel %vm847, %v3000, %v3001
    %v3003 = vrot.slane %v2983, 4
    %v3004 = vrot.slane %v2985, 4
    %v3005 = vsel %vm847, %v3003, %v3004
    %v3010 = vadd.f32 %v2974, %v2996
    %v3011 = vadd.f32 %v2975, %v2999
    %v3012 = vadd.f32 %v2976, %v3002
    %v3013 = vadd.f32 %v2977, %v3005
    %v3014 = vmul.f32 %v89, %v915
    %v3015 = vmul.f32 %v90, %v919
    %v3016 = vmul.f32 %v91, %v915
    %v3017 = vmul.f32 %v92, %v919
    %v3018 = vmul.f32 %v133, %v915
    %v3019 = vmul.f32 %v134, %v919
    %v3020 = vmul.f32 %v135, %v915
    %v3021 = vmul.f32 %v136, %v919
    %v3030 = vrot.slane %v3014, 4
    %v3031 = vrot.slane %v3016, 4
    %v3032 = vsel %vm847, %v3030, %v3031
    %v3033 = vrot.slane %v3015, 4
    %v3034 = vrot.slane %v3017, 4
    %v3035 = vsel %vm847, %v3033, %v3034
    %v3036 = vrot.slane %v3018, 4
    %v3037 = vrot.slane %v3020, 4
    %v3038 = vsel %vm847, %v3036, %v3037
    %v3039 = vrot.slane %v3019, 4
    %v3040 = vrot.slane %v3021, 4
    %v3041 = vsel %vm847, %v3039, %v3040
    %v3046 = vadd.f32 %v3010, %v3032
    %v3047 = vadd.f32 %v3011, %v3035
    %v3048 = vadd.f32 %v3012, %v3038
    %v3049 = vadd.f32 %v3013, %v3041
    %v3050 = vmul.f32 %v93, %v959
    %v3051 = vmul.f32 %v94, %v963
    %v3052 = vmul.f32 %v95, %v959
    %v3053 = vmul.f32 %v96, %v963
    %v3054 = vmul.f32 %v137, %v959
    %v3055 = vmul.f32 %v138, %v963
    %v3056 = vmul.f32 %v139, %v959
    %v3057 = vmul.f32 %v140, %v963
    %v3066 = vrot.slane %v3050, 4
    %v3067 = vrot.slane %v3052, 4
    %v3068 = vsel %vm847, %v3066, %v3067
    %v3069 = vrot.slane %v3051, 4
    %v3070 = vrot.slane %v3053, 4
    %v3071 = vsel %vm847, %v3069, %v3070
    %v3072 = vrot.slane %v3054, 4
    %v3073 = vrot.slane %v3056, 4
    %v3074 = vsel %vm847, %v3072, %v3073
    %v3075 = vrot.slane %v3055, 4
    %v3076 = vrot.slane %v3057, 4
    %v3077 = vsel %vm847, %v3075, %v3076
    %v3082 = vadd.f32 %v3046, %v3068
    %v3083 = vadd.f32 %v3047, %v3071
    %v3084 = vadd.f32 %v3048, %v3074
    %v3085 = vadd.f32 %v3049, %v3077
    %v3086 = vmul.f32 %v97, %v1003
    %v3087 = vmul.f32 %v98, %v1007
    %v3088 = vmul.f32 %v99, %v1003
    %v3089 = vmul.f32 %v100, %v1007
    %v3090 = vmul.f32 %v141, %v1003
    %v3091 = vmul.f32 %v142, %v1007
    %v3092 = vmul.f32 %v143, %v1003
    %v3093 = vmul.f32 %v144, %v1007
    %v3102 = vrot.slane %v3086, 4
    %v3103 = vrot.slane %v3088, 4
    %v3104 = vsel %vm847, %v3102, %v3103
    %v3105 = vrot.slane %v3087, 4
    %v3106 = vrot.slane %v3089, 4
    %v3107 = vsel %vm847, %v3105, %v3106
    %v3108 = vrot.slane %v3090, 4
    %v3109 = vrot.slane %v3092, 4
    %v3110 = vsel %vm847, %v3108, %v3109
    %v3111 = vrot.slane %v3091, 4
    %v3112 = vrot.slane %v3093, 4
    %v3113 = vsel %vm847, %v3111, %v3112
    %v3118 = vadd.f32 %v3082, %v3104
    %v3119 = vadd.f32 %v3083, %v3107
    %v3120 = vadd.f32 %v3084, %v3110
    %v3121 = vadd.f32 %v3085, %v3113
    %s3122 = scalar_lea.vmem [#allocation2], 48
    %3123 = vst [vmem:[%s3122] sm:$0x7f] %v3118
    %3124 = vst [vmem:[%s3122 + $0x8] sm:$0x7f] %v3119
    %3125 = vst [vmem:[%s3122 + $0x70] sm:$0x7f] %v3120
    %3126 = vst [vmem:[%s3122 + $0x78] sm:$0x7f] %v3121
    %v3127 = vadd.f32 %v2434, %v3118
    %v3128 = vadd.f32 %v2435, %v3119
    %v3129 = vadd.f32 %v2436, %v3120
    %v3130 = vadd.f32 %v2437, %v3121
    %v3131 = vmul.f32 %v3118, %v3118
    %v3132 = vmul.f32 %v3119, %v3119
    %v3133 = vmul.f32 %v3120, %v3120
    %v3134 = vmul.f32 %v3121, %v3121
    %v3135 = vadd.f32 %v2442, %v3131
    %v3136 = vadd.f32 %v2443, %v3132
    %v3137 = vadd.f32 %v2444, %v3133
    %v3138 = vadd.f32 %v2445, %v3134
    %v3139 = vmul.f32 %v85, %v168
    %v3140 = vmul.f32 %v86, %v172
    %v3141 = vmul.f32 %v129, %v168
    %v3142 = vmul.f32 %v130, %v172
    %v3143 = vmul.f32 %v89, %v180
    %v3144 = vmul.f32 %v90, %v184
    %v3145 = vmul.f32 %v133, %v180
    %v3146 = vmul.f32 %v134, %v184
    %v3147 = vadd.f32 %v3139, %v3143
    %v3148 = vadd.f32 %v3140, %v3144
    %v3149 = vadd.f32 %v3141, %v3145
    %v3150 = vadd.f32 %v3142, %v3146
    %v3151 = vmul.f32 %v93, %v196
    %v3152 = vmul.f32 %v94, %v200
    %v3153 = vmul.f32 %v137, %v196
    %v3154 = vmul.f32 %v138, %v200
    %v3155 = vadd.f32 %v3147, %v3151
    %v3156 = vadd.f32 %v3148, %v3152
    %v3157 = vadd.f32 %v3149, %v3153
    %v3158 = vadd.f32 %v3150, %v3154
    %v3159 = vmul.f32 %v97, %v212
    %v3160 = vmul.f32 %v98, %v216
    %v3161 = vmul.f32 %v141, %v212
    %v3162 = vmul.f32 %v142, %v216
    %v3163 = vadd.f32 %v3155, %v3159
    %v3164 = vadd.f32 %v3156, %v3160
    %v3165 = vadd.f32 %v3157, %v3161
    %v3166 = vadd.f32 %v3158, %v3162
    %v3167 = vmul.f32 %v101, %v228
    %v3168 = vmul.f32 %v102, %v232
    %v3169 = vmul.f32 %v145, %v228
    %v3170 = vmul.f32 %v146, %v232
    %v3171 = vadd.f32 %v3163, %v3167
    %v3172 = vadd.f32 %v3164, %v3168
    %v3173 = vadd.f32 %v3165, %v3169
    %v3174 = vadd.f32 %v3166, %v3170
    %v3175 = vmul.f32 %v85, %v244
    %v3176 = vmul.f32 %v86, %v248
    %v3177 = vmul.f32 %v129, %v244
    %v3178 = vmul.f32 %v130, %v248
    %v3183 = vrot.slane %v3175, 1
    %v3184 = vrot.slane %v3176, 1
    %v3185 = vrot.slane %v3177, 1
    %v3186 = vrot.slane %v3178, 1
    %v3191 = vadd.f32 %v3171, %v3183
    %v3192 = vadd.f32 %v3172, %v3184
    %v3193 = vadd.f32 %v3173, %v3185
    %v3194 = vadd.f32 %v3174, %v3186
    %v3195 = vmul.f32 %v89, %v272
    %v3196 = vmul.f32 %v90, %v276
    %v3197 = vmul.f32 %v133, %v272
    %v3198 = vmul.f32 %v134, %v276
    %v3203 = vrot.slane %v3195, 1
    %v3204 = vrot.slane %v3196, 1
    %v3205 = vrot.slane %v3197, 1
    %v3206 = vrot.slane %v3198, 1
    %v3211 = vadd.f32 %v3191, %v3203
    %v3212 = vadd.f32 %v3192, %v3204
    %v3213 = vadd.f32 %v3193, %v3205
    %v3214 = vadd.f32 %v3194, %v3206
    %v3215 = vmul.f32 %v93, %v300
    %v3216 = vmul.f32 %v94, %v304
    %v3217 = vmul.f32 %v137, %v300
    %v3218 = vmul.f32 %v138, %v304
    %v3223 = vrot.slane %v3215, 1
    %v3224 = vrot.slane %v3216, 1
    %v3225 = vrot.slane %v3217, 1
    %v3226 = vrot.slane %v3218, 1
    %v3231 = vadd.f32 %v3211, %v3223
    %v3232 = vadd.f32 %v3212, %v3224
    %v3233 = vadd.f32 %v3213, %v3225
    %v3234 = vadd.f32 %v3214, %v3226
    %v3235 = vmul.f32 %v97, %v328
    %v3236 = vmul.f32 %v98, %v332
    %v3237 = vmul.f32 %v141, %v328
    %v3238 = vmul.f32 %v142, %v332
    %v3243 = vrot.slane %v3235, 1
    %v3244 = vrot.slane %v3236, 1
    %v3245 = vrot.slane %v3237, 1
    %v3246 = vrot.slane %v3238, 1
    %v3251 = vadd.f32 %v3231, %v3243
    %v3252 = vadd.f32 %v3232, %v3244
    %v3253 = vadd.f32 %v3233, %v3245
    %v3254 = vadd.f32 %v3234, %v3246
    %v3255 = vmul.f32 %v101, %v356
    %v3256 = vmul.f32 %v102, %v360
    %v3257 = vmul.f32 %v145, %v356
    %v3258 = vmul.f32 %v146, %v360
    %v3263 = vrot.slane %v3255, 1
    %v3264 = vrot.slane %v3256, 1
    %v3265 = vrot.slane %v3257, 1
    %v3266 = vrot.slane %v3258, 1
    %v3271 = vadd.f32 %v3251, %v3263
    %v3272 = vadd.f32 %v3252, %v3264
    %v3273 = vadd.f32 %v3253, %v3265
    %v3274 = vadd.f32 %v3254, %v3266
    %v3275 = vmul.f32 %v85, %v384
    %v3276 = vmul.f32 %v86, %v388
    %v3277 = vmul.f32 %v87, %v384
    %v3278 = vmul.f32 %v88, %v388
    %v3279 = vmul.f32 %v129, %v384
    %v3280 = vmul.f32 %v130, %v388
    %v3281 = vmul.f32 %v131, %v384
    %v3282 = vmul.f32 %v132, %v388
    %v3291 = vrot.slane %v3275, 2
    %v3292 = vrot.slane %v3277, 2
    %v3293 = vsel %vm405, %v3291, %v3292
    %v3294 = vrot.slane %v3276, 2
    %v3295 = vrot.slane %v3278, 2
    %v3296 = vsel %vm405, %v3294, %v3295
    %v3297 = vrot.slane %v3279, 2
    %v3298 = vrot.slane %v3281, 2
    %v3299 = vsel %vm405, %v3297, %v3298
    %v3300 = vrot.slane %v3280, 2
    %v3301 = vrot.slane %v3282, 2
    %v3302 = vsel %vm405, %v3300, %v3301
    %v3307 = vadd.f32 %v3271, %v3293
    %v3308 = vadd.f32 %v3272, %v3296
    %v3309 = vadd.f32 %v3273, %v3299
    %v3310 = vadd.f32 %v3274, %v3302
    %v3311 = vmul.f32 %v89, %v429
    %v3312 = vmul.f32 %v90, %v433
    %v3313 = vmul.f32 %v91, %v429
    %v3314 = vmul.f32 %v92, %v433
    %v3315 = vmul.f32 %v133, %v429
    %v3316 = vmul.f32 %v134, %v433
    %v3317 = vmul.f32 %v135, %v429
    %v3318 = vmul.f32 %v136, %v433
    %v3327 = vrot.slane %v3311, 2
    %v3328 = vrot.slane %v3313, 2
    %v3329 = vsel %vm405, %v3327, %v3328
    %v3330 = vrot.slane %v3312, 2
    %v3331 = vrot.slane %v3314, 2
    %v3332 = vsel %vm405, %v3330, %v3331
    %v3333 = vrot.slane %v3315, 2
    %v3334 = vrot.slane %v3317, 2
    %v3335 = vsel %vm405, %v3333, %v3334
    %v3336 = vrot.slane %v3316, 2
    %v3337 = vrot.slane %v3318, 2
    %v3338 = vsel %vm405, %v3336, %v3337
    %v3343 = vadd.f32 %v3307, %v3329
    %v3344 = vadd.f32 %v3308, %v3332
    %v3345 = vadd.f32 %v3309, %v3335
    %v3346 = vadd.f32 %v3310, %v3338
    %v3347 = vmul.f32 %v93, %v473
    %v3348 = vmul.f32 %v94, %v477
    %v3349 = vmul.f32 %v95, %v473
    %v3350 = vmul.f32 %v96, %v477
    %v3351 = vmul.f32 %v137, %v473
    %v3352 = vmul.f32 %v138, %v477
    %v3353 = vmul.f32 %v139, %v473
    %v3354 = vmul.f32 %v140, %v477
    %v3363 = vrot.slane %v3347, 2
    %v3364 = vrot.slane %v3349, 2
    %v3365 = vsel %vm405, %v3363, %v3364
    %v3366 = vrot.slane %v3348, 2
    %v3367 = vrot.slane %v3350, 2
    %v3368 = vsel %vm405, %v3366, %v3367
    %v3369 = vrot.slane %v3351, 2
    %v3370 = vrot.slane %v3353, 2
    %v3371 = vsel %vm405, %v3369, %v3370
    %v3372 = vrot.slane %v3352, 2
    %v3373 = vrot.slane %v3354, 2
    %v3374 = vsel %vm405, %v3372, %v3373
    %v3379 = vadd.f32 %v3343, %v3365
    %v3380 = vadd.f32 %v3344, %v3368
    %v3381 = vadd.f32 %v3345, %v3371
    %v3382 = vadd.f32 %v3346, %v3374
    %v3383 = vmul.f32 %v97, %v517
    %v3384 = vmul.f32 %v98, %v521
    %v3385 = vmul.f32 %v99, %v517
    %v3386 = vmul.f32 %v100, %v521
    %v3387 = vmul.f32 %v141, %v517
    %v3388 = vmul.f32 %v142, %v521
    %v3389 = vmul.f32 %v143, %v517
    %v3390 = vmul.f32 %v144, %v521
    %v3399 = vrot.slane %v3383, 2
    %v3400 = vrot.slane %v3385, 2
    %v3401 = vsel %vm405, %v3399, %v3400
    %v3402 = vrot.slane %v3384, 2
    %v3403 = vrot.slane %v3386, 2
    %v3404 = vsel %vm405, %v3402, %v3403
    %v3405 = vrot.slane %v3387, 2
    %v3406 = vrot.slane %v3389, 2
    %v3407 = vsel %vm405, %v3405, %v3406
    %v3408 = vrot.slane %v3388, 2
    %v3409 = vrot.slane %v3390, 2
    %v3410 = vsel %vm405, %v3408, %v3409
    %v3415 = vadd.f32 %v3379, %v3401
    %v3416 = vadd.f32 %v3380, %v3404
    %v3417 = vadd.f32 %v3381, %v3407
    %v3418 = vadd.f32 %v3382, %v3410
    %v3419 = vmul.f32 %v101, %v561
    %v3420 = vmul.f32 %v102, %v565
    %v3421 = vmul.f32 %v103, %v561
    %v3422 = vmul.f32 %v104, %v565
    %v3423 = vmul.f32 %v145, %v561
    %v3424 = vmul.f32 %v146, %v565
    %v3425 = vmul.f32 %v147, %v561
    %v3426 = vmul.f32 %v148, %v565
    %v3435 = vrot.slane %v3419, 2
    %v3436 = vrot.slane %v3421, 2
    %v3437 = vsel %vm405, %v3435, %v3436
    %v3438 = vrot.slane %v3420, 2
    %v3439 = vrot.slane %v3422, 2
    %v3440 = vsel %vm405, %v3438, %v3439
    %v3441 = vrot.slane %v3423, 2
    %v3442 = vrot.slane %v3425, 2
    %v3443 = vsel %vm405, %v3441, %v3442
    %v3444 = vrot.slane %v3424, 2
    %v3445 = vrot.slane %v3426, 2
    %v3446 = vsel %vm405, %v3444, %v3445
    %v3451 = vadd.f32 %v3415, %v3437
    %v3452 = vadd.f32 %v3416, %v3440
    %v3453 = vadd.f32 %v3417, %v3443
    %v3454 = vadd.f32 %v3418, %v3446
    %v3455 = vmul.f32 %v85, %v605
    %v3456 = vmul.f32 %v86, %v609
    %v3457 = vmul.f32 %v87, %v605
    %v3458 = vmul.f32 %v88, %v609
    %v3459 = vmul.f32 %v129, %v605
    %v3460 = vmul.f32 %v130, %v609
    %v3461 = vmul.f32 %v131, %v605
    %v3462 = vmul.f32 %v132, %v609
    %v3471 = vrot.slane %v3455, 3
    %v3472 = vrot.slane %v3457, 3
    %v3473 = vsel %vm626, %v3471, %v3472
    %v3474 = vrot.slane %v3456, 3
    %v3475 = vrot.slane %v3458, 3
    %v3476 = vsel %vm626, %v3474, %v3475
    %v3477 = vrot.slane %v3459, 3
    %v3478 = vrot.slane %v3461, 3
    %v3479 = vsel %vm626, %v3477, %v3478
    %v3480 = vrot.slane %v3460, 3
    %v3481 = vrot.slane %v3462, 3
    %v3482 = vsel %vm626, %v3480, %v3481
    %v3487 = vadd.f32 %v3451, %v3473
    %v3488 = vadd.f32 %v3452, %v3476
    %v3489 = vadd.f32 %v3453, %v3479
    %v3490 = vadd.f32 %v3454, %v3482
    %v3491 = vmul.f32 %v89, %v650
    %v3492 = vmul.f32 %v90, %v654
    %v3493 = vmul.f32 %v91, %v650
    %v3494 = vmul.f32 %v92, %v654
    %v3495 = vmul.f32 %v133, %v650
    %v3496 = vmul.f32 %v134, %v654
    %v3497 = vmul.f32 %v135, %v650
    %v3498 = vmul.f32 %v136, %v654
    %v3507 = vrot.slane %v3491, 3
    %v3508 = vrot.slane %v3493, 3
    %v3509 = vsel %vm626, %v3507, %v3508
    %v3510 = vrot.slane %v3492, 3
    %v3511 = vrot.slane %v3494, 3
    %v3512 = vsel %vm626, %v3510, %v3511
    %v3513 = vrot.slane %v3495, 3
    %v3514 = vrot.slane %v3497, 3
    %v3515 = vsel %vm626, %v3513, %v3514
    %v3516 = vrot.slane %v3496, 3
    %v3517 = vrot.slane %v3498, 3
    %v3518 = vsel %vm626, %v3516, %v3517
    %v3523 = vadd.f32 %v3487, %v3509
    %v3524 = vadd.f32 %v3488, %v3512
    %v3525 = vadd.f32 %v3489, %v3515
    %v3526 = vadd.f32 %v3490, %v3518
    %v3527 = vmul.f32 %v93, %v694
    %v3528 = vmul.f32 %v94, %v698
    %v3529 = vmul.f32 %v95, %v694
    %v3530 = vmul.f32 %v96, %v698
    %v3531 = vmul.f32 %v137, %v694
    %v3532 = vmul.f32 %v138, %v698
    %v3533 = vmul.f32 %v139, %v694
    %v3534 = vmul.f32 %v140, %v698
    %v3543 = vrot.slane %v3527, 3
    %v3544 = vrot.slane %v3529, 3
    %v3545 = vsel %vm626, %v3543, %v3544
    %v3546 = vrot.slane %v3528, 3
    %v3547 = vrot.slane %v3530, 3
    %v3548 = vsel %vm626, %v3546, %v3547
    %v3549 = vrot.slane %v3531, 3
    %v3550 = vrot.slane %v3533, 3
    %v3551 = vsel %vm626, %v3549, %v3550
    %v3552 = vrot.slane %v3532, 3
    %v3553 = vrot.slane %v3534, 3
    %v3554 = vsel %vm626, %v3552, %v3553
    %v3559 = vadd.f32 %v3523, %v3545
    %v3560 = vadd.f32 %v3524, %v3548
    %v3561 = vadd.f32 %v3525, %v3551
    %v3562 = vadd.f32 %v3526, %v3554
    %v3563 = vmul.f32 %v97, %v738
    %v3564 = vmul.f32 %v98, %v742
    %v3565 = vmul.f32 %v99, %v738
    %v3566 = vmul.f32 %v100, %v742
    %v3567 = vmul.f32 %v141, %v738
    %v3568 = vmul.f32 %v142, %v742
    %v3569 = vmul.f32 %v143, %v738
    %v3570 = vmul.f32 %v144, %v742
    %v3579 = vrot.slane %v3563, 3
    %v3580 = vrot.slane %v3565, 3
    %v3581 = vsel %vm626, %v3579, %v3580
    %v3582 = vrot.slane %v3564, 3
    %v3583 = vrot.slane %v3566, 3
    %v3584 = vsel %vm626, %v3582, %v3583
    %v3585 = vrot.slane %v3567, 3
    %v3586 = vrot.slane %v3569, 3
    %v3587 = vsel %vm626, %v3585, %v3586
    %v3588 = vrot.slane %v3568, 3
    %v3589 = vrot.slane %v3570, 3
    %v3590 = vsel %vm626, %v3588, %v3589
    %v3595 = vadd.f32 %v3559, %v3581
    %v3596 = vadd.f32 %v3560, %v3584
    %v3597 = vadd.f32 %v3561, %v3587
    %v3598 = vadd.f32 %v3562, %v3590
    %v3599 = vmul.f32 %v101, %v782
    %v3600 = vmul.f32 %v102, %v786
    %v3601 = vmul.f32 %v103, %v782
    %v3602 = vmul.f32 %v104, %v786
    %v3603 = vmul.f32 %v145, %v782
    %v3604 = vmul.f32 %v146, %v786
    %v3605 = vmul.f32 %v147, %v782
    %v3606 = vmul.f32 %v148, %v786
    %v3615 = vrot.slane %v3599, 3
    %v3616 = vrot.slane %v3601, 3
    %v3617 = vsel %vm626, %v3615, %v3616
    %v3618 = vrot.slane %v3600, 3
    %v3619 = vrot.slane %v3602, 3
    %v3620 = vsel %vm626, %v3618, %v3619
    %v3621 = vrot.slane %v3603, 3
    %v3622 = vrot.slane %v3605, 3
    %v3623 = vsel %vm626, %v3621, %v3622
    %v3624 = vrot.slane %v3604, 3
    %v3625 = vrot.slane %v3606, 3
    %v3626 = vsel %vm626, %v3624, %v3625
    %v3631 = vadd.f32 %v3595, %v3617
    %v3632 = vadd.f32 %v3596, %v3620
    %v3633 = vadd.f32 %v3597, %v3623
    %v3634 = vadd.f32 %v3598, %v3626
    %v3635 = vmul.f32 %v85, %v826
    %v3636 = vmul.f32 %v86, %v830
    %v3637 = vmul.f32 %v87, %v826
    %v3638 = vmul.f32 %v88, %v830
    %v3639 = vmul.f32 %v129, %v826
    %v3640 = vmul.f32 %v130, %v830
    %v3641 = vmul.f32 %v131, %v826
    %v3642 = vmul.f32 %v132, %v830
    %v3651 = vrot.slane %v3635, 4
    %v3652 = vrot.slane %v3637, 4
    %v3653 = vsel %vm847, %v3651, %v3652
    %v3654 = vrot.slane %v3636, 4
    %v3655 = vrot.slane %v3638, 4
    %v3656 = vsel %vm847, %v3654, %v3655
    %v3657 = vrot.slane %v3639, 4
    %v3658 = vrot.slane %v3641, 4
    %v3659 = vsel %vm847, %v3657, %v3658
    %v3660 = vrot.slane %v3640, 4
    %v3661 = vrot.slane %v3642, 4
    %v3662 = vsel %vm847, %v3660, %v3661
    %v3667 = vadd.f32 %v3631, %v3653
    %v3668 = vadd.f32 %v3632, %v3656
    %v3669 = vadd.f32 %v3633, %v3659
    %v3670 = vadd.f32 %v3634, %v3662
    %v3671 = vmul.f32 %v89, %v871
    %v3672 = vmul.f32 %v90, %v875
    %v3673 = vmul.f32 %v91, %v871
    %v3674 = vmul.f32 %v92, %v875
    %v3675 = vmul.f32 %v133, %v871
    %v3676 = vmul.f32 %v134, %v875
    %v3677 = vmul.f32 %v135, %v871
    %v3678 = vmul.f32 %v136, %v875
    %v3687 = vrot.slane %v3671, 4
    %v3688 = vrot.slane %v3673, 4
    %v3689 = vsel %vm847, %v3687, %v3688
    %v3690 = vrot.slane %v3672, 4
    %v3691 = vrot.slane %v3674, 4
    %v3692 = vsel %vm847, %v3690, %v3691
    %v3693 = vrot.slane %v3675, 4
    %v3694 = vrot.slane %v3677, 4
    %v3695 = vsel %vm847, %v3693, %v3694
    %v3696 = vrot.slane %v3676, 4
    %v3697 = vrot.slane %v3678, 4
    %v3698 = vsel %vm847, %v3696, %v3697
    %v3703 = vadd.f32 %v3667, %v3689
    %v3704 = vadd.f32 %v3668, %v3692
    %v3705 = vadd.f32 %v3669, %v3695
    %v3706 = vadd.f32 %v3670, %v3698
    %v3707 = vmul.f32 %v93, %v915
    %v3708 = vmul.f32 %v94, %v919
    %v3709 = vmul.f32 %v95, %v915
    %v3710 = vmul.f32 %v96, %v919
    %v3711 = vmul.f32 %v137, %v915
    %v3712 = vmul.f32 %v138, %v919
    %v3713 = vmul.f32 %v139, %v915
    %v3714 = vmul.f32 %v140, %v919
    %v3723 = vrot.slane %v3707, 4
    %v3724 = vrot.slane %v3709, 4
    %v3725 = vsel %vm847, %v3723, %v3724
    %v3726 = vrot.slane %v3708, 4
    %v3727 = vrot.slane %v3710, 4
    %v3728 = vsel %vm847, %v3726, %v3727
    %v3729 = vrot.slane %v3711, 4
    %v3730 = vrot.slane %v3713, 4
    %v3731 = vsel %vm847, %v3729, %v3730
    %v3732 = vrot.slane %v3712, 4
    %v3733 = vrot.slane %v3714, 4
    %v3734 = vsel %vm847, %v3732, %v3733
    %v3739 = vadd.f32 %v3703, %v3725
    %v3740 = vadd.f32 %v3704, %v3728
    %v3741 = vadd.f32 %v3705, %v3731
    %v3742 = vadd.f32 %v3706, %v3734
    %v3743 = vmul.f32 %v97, %v959
    %v3744 = vmul.f32 %v98, %v963
    %v3745 = vmul.f32 %v99, %v959
    %v3746 = vmul.f32 %v100, %v963
    %v3747 = vmul.f32 %v141, %v959
    %v3748 = vmul.f32 %v142, %v963
    %v3749 = vmul.f32 %v143, %v959
    %v3750 = vmul.f32 %v144, %v963
    %v3759 = vrot.slane %v3743, 4
    %v3760 = vrot.slane %v3745, 4
    %v3761 = vsel %vm847, %v3759, %v3760
    %v3762 = vrot.slane %v3744, 4
    %v3763 = vrot.slane %v3746, 4
    %v3764 = vsel %vm847, %v3762, %v3763
    %v3765 = vrot.slane %v3747, 4
    %v3766 = vrot.slane %v3749, 4
    %v3767 = vsel %vm847, %v3765, %v3766
    %v3768 = vrot.slane %v3748, 4
    %v3769 = vrot.slane %v3750, 4
    %v3770 = vsel %vm847, %v3768, %v3769
    %v3775 = vadd.f32 %v3739, %v3761
    %v3776 = vadd.f32 %v3740, %v3764
    %v3777 = vadd.f32 %v3741, %v3767
    %v3778 = vadd.f32 %v3742, %v3770
    %v3779 = vmul.f32 %v101, %v1003
    %v3780 = vmul.f32 %v102, %v1007
    %v3781 = vmul.f32 %v103, %v1003
    %v3782 = vmul.f32 %v104, %v1007
    %v3783 = vmul.f32 %v145, %v1003
    %v3784 = vmul.f32 %v146, %v1007
    %v3785 = vmul.f32 %v147, %v1003
    %v3786 = vmul.f32 %v148, %v1007
    %v3795 = vrot.slane %v3779, 4
    %v3796 = vrot.slane %v3781, 4
    %v3797 = vsel %vm847, %v3795, %v3796
    %v3798 = vrot.slane %v3780, 4
    %v3799 = vrot.slane %v3782, 4
    %v3800 = vsel %vm847, %v3798, %v3799
    %v3801 = vrot.slane %v3783, 4
    %v3802 = vrot.slane %v3785, 4
    %v3803 = vsel %vm847, %v3801, %v3802
    %v3804 = vrot.slane %v3784, 4
    %v3805 = vrot.slane %v3786, 4
    %v3806 = vsel %vm847, %v3804, %v3805
    %v3811 = vadd.f32 %v3775, %v3797
    %v3812 = vadd.f32 %v3776, %v3800
    %v3813 = vadd.f32 %v3777, %v3803
    %v3814 = vadd.f32 %v3778, %v3806
    %s3815 = scalar_lea.vmem [#allocation2], 64
    %3816 = vst [vmem:[%s3815] sm:$0x7f] %v3811
    %3817 = vst [vmem:[%s3815 + $0x8] sm:$0x7f] %v3812
    %3818 = vst [vmem:[%s3815 + $0x70] sm:$0x7f] %v3813
    %3819 = vst [vmem:[%s3815 + $0x78] sm:$0x7f] %v3814
    %v3820 = vadd.f32 %v3127, %v3811
    %v3821 = vadd.f32 %v3128, %v3812
    %v3822 = vadd.f32 %v3129, %v3813
    %v3823 = vadd.f32 %v3130, %v3814
    %v3824 = vmul.f32 %v3811, %v3811
    %v3825 = vmul.f32 %v3812, %v3812
    %v3826 = vmul.f32 %v3813, %v3813
    %v3827 = vmul.f32 %v3814, %v3814
    %v3828 = vadd.f32 %v3135, %v3824
    %v3829 = vadd.f32 %v3136, %v3825
    %v3830 = vadd.f32 %v3137, %v3826
    %v3831 = vadd.f32 %v3138, %v3827
    %v3832 = vmul.f32 %v89, %v168
    %v3833 = vmul.f32 %v90, %v172
    %v3834 = vmul.f32 %v133, %v168
    %v3835 = vmul.f32 %v134, %v172
    %v3836 = vmul.f32 %v93, %v180
    %v3837 = vmul.f32 %v94, %v184
    %v3838 = vmul.f32 %v137, %v180
    %v3839 = vmul.f32 %v138, %v184
    %v3840 = vadd.f32 %v3832, %v3836
    %v3841 = vadd.f32 %v3833, %v3837
    %v3842 = vadd.f32 %v3834, %v3838
    %v3843 = vadd.f32 %v3835, %v3839
    %v3844 = vmul.f32 %v97, %v196
    %v3845 = vmul.f32 %v98, %v200
    %v3846 = vmul.f32 %v141, %v196
    %v3847 = vmul.f32 %v142, %v200
    %v3848 = vadd.f32 %v3840, %v3844
    %v3849 = vadd.f32 %v3841, %v3845
    %v3850 = vadd.f32 %v3842, %v3846
    %v3851 = vadd.f32 %v3843, %v3847
    %v3852 = vmul.f32 %v101, %v212
    %v3853 = vmul.f32 %v102, %v216
    %v3854 = vmul.f32 %v145, %v212
    %v3855 = vmul.f32 %v146, %v216
    %v3856 = vadd.f32 %v3848, %v3852
    %v3857 = vadd.f32 %v3849, %v3853
    %v3858 = vadd.f32 %v3850, %v3854
    %v3859 = vadd.f32 %v3851, %v3855
    %v3860 = vmul.f32 %v105, %v228
    %v3861 = vmul.f32 %v106, %v232
    %v3862 = vmul.f32 %v149, %v228
    %v3863 = vmul.f32 %v150, %v232
    %v3864 = vadd.f32 %v3856, %v3860
    %v3865 = vadd.f32 %v3857, %v3861
    %v3866 = vadd.f32 %v3858, %v3862
    %v3867 = vadd.f32 %v3859, %v3863
    %v3868 = vmul.f32 %v89, %v244
    %v3869 = vmul.f32 %v90, %v248
    %v3870 = vmul.f32 %v133, %v244
    %v3871 = vmul.f32 %v134, %v248
    %v3876 = vrot.slane %v3868, 1
    %v3877 = vrot.slane %v3869, 1
    %v3878 = vrot.slane %v3870, 1
    %v3879 = vrot.slane %v3871, 1
    %v3884 = vadd.f32 %v3864, %v3876
    %v3885 = vadd.f32 %v3865, %v3877
    %v3886 = vadd.f32 %v3866, %v3878
    %v3887 = vadd.f32 %v3867, %v3879
    %v3888 = vmul.f32 %v93, %v272
    %v3889 = vmul.f32 %v94, %v276
    %v3890 = vmul.f32 %v137, %v272
    %v3891 = vmul.f32 %v138, %v276
    %v3896 = vrot.slane %v3888, 1
    %v3897 = vrot.slane %v3889, 1
    %v3898 = vrot.slane %v3890, 1
    %v3899 = vrot.slane %v3891, 1
    %v3904 = vadd.f32 %v3884, %v3896
    %v3905 = vadd.f32 %v3885, %v3897
    %v3906 = vadd.f32 %v3886, %v3898
    %v3907 = vadd.f32 %v3887, %v3899
    %v3908 = vmul.f32 %v97, %v300
    %v3909 = vmul.f32 %v98, %v304
    %v3910 = vmul.f32 %v141, %v300
    %v3911 = vmul.f32 %v142, %v304
    %v3916 = vrot.slane %v3908, 1
    %v3917 = vrot.slane %v3909, 1
    %v3918 = vrot.slane %v3910, 1
    %v3919 = vrot.slane %v3911, 1
    %v3924 = vadd.f32 %v3904, %v3916
    %v3925 = vadd.f32 %v3905, %v3917
    %v3926 = vadd.f32 %v3906, %v3918
    %v3927 = vadd.f32 %v3907, %v3919
    %v3928 = vmul.f32 %v101, %v328
    %v3929 = vmul.f32 %v102, %v332
    %v3930 = vmul.f32 %v145, %v328
    %v3931 = vmul.f32 %v146, %v332
    %v3936 = vrot.slane %v3928, 1
    %v3937 = vrot.slane %v3929, 1
    %v3938 = vrot.slane %v3930, 1
    %v3939 = vrot.slane %v3931, 1
    %v3944 = vadd.f32 %v3924, %v3936
    %v3945 = vadd.f32 %v3925, %v3937
    %v3946 = vadd.f32 %v3926, %v3938
    %v3947 = vadd.f32 %v3927, %v3939
    %v3948 = vmul.f32 %v105, %v356
    %v3949 = vmul.f32 %v106, %v360
    %v3950 = vmul.f32 %v149, %v356
    %v3951 = vmul.f32 %v150, %v360
    %v3956 = vrot.slane %v3948, 1
    %v3957 = vrot.slane %v3949, 1
    %v3958 = vrot.slane %v3950, 1
    %v3959 = vrot.slane %v3951, 1
    %v3964 = vadd.f32 %v3944, %v3956
    %v3965 = vadd.f32 %v3945, %v3957
    %v3966 = vadd.f32 %v3946, %v3958
    %v3967 = vadd.f32 %v3947, %v3959
    %v3968 = vmul.f32 %v89, %v384
    %v3969 = vmul.f32 %v90, %v388
    %v3970 = vmul.f32 %v91, %v384
    %v3971 = vmul.f32 %v92, %v388
    %v3972 = vmul.f32 %v133, %v384
    %v3973 = vmul.f32 %v134, %v388
    %v3974 = vmul.f32 %v135, %v384
    %v3975 = vmul.f32 %v136, %v388
    %v3984 = vrot.slane %v3968, 2
    %v3985 = vrot.slane %v3970, 2
    %v3986 = vsel %vm405, %v3984, %v3985
    %v3987 = vrot.slane %v3969, 2
    %v3988 = vrot.slane %v3971, 2
    %v3989 = vsel %vm405, %v3987, %v3988
    %v3990 = vrot.slane %v3972, 2
    %v3991 = vrot.slane %v3974, 2
    %v3992 = vsel %vm405, %v3990, %v3991
    %v3993 = vrot.slane %v3973, 2
    %v3994 = vrot.slane %v3975, 2
    %v3995 = vsel %vm405, %v3993, %v3994
    %v4000 = vadd.f32 %v3964, %v3986
    %v4001 = vadd.f32 %v3965, %v3989
    %v4002 = vadd.f32 %v3966, %v3992
    %v4003 = vadd.f32 %v3967, %v3995
    %v4004 = vmul.f32 %v93, %v429
    %v4005 = vmul.f32 %v94, %v433
    %v4006 = vmul.f32 %v95, %v429
    %v4007 = vmul.f32 %v96, %v433
    %v4008 = vmul.f32 %v137, %v429
    %v4009 = vmul.f32 %v138, %v433
    %v4010 = vmul.f32 %v139, %v429
    %v4011 = vmul.f32 %v140, %v433
    %v4020 = vrot.slane %v4004, 2
    %v4021 = vrot.slane %v4006, 2
    %v4022 = vsel %vm405, %v4020, %v4021
    %v4023 = vrot.slane %v4005, 2
    %v4024 = vrot.slane %v4007, 2
    %v4025 = vsel %vm405, %v4023, %v4024
    %v4026 = vrot.slane %v4008, 2
    %v4027 = vrot.slane %v4010, 2
    %v4028 = vsel %vm405, %v4026, %v4027
    %v4029 = vrot.slane %v4009, 2
    %v4030 = vrot.slane %v4011, 2
    %v4031 = vsel %vm405, %v4029, %v4030
    %v4036 = vadd.f32 %v4000, %v4022
    %v4037 = vadd.f32 %v4001, %v4025
    %v4038 = vadd.f32 %v4002, %v4028
    %v4039 = vadd.f32 %v4003, %v4031
    %v4040 = vmul.f32 %v97, %v473
    %v4041 = vmul.f32 %v98, %v477
    %v4042 = vmul.f32 %v99, %v473
    %v4043 = vmul.f32 %v100, %v477
    %v4044 = vmul.f32 %v141, %v473
    %v4045 = vmul.f32 %v142, %v477
    %v4046 = vmul.f32 %v143, %v473
    %v4047 = vmul.f32 %v144, %v477
    %v4056 = vrot.slane %v4040, 2
    %v4057 = vrot.slane %v4042, 2
    %v4058 = vsel %vm405, %v4056, %v4057
    %v4059 = vrot.slane %v4041, 2
    %v4060 = vrot.slane %v4043, 2
    %v4061 = vsel %vm405, %v4059, %v4060
    %v4062 = vrot.slane %v4044, 2
    %v4063 = vrot.slane %v4046, 2
    %v4064 = vsel %vm405, %v4062, %v4063
    %v4065 = vrot.slane %v4045, 2
    %v4066 = vrot.slane %v4047, 2
    %v4067 = vsel %vm405, %v4065, %v4066
    %v4072 = vadd.f32 %v4036, %v4058
    %v4073 = vadd.f32 %v4037, %v4061
    %v4074 = vadd.f32 %v4038, %v4064
    %v4075 = vadd.f32 %v4039, %v4067
    %v4076 = vmul.f32 %v101, %v517
    %v4077 = vmul.f32 %v102, %v521
    %v4078 = vmul.f32 %v103, %v517
    %v4079 = vmul.f32 %v104, %v521
    %v4080 = vmul.f32 %v145, %v517
    %v4081 = vmul.f32 %v146, %v521
    %v4082 = vmul.f32 %v147, %v517
    %v4083 = vmul.f32 %v148, %v521
    %v4092 = vrot.slane %v4076, 2
    %v4093 = vrot.slane %v4078, 2
    %v4094 = vsel %vm405, %v4092, %v4093
    %v4095 = vrot.slane %v4077, 2
    %v4096 = vrot.slane %v4079, 2
    %v4097 = vsel %vm405, %v4095, %v4096
    %v4098 = vrot.slane %v4080, 2
    %v4099 = vrot.slane %v4082, 2
    %v4100 = vsel %vm405, %v4098, %v4099
    %v4101 = vrot.slane %v4081, 2
    %v4102 = vrot.slane %v4083, 2
    %v4103 = vsel %vm405, %v4101, %v4102
    %v4108 = vadd.f32 %v4072, %v4094
    %v4109 = vadd.f32 %v4073, %v4097
    %v4110 = vadd.f32 %v4074, %v4100
    %v4111 = vadd.f32 %v4075, %v4103
    %v4112 = vmul.f32 %v105, %v561
    %v4113 = vmul.f32 %v106, %v565
    %v4114 = vmul.f32 %v107, %v561
    %v4115 = vmul.f32 %v108, %v565
    %v4116 = vmul.f32 %v149, %v561
    %v4117 = vmul.f32 %v150, %v565
    %v4118 = vmul.f32 %v151, %v561
    %v4119 = vmul.f32 %v152, %v565
    %v4128 = vrot.slane %v4112, 2
    %v4129 = vrot.slane %v4114, 2
    %v4130 = vsel %vm405, %v4128, %v4129
    %v4131 = vrot.slane %v4113, 2
    %v4132 = vrot.slane %v4115, 2
    %v4133 = vsel %vm405, %v4131, %v4132
    %v4134 = vrot.slane %v4116, 2
    %v4135 = vrot.slane %v4118, 2
    %v4136 = vsel %vm405, %v4134, %v4135
    %v4137 = vrot.slane %v4117, 2
    %v4138 = vrot.slane %v4119, 2
    %v4139 = vsel %vm405, %v4137, %v4138
    %v4144 = vadd.f32 %v4108, %v4130
    %v4145 = vadd.f32 %v4109, %v4133
    %v4146 = vadd.f32 %v4110, %v4136
    %v4147 = vadd.f32 %v4111, %v4139
    %v4148 = vmul.f32 %v89, %v605
    %v4149 = vmul.f32 %v90, %v609
    %v4150 = vmul.f32 %v91, %v605
    %v4151 = vmul.f32 %v92, %v609
    %v4152 = vmul.f32 %v133, %v605
    %v4153 = vmul.f32 %v134, %v609
    %v4154 = vmul.f32 %v135, %v605
    %v4155 = vmul.f32 %v136, %v609
    %v4164 = vrot.slane %v4148, 3
    %v4165 = vrot.slane %v4150, 3
    %v4166 = vsel %vm626, %v4164, %v4165
    %v4167 = vrot.slane %v4149, 3
    %v4168 = vrot.slane %v4151, 3
    %v4169 = vsel %vm626, %v4167, %v4168
    %v4170 = vrot.slane %v4152, 3
    %v4171 = vrot.slane %v4154, 3
    %v4172 = vsel %vm626, %v4170, %v4171
    %v4173 = vrot.slane %v4153, 3
    %v4174 = vrot.slane %v4155, 3
    %v4175 = vsel %vm626, %v4173, %v4174
    %v4180 = vadd.f32 %v4144, %v4166
    %v4181 = vadd.f32 %v4145, %v4169
    %v4182 = vadd.f32 %v4146, %v4172
    %v4183 = vadd.f32 %v4147, %v4175
    %v4184 = vmul.f32 %v93, %v650
    %v4185 = vmul.f32 %v94, %v654
    %v4186 = vmul.f32 %v95, %v650
    %v4187 = vmul.f32 %v96, %v654
    %v4188 = vmul.f32 %v137, %v650
    %v4189 = vmul.f32 %v138, %v654
    %v4190 = vmul.f32 %v139, %v650
    %v4191 = vmul.f32 %v140, %v654
    %v4200 = vrot.slane %v4184, 3
    %v4201 = vrot.slane %v4186, 3
    %v4202 = vsel %vm626, %v4200, %v4201
    %v4203 = vrot.slane %v4185, 3
    %v4204 = vrot.slane %v4187, 3
    %v4205 = vsel %vm626, %v4203, %v4204
    %v4206 = vrot.slane %v4188, 3
    %v4207 = vrot.slane %v4190, 3
    %v4208 = vsel %vm626, %v4206, %v4207
    %v4209 = vrot.slane %v4189, 3
    %v4210 = vrot.slane %v4191, 3
    %v4211 = vsel %vm626, %v4209, %v4210
    %v4216 = vadd.f32 %v4180, %v4202
    %v4217 = vadd.f32 %v4181, %v4205
    %v4218 = vadd.f32 %v4182, %v4208
    %v4219 = vadd.f32 %v4183, %v4211
    %v4220 = vmul.f32 %v97, %v694
    %v4221 = vmul.f32 %v98, %v698
    %v4222 = vmul.f32 %v99, %v694
    %v4223 = vmul.f32 %v100, %v698
    %v4224 = vmul.f32 %v141, %v694
    %v4225 = vmul.f32 %v142, %v698
    %v4226 = vmul.f32 %v143, %v694
    %v4227 = vmul.f32 %v144, %v698
    %v4236 = vrot.slane %v4220, 3
    %v4237 = vrot.slane %v4222, 3
    %v4238 = vsel %vm626, %v4236, %v4237
    %v4239 = vrot.slane %v4221, 3
    %v4240 = vrot.slane %v4223, 3
    %v4241 = vsel %vm626, %v4239, %v4240
    %v4242 = vrot.slane %v4224, 3
    %v4243 = vrot.slane %v4226, 3
    %v4244 = vsel %vm626, %v4242, %v4243
    %v4245 = vrot.slane %v4225, 3
    %v4246 = vrot.slane %v4227, 3
    %v4247 = vsel %vm626, %v4245, %v4246
    %v4252 = vadd.f32 %v4216, %v4238
    %v4253 = vadd.f32 %v4217, %v4241
    %v4254 = vadd.f32 %v4218, %v4244
    %v4255 = vadd.f32 %v4219, %v4247
    %v4256 = vmul.f32 %v101, %v738
    %v4257 = vmul.f32 %v102, %v742
    %v4258 = vmul.f32 %v103, %v738
    %v4259 = vmul.f32 %v104, %v742
    %v4260 = vmul.f32 %v145, %v738
    %v4261 = vmul.f32 %v146, %v742
    %v4262 = vmul.f32 %v147, %v738
    %v4263 = vmul.f32 %v148, %v742
    %v4272 = vrot.slane %v4256, 3
    %v4273 = vrot.slane %v4258, 3
    %v4274 = vsel %vm626, %v4272, %v4273
    %v4275 = vrot.slane %v4257, 3
    %v4276 = vrot.slane %v4259, 3
    %v4277 = vsel %vm626, %v4275, %v4276
    %v4278 = vrot.slane %v4260, 3
    %v4279 = vrot.slane %v4262, 3
    %v4280 = vsel %vm626, %v4278, %v4279
    %v4281 = vrot.slane %v4261, 3
    %v4282 = vrot.slane %v4263, 3
    %v4283 = vsel %vm626, %v4281, %v4282
    %v4288 = vadd.f32 %v4252, %v4274
    %v4289 = vadd.f32 %v4253, %v4277
    %v4290 = vadd.f32 %v4254, %v4280
    %v4291 = vadd.f32 %v4255, %v4283
    %v4292 = vmul.f32 %v105, %v782
    %v4293 = vmul.f32 %v106, %v786
    %v4294 = vmul.f32 %v107, %v782
    %v4295 = vmul.f32 %v108, %v786
    %v4296 = vmul.f32 %v149, %v782
    %v4297 = vmul.f32 %v150, %v786
    %v4298 = vmul.f32 %v151, %v782
    %v4299 = vmul.f32 %v152, %v786
    %v4308 = vrot.slane %v4292, 3
    %v4309 = vrot.slane %v4294, 3
    %v4310 = vsel %vm626, %v4308, %v4309
    %v4311 = vrot.slane %v4293, 3
    %v4312 = vrot.slane %v4295, 3
    %v4313 = vsel %vm626, %v4311, %v4312
    %v4314 = vrot.slane %v4296, 3
    %v4315 = vrot.slane %v4298, 3
    %v4316 = vsel %vm626, %v4314, %v4315
    %v4317 = vrot.slane %v4297, 3
    %v4318 = vrot.slane %v4299, 3
    %v4319 = vsel %vm626, %v4317, %v4318
    %v4324 = vadd.f32 %v4288, %v4310
    %v4325 = vadd.f32 %v4289, %v4313
    %v4326 = vadd.f32 %v4290, %v4316
    %v4327 = vadd.f32 %v4291, %v4319
    %v4328 = vmul.f32 %v89, %v826
    %v4329 = vmul.f32 %v90, %v830
    %v4330 = vmul.f32 %v91, %v826
    %v4331 = vmul.f32 %v92, %v830
    %v4332 = vmul.f32 %v133, %v826
    %v4333 = vmul.f32 %v134, %v830
    %v4334 = vmul.f32 %v135, %v826
    %v4335 = vmul.f32 %v136, %v830
    %v4344 = vrot.slane %v4328, 4
    %v4345 = vrot.slane %v4330, 4
    %v4346 = vsel %vm847, %v4344, %v4345
    %v4347 = vrot.slane %v4329, 4
    %v4348 = vrot.slane %v4331, 4
    %v4349 = vsel %vm847, %v4347, %v4348
    %v4350 = vrot.slane %v4332, 4
    %v4351 = vrot.slane %v4334, 4
    %v4352 = vsel %vm847, %v4350, %v4351
    %v4353 = vrot.slane %v4333, 4
    %v4354 = vrot.slane %v4335, 4
    %v4355 = vsel %vm847, %v4353, %v4354
    %v4360 = vadd.f32 %v4324, %v4346
    %v4361 = vadd.f32 %v4325, %v4349
    %v4362 = vadd.f32 %v4326, %v4352
    %v4363 = vadd.f32 %v4327, %v4355
    %v4364 = vmul.f32 %v93, %v871
    %v4365 = vmul.f32 %v94, %v875
    %v4366 = vmul.f32 %v95, %v871
    %v4367 = vmul.f32 %v96, %v875
    %v4368 = vmul.f32 %v137, %v871
    %v4369 = vmul.f32 %v138, %v875
    %v4370 = vmul.f32 %v139, %v871
    %v4371 = vmul.f32 %v140, %v875
    %v4380 = vrot.slane %v4364, 4
    %v4381 = vrot.slane %v4366, 4
    %v4382 = vsel %vm847, %v4380, %v4381
    %v4383 = vrot.slane %v4365, 4
    %v4384 = vrot.slane %v4367, 4
    %v4385 = vsel %vm847, %v4383, %v4384
    %v4386 = vrot.slane %v4368, 4
    %v4387 = vrot.slane %v4370, 4
    %v4388 = vsel %vm847, %v4386, %v4387
    %v4389 = vrot.slane %v4369, 4
    %v4390 = vrot.slane %v4371, 4
    %v4391 = vsel %vm847, %v4389, %v4390
    %v4396 = vadd.f32 %v4360, %v4382
    %v4397 = vadd.f32 %v4361, %v4385
    %v4398 = vadd.f32 %v4362, %v4388
    %v4399 = vadd.f32 %v4363, %v4391
    %v4400 = vmul.f32 %v97, %v915
    %v4401 = vmul.f32 %v98, %v919
    %v4402 = vmul.f32 %v99, %v915
    %v4403 = vmul.f32 %v100, %v919
    %v4404 = vmul.f32 %v141, %v915
    %v4405 = vmul.f32 %v142, %v919
    %v4406 = vmul.f32 %v143, %v915
    %v4407 = vmul.f32 %v144, %v919
    %v4416 = vrot.slane %v4400, 4
    %v4417 = vrot.slane %v4402, 4
    %v4418 = vsel %vm847, %v4416, %v4417
    %v4419 = vrot.slane %v4401, 4
    %v4420 = vrot.slane %v4403, 4
    %v4421 = vsel %vm847, %v4419, %v4420
    %v4422 = vrot.slane %v4404, 4
    %v4423 = vrot.slane %v4406, 4
    %v4424 = vsel %vm847, %v4422, %v4423
    %v4425 = vrot.slane %v4405, 4
    %v4426 = vrot.slane %v4407, 4
    %v4427 = vsel %vm847, %v4425, %v4426
    %v4432 = vadd.f32 %v4396, %v4418
    %v4433 = vadd.f32 %v4397, %v4421
    %v4434 = vadd.f32 %v4398, %v4424
    %v4435 = vadd.f32 %v4399, %v4427
    %v4436 = vmul.f32 %v101, %v959
    %v4437 = vmul.f32 %v102, %v963
    %v4438 = vmul.f32 %v103, %v959
    %v4439 = vmul.f32 %v104, %v963
    %v4440 = vmul.f32 %v145, %v959
    %v4441 = vmul.f32 %v146, %v963
    %v4442 = vmul.f32 %v147, %v959
    %v4443 = vmul.f32 %v148, %v963
    %v4452 = vrot.slane %v4436, 4
    %v4453 = vrot.slane %v4438, 4
    %v4454 = vsel %vm847, %v4452, %v4453
    %v4455 = vrot.slane %v4437, 4
    %v4456 = vrot.slane %v4439, 4
    %v4457 = vsel %vm847, %v4455, %v4456
    %v4458 = vrot.slane %v4440, 4
    %v4459 = vrot.slane %v4442, 4
    %v4460 = vsel %vm847, %v4458, %v4459
    %v4461 = vrot.slane %v4441, 4
    %v4462 = vrot.slane %v4443, 4
    %v4463 = vsel %vm847, %v4461, %v4462
    %v4468 = vadd.f32 %v4432, %v4454
    %v4469 = vadd.f32 %v4433, %v4457
    %v4470 = vadd.f32 %v4434, %v4460
    %v4471 = vadd.f32 %v4435, %v4463
    %v4472 = vmul.f32 %v105, %v1003
    %v4473 = vmul.f32 %v106, %v1007
    %v4474 = vmul.f32 %v107, %v1003
    %v4475 = vmul.f32 %v108, %v1007
    %v4476 = vmul.f32 %v149, %v1003
    %v4477 = vmul.f32 %v150, %v1007
    %v4478 = vmul.f32 %v151, %v1003
    %v4479 = vmul.f32 %v152, %v1007
    %v4488 = vrot.slane %v4472, 4
    %v4489 = vrot.slane %v4474, 4
    %v4490 = vsel %vm847, %v4488, %v4489
    %v4491 = vrot.slane %v4473, 4
    %v4492 = vrot.slane %v4475, 4
    %v4493 = vsel %vm847, %v4491, %v4492
    %v4494 = vrot.slane %v4476, 4
    %v4495 = vrot.slane %v4478, 4
    %v4496 = vsel %vm847, %v4494, %v4495
    %v4497 = vrot.slane %v4477, 4
    %v4498 = vrot.slane %v4479, 4
    %v4499 = vsel %vm847, %v4497, %v4498
    %v4504 = vadd.f32 %v4468, %v4490
    %v4505 = vadd.f32 %v4469, %v4493
    %v4506 = vadd.f32 %v4470, %v4496
    %v4507 = vadd.f32 %v4471, %v4499
    %s4508 = scalar_lea.vmem [#allocation2], 80
    %4509 = vst [vmem:[%s4508] sm:$0x7f] %v4504
    %4510 = vst [vmem:[%s4508 + $0x8] sm:$0x7f] %v4505
    %4511 = vst [vmem:[%s4508 + $0x70] sm:$0x7f] %v4506
    %4512 = vst [vmem:[%s4508 + $0x78] sm:$0x7f] %v4507
    %v4513 = vadd.f32 %v3820, %v4504
    %v4514 = vadd.f32 %v3821, %v4505
    %v4515 = vadd.f32 %v3822, %v4506
    %v4516 = vadd.f32 %v3823, %v4507
    %v4517 = vmul.f32 %v4504, %v4504
    %v4518 = vmul.f32 %v4505, %v4505
    %v4519 = vmul.f32 %v4506, %v4506
    %v4520 = vmul.f32 %v4507, %v4507
    %v4521 = vadd.f32 %v3828, %v4517
    %v4522 = vadd.f32 %v3829, %v4518
    %v4523 = vadd.f32 %v3830, %v4519
    %v4524 = vadd.f32 %v3831, %v4520
    %v4525 = vmul.f32 %v93, %v168
    %v4526 = vmul.f32 %v94, %v172
    %v4527 = vmul.f32 %v137, %v168
    %v4528 = vmul.f32 %v138, %v172
    %v4529 = vmul.f32 %v97, %v180
    %v4530 = vmul.f32 %v98, %v184
    %v4531 = vmul.f32 %v141, %v180
    %v4532 = vmul.f32 %v142, %v184
    %v4533 = vadd.f32 %v4525, %v4529
    %v4534 = vadd.f32 %v4526, %v4530
    %v4535 = vadd.f32 %v4527, %v4531
    %v4536 = vadd.f32 %v4528, %v4532
    %v4537 = vmul.f32 %v101, %v196
    %v4538 = vmul.f32 %v102, %v200
    %v4539 = vmul.f32 %v145, %v196
    %v4540 = vmul.f32 %v146, %v200
    %v4541 = vadd.f32 %v4533, %v4537
    %v4542 = vadd.f32 %v4534, %v4538
    %v4543 = vadd.f32 %v4535, %v4539
    %v4544 = vadd.f32 %v4536, %v4540
    %v4545 = vmul.f32 %v105, %v212
    %v4546 = vmul.f32 %v106, %v216
    %v4547 = vmul.f32 %v149, %v212
    %v4548 = vmul.f32 %v150, %v216
    %v4549 = vadd.f32 %v4541, %v4545
    %v4550 = vadd.f32 %v4542, %v4546
    %v4551 = vadd.f32 %v4543, %v4547
    %v4552 = vadd.f32 %v4544, %v4548
    %v4553 = vmul.f32 %v109, %v228
    %v4554 = vmul.f32 %v110, %v232
    %v4555 = vmul.f32 %v153, %v228
    %v4556 = vmul.f32 %v154, %v232
    %v4557 = vadd.f32 %v4549, %v4553
    %v4558 = vadd.f32 %v4550, %v4554
    %v4559 = vadd.f32 %v4551, %v4555
    %v4560 = vadd.f32 %v4552, %v4556
    %v4561 = vmul.f32 %v93, %v244
    %v4562 = vmul.f32 %v94, %v248
    %v4563 = vmul.f32 %v137, %v244
    %v4564 = vmul.f32 %v138, %v248
    %v4569 = vrot.slane %v4561, 1
    %v4570 = vrot.slane %v4562, 1
    %v4571 = vrot.slane %v4563, 1
    %v4572 = vrot.slane %v4564, 1
    %v4577 = vadd.f32 %v4557, %v4569
    %v4578 = vadd.f32 %v4558, %v4570
    %v4579 = vadd.f32 %v4559, %v4571
    %v4580 = vadd.f32 %v4560, %v4572
    %v4581 = vmul.f32 %v97, %v272
    %v4582 = vmul.f32 %v98, %v276
    %v4583 = vmul.f32 %v141, %v272
    %v4584 = vmul.f32 %v142, %v276
    %v4589 = vrot.slane %v4581, 1
    %v4590 = vrot.slane %v4582, 1
    %v4591 = vrot.slane %v4583, 1
    %v4592 = vrot.slane %v4584, 1
    %v4597 = vadd.f32 %v4577, %v4589
    %v4598 = vadd.f32 %v4578, %v4590
    %v4599 = vadd.f32 %v4579, %v4591
    %v4600 = vadd.f32 %v4580, %v4592
    %v4601 = vmul.f32 %v101, %v300
    %v4602 = vmul.f32 %v102, %v304
    %v4603 = vmul.f32 %v145, %v300
    %v4604 = vmul.f32 %v146, %v304
    %v4609 = vrot.slane %v4601, 1
    %v4610 = vrot.slane %v4602, 1
    %v4611 = vrot.slane %v4603, 1
    %v4612 = vrot.slane %v4604, 1
    %v4617 = vadd.f32 %v4597, %v4609
    %v4618 = vadd.f32 %v4598, %v4610
    %v4619 = vadd.f32 %v4599, %v4611
    %v4620 = vadd.f32 %v4600, %v4612
    %v4621 = vmul.f32 %v105, %v328
    %v4622 = vmul.f32 %v106, %v332
    %v4623 = vmul.f32 %v149, %v328
    %v4624 = vmul.f32 %v150, %v332
    %v4629 = vrot.slane %v4621, 1
    %v4630 = vrot.slane %v4622, 1
    %v4631 = vrot.slane %v4623, 1
    %v4632 = vrot.slane %v4624, 1
    %v4637 = vadd.f32 %v4617, %v4629
    %v4638 = vadd.f32 %v4618, %v4630
    %v4639 = vadd.f32 %v4619, %v4631
    %v4640 = vadd.f32 %v4620, %v4632
    %v4641 = vmul.f32 %v109, %v356
    %v4642 = vmul.f32 %v110, %v360
    %v4643 = vmul.f32 %v153, %v356
    %v4644 = vmul.f32 %v154, %v360
    %v4649 = vrot.slane %v4641, 1
    %v4650 = vrot.slane %v4642, 1
    %v4651 = vrot.slane %v4643, 1
    %v4652 = vrot.slane %v4644, 1
    %v4657 = vadd.f32 %v4637, %v4649
    %v4658 = vadd.f32 %v4638, %v4650
    %v4659 = vadd.f32 %v4639, %v4651
    %v4660 = vadd.f32 %v4640, %v4652
    %v4661 = vmul.f32 %v93, %v384
    %v4662 = vmul.f32 %v94, %v388
    %v4663 = vmul.f32 %v95, %v384
    %v4664 = vmul.f32 %v96, %v388
    %v4665 = vmul.f32 %v137, %v384
    %v4666 = vmul.f32 %v138, %v388
    %v4667 = vmul.f32 %v139, %v384
    %v4668 = vmul.f32 %v140, %v388
    %v4677 = vrot.slane %v4661, 2
    %v4678 = vrot.slane %v4663, 2
    %v4679 = vsel %vm405, %v4677, %v4678
    %v4680 = vrot.slane %v4662, 2
    %v4681 = vrot.slane %v4664, 2
    %v4682 = vsel %vm405, %v4680, %v4681
    %v4683 = vrot.slane %v4665, 2
    %v4684 = vrot.slane %v4667, 2
    %v4685 = vsel %vm405, %v4683, %v4684
    %v4686 = vrot.slane %v4666, 2
    %v4687 = vrot.slane %v4668, 2
    %v4688 = vsel %vm405, %v4686, %v4687
    %v4693 = vadd.f32 %v4657, %v4679
    %v4694 = vadd.f32 %v4658, %v4682
    %v4695 = vadd.f32 %v4659, %v4685
    %v4696 = vadd.f32 %v4660, %v4688
    %v4697 = vmul.f32 %v97, %v429
    %v4698 = vmul.f32 %v98, %v433
    %v4699 = vmul.f32 %v99, %v429
    %v4700 = vmul.f32 %v100, %v433
    %v4701 = vmul.f32 %v141, %v429
    %v4702 = vmul.f32 %v142, %v433
    %v4703 = vmul.f32 %v143, %v429
    %v4704 = vmul.f32 %v144, %v433
    %v4713 = vrot.slane %v4697, 2
    %v4714 = vrot.slane %v4699, 2
    %v4715 = vsel %vm405, %v4713, %v4714
    %v4716 = vrot.slane %v4698, 2
    %v4717 = vrot.slane %v4700, 2
    %v4718 = vsel %vm405, %v4716, %v4717
    %v4719 = vrot.slane %v4701, 2
    %v4720 = vrot.slane %v4703, 2
    %v4721 = vsel %vm405, %v4719, %v4720
    %v4722 = vrot.slane %v4702, 2
    %v4723 = vrot.slane %v4704, 2
    %v4724 = vsel %vm405, %v4722, %v4723
    %v4729 = vadd.f32 %v4693, %v4715
    %v4730 = vadd.f32 %v4694, %v4718
    %v4731 = vadd.f32 %v4695, %v4721
    %v4732 = vadd.f32 %v4696, %v4724
    %v4733 = vmul.f32 %v101, %v473
    %v4734 = vmul.f32 %v102, %v477
    %v4735 = vmul.f32 %v103, %v473
    %v4736 = vmul.f32 %v104, %v477
    %v4737 = vmul.f32 %v145, %v473
    %v4738 = vmul.f32 %v146, %v477
    %v4739 = vmul.f32 %v147, %v473
    %v4740 = vmul.f32 %v148, %v477
    %v4749 = vrot.slane %v4733, 2
    %v4750 = vrot.slane %v4735, 2
    %v4751 = vsel %vm405, %v4749, %v4750
    %v4752 = vrot.slane %v4734, 2
    %v4753 = vrot.slane %v4736, 2
    %v4754 = vsel %vm405, %v4752, %v4753
    %v4755 = vrot.slane %v4737, 2
    %v4756 = vrot.slane %v4739, 2
    %v4757 = vsel %vm405, %v4755, %v4756
    %v4758 = vrot.slane %v4738, 2
    %v4759 = vrot.slane %v4740, 2
    %v4760 = vsel %vm405, %v4758, %v4759
    %v4765 = vadd.f32 %v4729, %v4751
    %v4766 = vadd.f32 %v4730, %v4754
    %v4767 = vadd.f32 %v4731, %v4757
    %v4768 = vadd.f32 %v4732, %v4760
    %v4769 = vmul.f32 %v105, %v517
    %v4770 = vmul.f32 %v106, %v521
    %v4771 = vmul.f32 %v107, %v517
    %v4772 = vmul.f32 %v108, %v521
    %v4773 = vmul.f32 %v149, %v517
    %v4774 = vmul.f32 %v150, %v521
    %v4775 = vmul.f32 %v151, %v517
    %v4776 = vmul.f32 %v152, %v521
    %v4785 = vrot.slane %v4769, 2
    %v4786 = vrot.slane %v4771, 2
    %v4787 = vsel %vm405, %v4785, %v4786
    %v4788 = vrot.slane %v4770, 2
    %v4789 = vrot.slane %v4772, 2
    %v4790 = vsel %vm405, %v4788, %v4789
    %v4791 = vrot.slane %v4773, 2
    %v4792 = vrot.slane %v4775, 2
    %v4793 = vsel %vm405, %v4791, %v4792
    %v4794 = vrot.slane %v4774, 2
    %v4795 = vrot.slane %v4776, 2
    %v4796 = vsel %vm405, %v4794, %v4795
    %v4801 = vadd.f32 %v4765, %v4787
    %v4802 = vadd.f32 %v4766, %v4790
    %v4803 = vadd.f32 %v4767, %v4793
    %v4804 = vadd.f32 %v4768, %v4796
    %v4805 = vmul.f32 %v109, %v561
    %v4806 = vmul.f32 %v110, %v565
    %v4807 = vmul.f32 %v111, %v561
    %v4808 = vmul.f32 %v112, %v565
    %v4809 = vmul.f32 %v153, %v561
    %v4810 = vmul.f32 %v154, %v565
    %v4811 = vmul.f32 %v155, %v561
    %v4812 = vmul.f32 %v156, %v565
    %v4821 = vrot.slane %v4805, 2
    %v4822 = vrot.slane %v4807, 2
    %v4823 = vsel %vm405, %v4821, %v4822
    %v4824 = vrot.slane %v4806, 2
    %v4825 = vrot.slane %v4808, 2
    %v4826 = vsel %vm405, %v4824, %v4825
    %v4827 = vrot.slane %v4809, 2
    %v4828 = vrot.slane %v4811, 2
    %v4829 = vsel %vm405, %v4827, %v4828
    %v4830 = vrot.slane %v4810, 2
    %v4831 = vrot.slane %v4812, 2
    %v4832 = vsel %vm405, %v4830, %v4831
    %v4837 = vadd.f32 %v4801, %v4823
    %v4838 = vadd.f32 %v4802, %v4826
    %v4839 = vadd.f32 %v4803, %v4829
    %v4840 = vadd.f32 %v4804, %v4832
    %v4841 = vmul.f32 %v93, %v605
    %v4842 = vmul.f32 %v94, %v609
    %v4843 = vmul.f32 %v95, %v605
    %v4844 = vmul.f32 %v96, %v609
    %v4845 = vmul.f32 %v137, %v605
    %v4846 = vmul.f32 %v138, %v609
    %v4847 = vmul.f32 %v139, %v605
    %v4848 = vmul.f32 %v140, %v609
    %v4857 = vrot.slane %v4841, 3
    %v4858 = vrot.slane %v4843, 3
    %v4859 = vsel %vm626, %v4857, %v4858
    %v4860 = vrot.slane %v4842, 3
    %v4861 = vrot.slane %v4844, 3
    %v4862 = vsel %vm626, %v4860, %v4861
    %v4863 = vrot.slane %v4845, 3
    %v4864 = vrot.slane %v4847, 3
    %v4865 = vsel %vm626, %v4863, %v4864
    %v4866 = vrot.slane %v4846, 3
    %v4867 = vrot.slane %v4848, 3
    %v4868 = vsel %vm626, %v4866, %v4867
    %v4873 = vadd.f32 %v4837, %v4859
    %v4874 = vadd.f32 %v4838, %v4862
    %v4875 = vadd.f32 %v4839, %v4865
    %v4876 = vadd.f32 %v4840, %v4868
    %v4877 = vmul.f32 %v97, %v650
    %v4878 = vmul.f32 %v98, %v654
    %v4879 = vmul.f32 %v99, %v650
    %v4880 = vmul.f32 %v100, %v654
    %v4881 = vmul.f32 %v141, %v650
    %v4882 = vmul.f32 %v142, %v654
    %v4883 = vmul.f32 %v143, %v650
    %v4884 = vmul.f32 %v144, %v654
    %v4893 = vrot.slane %v4877, 3
    %v4894 = vrot.slane %v4879, 3
    %v4895 = vsel %vm626, %v4893, %v4894
    %v4896 = vrot.slane %v4878, 3
    %v4897 = vrot.slane %v4880, 3
    %v4898 = vsel %vm626, %v4896, %v4897
    %v4899 = vrot.slane %v4881, 3
    %v4900 = vrot.slane %v4883, 3
    %v4901 = vsel %vm626, %v4899, %v4900
    %v4902 = vrot.slane %v4882, 3
    %v4903 = vrot.slane %v4884, 3
    %v4904 = vsel %vm626, %v4902, %v4903
    %v4909 = vadd.f32 %v4873, %v4895
    %v4910 = vadd.f32 %v4874, %v4898
    %v4911 = vadd.f32 %v4875, %v4901
    %v4912 = vadd.f32 %v4876, %v4904
    %v4913 = vmul.f32 %v101, %v694
    %v4914 = vmul.f32 %v102, %v698
    %v4915 = vmul.f32 %v103, %v694
    %v4916 = vmul.f32 %v104, %v698
    %v4917 = vmul.f32 %v145, %v694
    %v4918 = vmul.f32 %v146, %v698
    %v4919 = vmul.f32 %v147, %v694
    %v4920 = vmul.f32 %v148, %v698
    %v4929 = vrot.slane %v4913, 3
    %v4930 = vrot.slane %v4915, 3
    %v4931 = vsel %vm626, %v4929, %v4930
    %v4932 = vrot.slane %v4914, 3
    %v4933 = vrot.slane %v4916, 3
    %v4934 = vsel %vm626, %v4932, %v4933
    %v4935 = vrot.slane %v4917, 3
    %v4936 = vrot.slane %v4919, 3
    %v4937 = vsel %vm626, %v4935, %v4936
    %v4938 = vrot.slane %v4918, 3
    %v4939 = vrot.slane %v4920, 3
    %v4940 = vsel %vm626, %v4938, %v4939
    %v4945 = vadd.f32 %v4909, %v4931
    %v4946 = vadd.f32 %v4910, %v4934
    %v4947 = vadd.f32 %v4911, %v4937
    %v4948 = vadd.f32 %v4912, %v4940
    %v4949 = vmul.f32 %v105, %v738
    %v4950 = vmul.f32 %v106, %v742
    %v4951 = vmul.f32 %v107, %v738
    %v4952 = vmul.f32 %v108, %v742
    %v4953 = vmul.f32 %v149, %v738
    %v4954 = vmul.f32 %v150, %v742
    %v4955 = vmul.f32 %v151, %v738
    %v4956 = vmul.f32 %v152, %v742
    %v4965 = vrot.slane %v4949, 3
    %v4966 = vrot.slane %v4951, 3
    %v4967 = vsel %vm626, %v4965, %v4966
    %v4968 = vrot.slane %v4950, 3
    %v4969 = vrot.slane %v4952, 3
    %v4970 = vsel %vm626, %v4968, %v4969
    %v4971 = vrot.slane %v4953, 3
    %v4972 = vrot.slane %v4955, 3
    %v4973 = vsel %vm626, %v4971, %v4972
    %v4974 = vrot.slane %v4954, 3
    %v4975 = vrot.slane %v4956, 3
    %v4976 = vsel %vm626, %v4974, %v4975
    %v4981 = vadd.f32 %v4945, %v4967
    %v4982 = vadd.f32 %v4946, %v4970
    %v4983 = vadd.f32 %v4947, %v4973
    %v4984 = vadd.f32 %v4948, %v4976
    %v4985 = vmul.f32 %v109, %v782
    %v4986 = vmul.f32 %v110, %v786
    %v4987 = vmul.f32 %v111, %v782
    %v4988 = vmul.f32 %v112, %v786
    %v4989 = vmul.f32 %v153, %v782
    %v4990 = vmul.f32 %v154, %v786
    %v4991 = vmul.f32 %v155, %v782
    %v4992 = vmul.f32 %v156, %v786
    %v5001 = vrot.slane %v4985, 3
    %v5002 = vrot.slane %v4987, 3
    %v5003 = vsel %vm626, %v5001, %v5002
    %v5004 = vrot.slane %v4986, 3
    %v5005 = vrot.slane %v4988, 3
    %v5006 = vsel %vm626, %v5004, %v5005
    %v5007 = vrot.slane %v4989, 3
    %v5008 = vrot.slane %v4991, 3
    %v5009 = vsel %vm626, %v5007, %v5008
    %v5010 = vrot.slane %v4990, 3
    %v5011 = vrot.slane %v4992, 3
    %v5012 = vsel %vm626, %v5010, %v5011
    %v5017 = vadd.f32 %v4981, %v5003
    %v5018 = vadd.f32 %v4982, %v5006
    %v5019 = vadd.f32 %v4983, %v5009
    %v5020 = vadd.f32 %v4984, %v5012
    %v5021 = vmul.f32 %v93, %v826
    %v5022 = vmul.f32 %v94, %v830
    %v5023 = vmul.f32 %v95, %v826
    %v5024 = vmul.f32 %v96, %v830
    %v5025 = vmul.f32 %v137, %v826
    %v5026 = vmul.f32 %v138, %v830
    %v5027 = vmul.f32 %v139, %v826
    %v5028 = vmul.f32 %v140, %v830
    %v5037 = vrot.slane %v5021, 4
    %v5038 = vrot.slane %v5023, 4
    %v5039 = vsel %vm847, %v5037, %v5038
    %v5040 = vrot.slane %v5022, 4
    %v5041 = vrot.slane %v5024, 4
    %v5042 = vsel %vm847, %v5040, %v5041
    %v5043 = vrot.slane %v5025, 4
    %v5044 = vrot.slane %v5027, 4
    %v5045 = vsel %vm847, %v5043, %v5044
    %v5046 = vrot.slane %v5026, 4
    %v5047 = vrot.slane %v5028, 4
    %v5048 = vsel %vm847, %v5046, %v5047
    %v5053 = vadd.f32 %v5017, %v5039
    %v5054 = vadd.f32 %v5018, %v5042
    %v5055 = vadd.f32 %v5019, %v5045
    %v5056 = vadd.f32 %v5020, %v5048
    %v5057 = vmul.f32 %v97, %v871
    %v5058 = vmul.f32 %v98, %v875
    %v5059 = vmul.f32 %v99, %v871
    %v5060 = vmul.f32 %v100, %v875
    %v5061 = vmul.f32 %v141, %v871
    %v5062 = vmul.f32 %v142, %v875
    %v5063 = vmul.f32 %v143, %v871
    %v5064 = vmul.f32 %v144, %v875
    %v5073 = vrot.slane %v5057, 4
    %v5074 = vrot.slane %v5059, 4
    %v5075 = vsel %vm847, %v5073, %v5074
    %v5076 = vrot.slane %v5058, 4
    %v5077 = vrot.slane %v5060, 4
    %v5078 = vsel %vm847, %v5076, %v5077
    %v5079 = vrot.slane %v5061, 4
    %v5080 = vrot.slane %v5063, 4
    %v5081 = vsel %vm847, %v5079, %v5080
    %v5082 = vrot.slane %v5062, 4
    %v5083 = vrot.slane %v5064, 4
    %v5084 = vsel %vm847, %v5082, %v5083
    %v5089 = vadd.f32 %v5053, %v5075
    %v5090 = vadd.f32 %v5054, %v5078
    %v5091 = vadd.f32 %v5055, %v5081
    %v5092 = vadd.f32 %v5056, %v5084
    %v5093 = vmul.f32 %v101, %v915
    %v5094 = vmul.f32 %v102, %v919
    %v5095 = vmul.f32 %v103, %v915
    %v5096 = vmul.f32 %v104, %v919
    %v5097 = vmul.f32 %v145, %v915
    %v5098 = vmul.f32 %v146, %v919
    %v5099 = vmul.f32 %v147, %v915
    %v5100 = vmul.f32 %v148, %v919
    %v5109 = vrot.slane %v5093, 4
    %v5110 = vrot.slane %v5095, 4
    %v5111 = vsel %vm847, %v5109, %v5110
    %v5112 = vrot.slane %v5094, 4
    %v5113 = vrot.slane %v5096, 4
    %v5114 = vsel %vm847, %v5112, %v5113
    %v5115 = vrot.slane %v5097, 4
    %v5116 = vrot.slane %v5099, 4
    %v5117 = vsel %vm847, %v5115, %v5116
    %v5118 = vrot.slane %v5098, 4
    %v5119 = vrot.slane %v5100, 4
    %v5120 = vsel %vm847, %v5118, %v5119
    %v5125 = vadd.f32 %v5089, %v5111
    %v5126 = vadd.f32 %v5090, %v5114
    %v5127 = vadd.f32 %v5091, %v5117
    %v5128 = vadd.f32 %v5092, %v5120
    %v5129 = vmul.f32 %v105, %v959
    %v5130 = vmul.f32 %v106, %v963
    %v5131 = vmul.f32 %v107, %v959
    %v5132 = vmul.f32 %v108, %v963
    %v5133 = vmul.f32 %v149, %v959
    %v5134 = vmul.f32 %v150, %v963
    %v5135 = vmul.f32 %v151, %v959
    %v5136 = vmul.f32 %v152, %v963
    %v5145 = vrot.slane %v5129, 4
    %v5146 = vrot.slane %v5131, 4
    %v5147 = vsel %vm847, %v5145, %v5146
    %v5148 = vrot.slane %v5130, 4
    %v5149 = vrot.slane %v5132, 4
    %v5150 = vsel %vm847, %v5148, %v5149
    %v5151 = vrot.slane %v5133, 4
    %v5152 = vrot.slane %v5135, 4
    %v5153 = vsel %vm847, %v5151, %v5152
    %v5154 = vrot.slane %v5134, 4
    %v5155 = vrot.slane %v5136, 4
    %v5156 = vsel %vm847, %v5154, %v5155
    %v5161 = vadd.f32 %v5125, %v5147
    %v5162 = vadd.f32 %v5126, %v5150
    %v5163 = vadd.f32 %v5127, %v5153
    %v5164 = vadd.f32 %v5128, %v5156
    %v5165 = vmul.f32 %v109, %v1003
    %v5166 = vmul.f32 %v110, %v1007
    %v5167 = vmul.f32 %v111, %v1003
    %v5168 = vmul.f32 %v112, %v1007
    %v5169 = vmul.f32 %v153, %v1003
    %v5170 = vmul.f32 %v154, %v1007
    %v5171 = vmul.f32 %v155, %v1003
    %v5172 = vmul.f32 %v156, %v1007
    %v5181 = vrot.slane %v5165, 4
    %v5182 = vrot.slane %v5167, 4
    %v5183 = vsel %vm847, %v5181, %v5182
    %v5184 = vrot.slane %v5166, 4
    %v5185 = vrot.slane %v5168, 4
    %v5186 = vsel %vm847, %v5184, %v5185
    %v5187 = vrot.slane %v5169, 4
    %v5188 = vrot.slane %v5171, 4
    %v5189 = vsel %vm847, %v5187, %v5188
    %v5190 = vrot.slane %v5170, 4
    %v5191 = vrot.slane %v5172, 4
    %v5192 = vsel %vm847, %v5190, %v5191
    %v5197 = vadd.f32 %v5161, %v5183
    %v5198 = vadd.f32 %v5162, %v5186
    %v5199 = vadd.f32 %v5163, %v5189
    %v5200 = vadd.f32 %v5164, %v5192
    %s5201 = scalar_lea.vmem [#allocation2], 96
    %5202 = vst [vmem:[%s5201] sm:$0x7f] %v5197
    %5203 = vst [vmem:[%s5201 + $0x8] sm:$0x7f] %v5198
    %5204 = vst [vmem:[%s5201 + $0x70] sm:$0x7f] %v5199
    %5205 = vst [vmem:[%s5201 + $0x78] sm:$0x7f] %v5200
    %v5206 = vadd.f32 %v4513, %v5197
    %v5207 = vadd.f32 %v4514, %v5198
    %v5208 = vadd.f32 %v4515, %v5199
    %v5209 = vadd.f32 %v4516, %v5200
    %v5210 = vmul.f32 %v5197, %v5197
    %v5211 = vmul.f32 %v5198, %v5198
    %v5212 = vmul.f32 %v5199, %v5199
    %v5213 = vmul.f32 %v5200, %v5200
    %v5214 = vadd.f32 %v4521, %v5210
    %v5215 = vadd.f32 %v4522, %v5211
    %v5216 = vadd.f32 %v4523, %v5212
    %v5217 = vadd.f32 %v4524, %v5213
    %vm5218 = vcmask 1046528
    %v5219 = vsel %vm5218, %v5206, 0.0
    %v5220 = vsel %vm5218, %v5208, 0.0
    %v5221 = vadd.f32 %v5219, %v5220
    %v5222 = vrot.slane %v5221, 4
    %v5223 = vadd.f32 %v5221, %v5222
    %v5224 = vrot.slane %v5223, 2
    %v5225 = vadd.f32 %v5223, %v5224
    %v5226 = vrot.slane %v5225, 1
    %v5227 = vadd.f32 %v5225, %v5226
    %v5228 = vsel %vm5218, %v5207, 0.0
    %v5229 = vsel %vm5218, %v5209, 0.0
    %v5230 = vadd.f32 %v5228, %v5229
    %v5231 = vrot.slane %v5230, 4
    %v5232 = vadd.f32 %v5230, %v5231
    %v5233 = vrot.slane %v5232, 2
    %v5234 = vadd.f32 %v5232, %v5233
    %v5235 = vrot.slane %v5234, 1
    %v5236 = vadd.f32 %v5234, %v5235
    %v5237 = vsel %vm5218, %v5214, 0.0
    %v5238 = vsel %vm5218, %v5216, 0.0
    %v5239 = vadd.f32 %v5237, %v5238
    %v5240 = vrot.slane %v5239, 4
    %v5241 = vadd.f32 %v5239, %v5240
    %v5242 = vrot.slane %v5241, 2
    %v5243 = vadd.f32 %v5241, %v5242
    %v5244 = vrot.slane %v5243, 1
    %v5245 = vadd.f32 %v5243, %v5244
    %v5246 = vsel %vm5218, %v5215, 0.0
    %v5247 = vsel %vm5218, %v5217, 0.0
    %v5248 = vadd.f32 %v5246, %v5247
    %v5249 = vrot.slane %v5248, 4
    %v5250 = vadd.f32 %v5248, %v5249
    %v5251 = vrot.slane %v5250, 2
    %v5252 = vadd.f32 %v5250, %v5251
    %v5253 = vrot.slane %v5252, 1
    %v5254 = vadd.f32 %v5252, %v5253
    %v5255 = vrcp.pop 98.0
    %v5256 = vmul.f32 %v5227, %v5255
    %v5257 = vmul.f32 %v5236, %v5255
    %v5258 = vmul.f32 %v5245, %v5255
    %v5259 = vmul.f32 %v5254, %v5255
    %v5260 = vmul.f32 %v5256, %v5256
    %v5261 = vmul.f32 %v5257, %v5257
    %v5262 = vsub.f32 %v5258, %v5260
    %v5263 = vsub.f32 %v5259, %v5261
    %v5264 = vmax.f32 %v5262, 0.0
    %v5265 = vmax.f32 %v5263, 0.0
    %v5266 = vadd.f32 %v5264, 0.001
    %v5267 = vadd.f32 %v5265, 0.001
    %v5268 = vrsqrt.pop %v5266
    %v5269 = vrsqrt.pop %v5267
    %v5270 = vld [vmem:[#allocation8] sm:$0x3]
    %v5271 = vld [vmem:[#allocation9] sm:$0x3]
    %v5274 = vcombine.low %v5268, %v5269
    %v5276 = vunpack.c.l.s4 1966171168
    %v5277 = vunpack.c.0.s8 %v5276
    %v5278 = vlaneseq
    %v5279 = vshrl.u32 %v5278, 7
    %v5280 = vsub.s32 %v5277, %v5279
    %v5281 = vrot.slane %v5274, %v5280
    %v5283 = vunpack.c.l.s4 1966171168
    %v5284 = vunpack.c.0.s8 %v5283
    %v5285 = vlaneseq
    %v5286 = vshrl.u32 %v5285, 7
    %v5287 = vsub.s32 %v5284, %v5286
    %v5288 = vrot.slane %v5281, %v5287
    %v5290 = vmul.f32 %v5270, %v5288
    %v5292 = vlaneseq
    %v5293 = vshrl.u32 %v5292, 7
    %v5294 = vsub.s32 0, %v5293
    %v5295 = vrot.slane %v5270, %v5294
    %v5296 = vlaneseq
    %v5297 = vshrl.u32 %v5296, 7
    %v5298 = vsub.s32 1, %v5297
    %v5299 = vrot.slane %v5270, %v5298
    %v5302 = vmul.f32 %v5256, %v5295
    %v5303 = vmul.f32 %v5257, %v5299
    %v5304 = vmul.f32 %v5302, %v5268
    %v5305 = vmul.f32 %v5303, %v5269
    %v5308 = vcombine.low %v5304, %v5305
    %v5310 = vunpack.c.l.s4 1966171168
    %v5311 = vunpack.c.0.s8 %v5310
    %v5312 = vlaneseq
    %v5313 = vshrl.u32 %v5312, 7
    %v5314 = vsub.s32 %v5311, %v5313
    %v5315 = vrot.slane %v5308, %v5314
    %v5317 = vunpack.c.l.s4 1966171168
    %v5318 = vunpack.c.0.s8 %v5317
    %v5319 = vlaneseq
    %v5320 = vshrl.u32 %v5319, 7
    %v5321 = vsub.s32 %v5318, %v5320
    %v5322 = vrot.slane %v5315, %v5321
    %v5324 = vsub.f32 %v5271, %v5322
    %v5325 = vld [vmem:[#allocation2] sm:$0x7f]
    %v5326 = vld [vmem:[#allocation2 + $0x8] sm:$0x7f]
    %v5327 = vld [vmem:[#allocation2 + $0x10] sm:$0x7f]
    %v5328 = vld [vmem:[#allocation2 + $0x18] sm:$0x7f]
    %v5329 = vld [vmem:[#allocation2 + $0x20] sm:$0x7f]
    %v5330 = vld [vmem:[#allocation2 + $0x28] sm:$0x7f]
    %v5331 = vld [vmem:[#allocation2 + $0x30] sm:$0x7f]
    %v5332 = vld [vmem:[#allocation2 + $0x38] sm:$0x7f]
    %v5333 = vld [vmem:[#allocation2 + $0x40] sm:$0x7f]
    %v5334 = vld [vmem:[#allocation2 + $0x48] sm:$0x7f]
    %v5335 = vld [vmem:[#allocation2 + $0x50] sm:$0x7f]
    %v5336 = vld [vmem:[#allocation2 + $0x58] sm:$0x7f]
    %v5337 = vld [vmem:[#allocation2 + $0x60] sm:$0x7f]
    %v5338 = vld [vmem:[#allocation2 + $0x68] sm:$0x7f]
    %v5339 = vld [vmem:[#allocation2 + $0x70] sm:$0x7f]
    %v5340 = vld [vmem:[#allocation2 + $0x78] sm:$0x7f]
    %v5341 = vld [vmem:[#allocation2 + $0x80] sm:$0x7f]
    %v5342 = vld [vmem:[#allocation2 + $0x88] sm:$0x7f]
    %v5343 = vld [vmem:[#allocation2 + $0x90] sm:$0x7f]
    %v5344 = vld [vmem:[#allocation2 + $0x98] sm:$0x7f]
    %v5345 = vld [vmem:[#allocation2 + $0xa0] sm:$0x7f]
    %v5346 = vld [vmem:[#allocation2 + $0xa8] sm:$0x7f]
    %v5347 = vld [vmem:[#allocation2 + $0xb0] sm:$0x7f]
    %v5348 = vld [vmem:[#allocation2 + $0xb8] sm:$0x7f]
    %v5349 = vld [vmem:[#allocation2 + $0xc0] sm:$0x7f]
    %v5350 = vld [vmem:[#allocation2 + $0xc8] sm:$0x7f]
    %v5351 = vld [vmem:[#allocation2 + $0xd0] sm:$0x7f]
    %v5352 = vld [vmem:[#allocation2 + $0xd8] sm:$0x7f]
    %v5354 = vlaneseq
    %v5355 = vshrl.u32 %v5354, 7
    %v5356 = vsub.s32 0, %v5355
    %v5357 = vrot.slane %v5290, %v5356
    %v5358 = vlaneseq
    %v5359 = vshrl.u32 %v5358, 7
    %v5360 = vsub.s32 1, %v5359
    %v5361 = vrot.slane %v5290, %v5360
    %v5364 = vmul.f32 %v5325, %v5357
    %v5365 = vmul.f32 %v5326, %v5361
    %v5366 = vmul.f32 %v5327, %v5357
    %v5367 = vmul.f32 %v5328, %v5361
    %v5368 = vmul.f32 %v5329, %v5357
    %v5369 = vmul.f32 %v5330, %v5361
    %v5370 = vmul.f32 %v5331, %v5357
    %v5371 = vmul.f32 %v5332, %v5361
    %v5372 = vmul.f32 %v5333, %v5357
    %v5373 = vmul.f32 %v5334, %v5361
    %v5374 = vmul.f32 %v5335, %v5357
    %v5375 = vmul.f32 %v5336, %v5361
    %v5376 = vmul.f32 %v5337, %v5357
    %v5377 = vmul.f32 %v5338, %v5361
    %v5378 = vmul.f32 %v5339, %v5357
    %v5379 = vmul.f32 %v5340, %v5361
    %v5380 = vmul.f32 %v5341, %v5357
    %v5381 = vmul.f32 %v5342, %v5361
    %v5382 = vmul.f32 %v5343, %v5357
    %v5383 = vmul.f32 %v5344, %v5361
    %v5384 = vmul.f32 %v5345, %v5357
    %v5385 = vmul.f32 %v5346, %v5361
    %v5386 = vmul.f32 %v5347, %v5357
    %v5387 = vmul.f32 %v5348, %v5361
    %v5388 = vmul.f32 %v5349, %v5357
    %v5389 = vmul.f32 %v5350, %v5361
    %v5390 = vmul.f32 %v5351, %v5357
    %v5391 = vmul.f32 %v5352, %v5361
    %v5393 = vlaneseq
    %v5394 = vshrl.u32 %v5393, 7
    %v5395 = vsub.s32 0, %v5394
    %v5396 = vrot.slane %v5324, %v5395
    %v5397 = vlaneseq
    %v5398 = vshrl.u32 %v5397, 7
    %v5399 = vsub.s32 1, %v5398
    %v5400 = vrot.slane %v5324, %v5399
    %v5403 = vadd.f32 %v5364, %v5396
    %v5404 = vadd.f32 %v5365, %v5400
    %v5405 = vadd.f32 %v5366, %v5396
    %v5406 = vadd.f32 %v5367, %v5400
    %v5407 = vadd.f32 %v5368, %v5396
    %v5408 = vadd.f32 %v5369, %v5400
    %v5409 = vadd.f32 %v5370, %v5396
    %v5410 = vadd.f32 %v5371, %v5400
    %v5411 = vadd.f32 %v5372, %v5396
    %v5412 = vadd.f32 %v5373, %v5400
    %v5413 = vadd.f32 %v5374, %v5396
    %v5414 = vadd.f32 %v5375, %v5400
    %v5415 = vadd.f32 %v5376, %v5396
    %v5416 = vadd.f32 %v5377, %v5400
    %v5417 = vadd.f32 %v5378, %v5396
    %v5418 = vadd.f32 %v5379, %v5400
    %v5419 = vadd.f32 %v5380, %v5396
    %v5420 = vadd.f32 %v5381, %v5400
    %v5421 = vadd.f32 %v5382, %v5396
    %v5422 = vadd.f32 %v5383, %v5400
    %v5423 = vadd.f32 %v5384, %v5396
    %v5424 = vadd.f32 %v5385, %v5400
    %v5425 = vadd.f32 %v5386, %v5396
    %v5426 = vadd.f32 %v5387, %v5400
    %v5427 = vadd.f32 %v5388, %v5396
    %v5428 = vadd.f32 %v5389, %v5400
    %v5429 = vadd.f32 %v5390, %v5396
    %v5430 = vadd.f32 %v5391, %v5400
    %5431 = vst [vmem:[#allocation11] sm:$0x7f] %v5403
    %5432 = vst [vmem:[#allocation11 + $0x8] sm:$0x7f] %v5404
    %5433 = vst [vmem:[#allocation11 + $0x10] sm:$0x7f] %v5405
    %5434 = vst [vmem:[#allocation11 + $0x18] sm:$0x7f] %v5406
    %5435 = vst [vmem:[#allocation11 + $0x20] sm:$0x7f] %v5407
    %5436 = vst [vmem:[#allocation11 + $0x28] sm:$0x7f] %v5408
    %5437 = vst [vmem:[#allocation11 + $0x30] sm:$0x7f] %v5409
    %5438 = vst [vmem:[#allocation11 + $0x38] sm:$0x7f] %v5410
    %5439 = vst [vmem:[#allocation11 + $0x40] sm:$0x7f] %v5411
    %5440 = vst [vmem:[#allocation11 + $0x48] sm:$0x7f] %v5412
    %5441 = vst [vmem:[#allocation11 + $0x50] sm:$0x7f] %v5413
    %5442 = vst [vmem:[#allocation11 + $0x58] sm:$0x7f] %v5414
    %5443 = vst [vmem:[#allocation11 + $0x60] sm:$0x7f] %v5415
    %5444 = vst [vmem:[#allocation11 + $0x68] sm:$0x7f] %v5416
    %5445 = vst [vmem:[#allocation11 + $0x70] sm:$0x7f] %v5417
    %5446 = vst [vmem:[#allocation11 + $0x78] sm:$0x7f] %v5418
    %5447 = vst [vmem:[#allocation11 + $0x80] sm:$0x7f] %v5419
    %5448 = vst [vmem:[#allocation11 + $0x88] sm:$0x7f] %v5420
    %5449 = vst [vmem:[#allocation11 + $0x90] sm:$0x7f] %v5421
    %5450 = vst [vmem:[#allocation11 + $0x98] sm:$0x7f] %v5422
    %5451 = vst [vmem:[#allocation11 + $0xa0] sm:$0x7f] %v5423
    %5452 = vst [vmem:[#allocation11 + $0xa8] sm:$0x7f] %v5424
    %5453 = vst [vmem:[#allocation11 + $0xb0] sm:$0x7f] %v5425
    %5454 = vst [vmem:[#allocation11 + $0xb8] sm:$0x7f] %v5426
    %5455 = vst [vmem:[#allocation11 + $0xc0] sm:$0x7f] %v5427
    %5456 = vst [vmem:[#allocation11 + $0xc8] sm:$0x7f] %v5428
    %5457 = vst [vmem:[#allocation11 + $0xd0] sm:$0x7f] %v5429
    %5458 = vst [vmem:[#allocation11 + $0xd8] sm:$0x7f] %v5430
    // Predicated region
    $region34: #{dwconv_bn.1} parent=1 // pred_check
      _
    $region35: #{dwconv_bn.1} parent=1 // pred_check_branch
      %5460 = sbr.rel (0) target = $region37
    $region36: #{dwconv_bn.1} parent=1 // pred_region
      %s5462 = ssub.s32 3584, 3584
      %5463 = vsyncadd [#allocation5], %s5462
      %s5464 = sshll.u32 [#allocation11], 4
      %s5465 = int_to_ptr.vmem [resolvable:$true] %s5464
      %5470 = dma.vmem_to_hbm [thread:$0]  %s5465, 3584, %s4, [#allocation5], 256, 256, 16
    $region37: #{dwconv_bn.1} parent=1 // pred_fallthru
      _
    // Predicated region
    $region38: #{dwconv_bn.1} parent=1 // pred_check
      _
    $region39: #{dwconv_bn.1} parent=1 // pred_check_branch
      %5472 = sbr.rel (0) target = $region41
    $region40: #{dwconv_bn.1} parent=1 // pred_region
      %5473 = dma.done [#allocation5], 3584
    $region41: #{dwconv_bn.1} parent=1 // pred_fallthru
      _
    %5474 = vsyncpa [#allocation4], 1
    %5475 = vsyncpa [#allocation7], 1
    %5476 = vsyncpa [#allocation10], 1
    %5477 = vsyncpa [#allocation5], 1

</llo_original>
